<compile_context>
chip_gen: v7x
topology: tpu7x:2x2x1
jax: 0.10.0
libtpu: 0.0.40
codegen_flags: <defaults>
</compile_context>

<pallas_src>
import jax
import jax.numpy as jnp
from jax.experimental import pallas as pl
from jax.experimental.pallas import tpu as pltpu

HIDDEN = 512
LANE = 128
SUBLANE = 8
MAX_TILE_B = 512  # cap batch tile so streamed act/out tiles stay small in VMEM


def _round_up(v, m):
    return ((v + m - 1) // m) * m


def mlp_kernel(x_ref, w1_ref, b1_ref, w2_ref, b2_ref, w3_ref, b3_ref,
               wo_ref, bo_ref, o_ref):
    # bf16 operands into the MXU; f32 accumulation, bias-add and ReLU on the VPU.
    h = jnp.dot(x_ref[...], w1_ref[...], preferred_element_type=jnp.float32) + b1_ref[...]
    h = jnp.maximum(h, 0.0).astype(jnp.bfloat16)

    h = jnp.dot(h, w2_ref[...], preferred_element_type=jnp.float32) + b2_ref[...]
    h = jnp.maximum(h, 0.0).astype(jnp.bfloat16)

    h = jnp.dot(h, w3_ref[...], preferred_element_type=jnp.float32) + b3_ref[...]
    h = jnp.maximum(h, 0.0).astype(jnp.bfloat16)

    out = jnp.dot(h, wo_ref[...], preferred_element_type=jnp.float32) + bo_ref[...]
    o_ref[...] = out.astype(o_ref.dtype)


def init_params(key, dim_in, dim_out):
    """PyTorch-style params: weights (out_features, in_features), biases (out_features,)."""
    def linear(key, fan_in, fan_out):
        kw, kb = jax.random.split(key)
        bound = 1.0 / jnp.sqrt(fan_in)
        w = jax.random.uniform(kw, (fan_out, fan_in), jnp.float32, -bound, bound)
        b = jax.random.uniform(kb, (fan_out,), jnp.float32, -bound, bound)
        return w, b

    k1, k2, k3, k4 = jax.random.split(key, 4)
    w1, b1 = linear(k1, dim_in, HIDDEN)
    w2, b2 = linear(k2, HIDDEN, HIDDEN)
    w3, b3 = linear(k3, HIDDEN, HIDDEN)
    wo, bo = linear(k4, HIDDEN, dim_out)
    return {"w1": w1, "b1": b1, "w2": w2, "b2": b2,
            "w3": w3, "b3": b3, "wo": wo, "bo": bo}


def pack_params(params):
    """One-time conversion of PyTorch-style params to kernel layout.

    - transpose weights to (in, out) so the kernel does x @ W (no per-call .T)
    - cast weights to bf16 (MXU-native input)
    - zero-pad w1's input dim and the final layer's output dim to 128-lane
      multiples (lane-dense loads/stores; padding is mathematically inert)
    - keep biases in f32, shaped (1, out) for broadcast
    """
    dim_in = params["w1"].shape[1]
    dim_out = params["wo"].shape[0]
    in_pad = _round_up(dim_in, LANE)
    out_pad = _round_up(dim_out, LANE)

    def wt(w):  # (out, in) -> (in, out), bf16
        return jnp.asarray(w.T, dtype=jnp.bfloat16)

    w1 = jnp.zeros((in_pad, HIDDEN), jnp.bfloat16).at[:dim_in, :].set(wt(params["w1"]))
    wo = jnp.zeros((HIDDEN, out_pad), jnp.bfloat16).at[:, :dim_out].set(wt(params["wo"]))
    bo = jnp.zeros((1, out_pad), jnp.float32).at[:, :dim_out].set(params["bo"][None, :])

    return {
        "w1": w1, "b1": params["b1"][None, :].astype(jnp.float32),
        "w2": wt(params["w2"]), "b2": params["b2"][None, :].astype(jnp.float32),
        "w3": wt(params["w3"]), "b3": params["b3"][None, :].astype(jnp.float32),
        "wo": wo, "bo": bo,
        "dim_in": dim_in, "dim_out": dim_out,
    }


def _pick_tile_b(batch):
    """Sublane/MXU-aligned batch tile: big enough to amortize per-step overhead,
    small enough to keep streamed tiles cheap in VMEM."""
    return min(MAX_TILE_B, _round_up(max(batch, LANE), LANE))


def mlp_forward(x, packed):
    batch, dim_in = x.shape
    assert dim_in == packed["dim_in"]
    dim_out = packed["dim_out"]
    in_pad = packed["w1"].shape[0]
    out_pad = packed["wo"].shape[1]

    tile_b = _pick_tile_b(batch)
    pad_batch = _round_up(max(batch, tile_b), tile_b)

    # Pad batch (full M tile per step) and feature dim (lane-dense loads), cast bf16.
    x_p = x.astype(jnp.bfloat16)
    if pad_batch != batch or in_pad != dim_in:
        x_p = jnp.pad(x_p, ((0, pad_batch - batch), (0, in_pad - dim_in)))

    grid = (pad_batch // tile_b,)

    # Activation / output tiles stream over the batch grid (auto double-buffered).
    act_spec = pl.BlockSpec((tile_b, in_pad), lambda i: (i, 0))
    out_spec = pl.BlockSpec((tile_b, out_pad), lambda i: (i, 0))

    # Weight / bias blocks always map to block (0, 0): DMA'd once, VMEM-resident.
    def resident(arr):
        return pl.BlockSpec(arr.shape, lambda i: (0, 0))

    weight_keys = ("w1", "b1", "w2", "b2", "w3", "b3", "wo", "bo")
    in_specs = [act_spec] + [resident(packed[k]) for k in weight_keys]

    flops = 2 * pad_batch * (in_pad * HIDDEN + 2 * HIDDEN * HIDDEN + HIDDEN * out_pad)
    weight_bytes = sum(int(packed[k].size) * packed[k].dtype.itemsize for k in weight_keys)
    bytes_accessed = weight_bytes + int(x_p.size) * 2 + pad_batch * out_pad * 4

    out = pl.pallas_call(
        mlp_kernel,
        out_shape=jax.ShapeDtypeStruct((pad_batch, out_pad), jnp.float32),
        grid=grid,
        in_specs=in_specs,
        out_specs=out_spec,
        compiler_params=pltpu.CompilerParams(
            dimension_semantics=("parallel",),  # batch tiles across v7x's 2 TCs
        ),
        cost_estimate=pl.CostEstimate(
            flops=flops, transcendentals=0, bytes_accessed=bytes_accessed),
    )(x_p, *(packed[k] for k in weight_keys))

    return out[:batch, :dim_out]


def mlp_reference(x, params):
    h = jnp.maximum(x @ params["w1"].T + params["b1"], 0.0)
    h = jnp.maximum(h @ params["w2"].T + params["b2"], 0.0)
    h = jnp.maximum(h @ params["w3"].T + params["b3"], 0.0)
    return h @ params["wo"].T + params["bo"]


if __name__ == "__main__":
    batch, dim_in, dim_out = 8, 64, 16

    key = jax.random.PRNGKey(0)
    kx, kp = jax.random.split(key)
    x = jax.random.normal(kx, (batch, dim_in), jnp.float32)
    params = init_params(kp, dim_in, dim_out)

    packed = pack_params(params)  # one-time: transpose + bf16 cast + lane padding

    out = mlp_forward(x, packed)
    out = jax.block_until_ready(out)

    ref = mlp_reference(x, params)
    assert out.shape == (batch, dim_out)
    # bf16 weights/activations with f32 accumulation -> looser tolerance vs f32 reference.
    assert jnp.allclose(out, ref, atol=3e-2, rtol=3e-2), "mismatch vs JAX reference"

    print("KERNEL_OK")
</pallas_src>

<mosaic_0001>
module attributes {stable_mosaic.version = 11 : i64} {
  func.func @mlp_kernel(%arg0: i32, %arg1: memref<128x128xbf16, #tpu.memory_space<vmem>>, %arg2: memref<128x512xbf16, #tpu.memory_space<vmem>>, %arg3: memref<1x512xf32, #tpu.memory_space<vmem>>, %arg4: memref<512x512xbf16, #tpu.memory_space<vmem>>, %arg5: memref<1x512xf32, #tpu.memory_space<vmem>>, %arg6: memref<512x512xbf16, #tpu.memory_space<vmem>>, %arg7: memref<1x512xf32, #tpu.memory_space<vmem>>, %arg8: memref<512x128xbf16, #tpu.memory_space<vmem>>, %arg9: memref<1x128xf32, #tpu.memory_space<vmem>>, %arg10: memref<128x128xf32, #tpu.memory_space<vmem>>) attributes {dimension_semantics = [#tpu.dimension_semantics<parallel>], iteration_bounds = array<i64: 1>, scalar_prefetch = 0 : i64, scratch_operands = 0 : i64, tpu.core_type = #tpu.core_type<tc>, window_params = [{transform_indices = @transform_0, window_bounds = array<i64: 128, 128>}, {pipeline_mode = #tpu.pipeline_mode<synchronous>, transform_indices = @transform_1, window_bounds = array<i64: 128, 512>}, {pipeline_mode = #tpu.pipeline_mode<synchronous>, transform_indices = @transform_2, window_bounds = array<i64: 1, 512>}, {pipeline_mode = #tpu.pipeline_mode<synchronous>, transform_indices = @transform_3, window_bounds = array<i64: 512, 512>}, {pipeline_mode = #tpu.pipeline_mode<synchronous>, transform_indices = @transform_4, window_bounds = array<i64: 1, 512>}, {pipeline_mode = #tpu.pipeline_mode<synchronous>, transform_indices = @transform_5, window_bounds = array<i64: 512, 512>}, {pipeline_mode = #tpu.pipeline_mode<synchronous>, transform_indices = @transform_6, window_bounds = array<i64: 1, 512>}, {pipeline_mode = #tpu.pipeline_mode<synchronous>, transform_indices = @transform_7, window_bounds = array<i64: 512, 128>}, {pipeline_mode = #tpu.pipeline_mode<synchronous>, transform_indices = @transform_8, window_bounds = array<i64: 1, 128>}, {transform_indices = @transform_9, window_bounds = array<i64: 128, 128>}]} {
    %c0 = arith.constant 0 : index
    %c0_0 = arith.constant 0 : index
    %0 = vector.load %arg1[%c0, %c0_0] : memref<128x128xbf16, #tpu.memory_space<vmem>>, vector<128x128xbf16>
    %c0_1 = arith.constant 0 : index
    %c0_2 = arith.constant 0 : index
    %1 = vector.load %arg2[%c0_1, %c0_2] : memref<128x512xbf16, #tpu.memory_space<vmem>>, vector<128x512xbf16>
    %cst = arith.constant dense<0.000000e+00> : vector<128x512xf32>
    %2 = tpu.matmul %0, %1, %cst {dimension_numbers = #tpu.dot_dimension_numbers<[1], [0], [0], [1], [0, 0, 1, 1], [], []>} : vector<128x128xbf16>, vector<128x512xbf16>, vector<128x512xf32> -> vector<128x512xf32>
    %c0_3 = arith.constant 0 : index
    %c0_4 = arith.constant 0 : index
    %3 = vector.load %arg3[%c0_3, %c0_4] : memref<1x512xf32, #tpu.memory_space<vmem>>, vector<1x512xf32>
    %4 = vector.broadcast %3 : vector<1x512xf32> to vector<128x512xf32>
    %5 = arith.addf %2, %4 : vector<128x512xf32>
    %cst_5 = arith.constant 0.000000e+00 : f32
    %6 = vector.broadcast %cst_5 : f32 to vector<128x512xf32>
    %7 = arith.maximumf %5, %6 : vector<128x512xf32>
    %8 = arith.truncf %7 : vector<128x512xf32> to vector<128x512xbf16>
    %c0_6 = arith.constant 0 : index
    %c0_7 = arith.constant 0 : index
    %9 = vector.load %arg4[%c0_6, %c0_7] : memref<512x512xbf16, #tpu.memory_space<vmem>>, vector<512x512xbf16>
    %cst_8 = arith.constant dense<0.000000e+00> : vector<128x512xf32>
    %10 = tpu.matmul %8, %9, %cst_8 {dimension_numbers = #tpu.dot_dimension_numbers<[1], [0], [0], [1], [0, 0, 1, 1], [], []>} : vector<128x512xbf16>, vector<512x512xbf16>, vector<128x512xf32> -> vector<128x512xf32>
    %c0_9 = arith.constant 0 : index
    %c0_10 = arith.constant 0 : index
    %11 = vector.load %arg5[%c0_9, %c0_10] : memref<1x512xf32, #tpu.memory_space<vmem>>, vector<1x512xf32>
    %12 = vector.broadcast %11 : vector<1x512xf32> to vector<128x512xf32>
    %13 = arith.addf %10, %12 : vector<128x512xf32>
    %cst_11 = arith.constant 0.000000e+00 : f32
    %14 = vector.broadcast %cst_11 : f32 to vector<128x512xf32>
    %15 = arith.maximumf %13, %14 : vector<128x512xf32>
    %16 = arith.truncf %15 : vector<128x512xf32> to vector<128x512xbf16>
    %c0_12 = arith.constant 0 : index
    %c0_13 = arith.constant 0 : index
    %17 = vector.load %arg6[%c0_12, %c0_13] : memref<512x512xbf16, #tpu.memory_space<vmem>>, vector<512x512xbf16>
    %cst_14 = arith.constant dense<0.000000e+00> : vector<128x512xf32>
    %18 = tpu.matmul %16, %17, %cst_14 {dimension_numbers = #tpu.dot_dimension_numbers<[1], [0], [0], [1], [0, 0, 1, 1], [], []>} : vector<128x512xbf16>, vector<512x512xbf16>, vector<128x512xf32> -> vector<128x512xf32>
    %c0_15 = arith.constant 0 : index
    %c0_16 = arith.constant 0 : index
    %19 = vector.load %arg7[%c0_15, %c0_16] : memref<1x512xf32, #tpu.memory_space<vmem>>, vector<1x512xf32>
    %20 = vector.broadcast %19 : vector<1x512xf32> to vector<128x512xf32>
    %21 = arith.addf %18, %20 : vector<128x512xf32>
    %cst_17 = arith.constant 0.000000e+00 : f32
    %22 = vector.broadcast %cst_17 : f32 to vector<128x512xf32>
    %23 = arith.maximumf %21, %22 : vector<128x512xf32>
    %24 = arith.truncf %23 : vector<128x512xf32> to vector<128x512xbf16>
    %c0_18 = arith.constant 0 : index
    %c0_19 = arith.constant 0 : index
    %25 = vector.load %arg8[%c0_18, %c0_19] : memref<512x128xbf16, #tpu.memory_space<vmem>>, vector<512x128xbf16>
    %cst_20 = arith.constant dense<0.000000e+00> : vector<128x128xf32>
    %26 = tpu.matmul %24, %25, %cst_20 {dimension_numbers = #tpu.dot_dimension_numbers<[1], [0], [0], [1], [0, 0, 1, 1], [], []>} : vector<128x512xbf16>, vector<512x128xbf16>, vector<128x128xf32> -> vector<128x128xf32>
    %c0_21 = arith.constant 0 : index
    %c0_22 = arith.constant 0 : index
    %27 = vector.load %arg9[%c0_21, %c0_22] : memref<1x128xf32, #tpu.memory_space<vmem>>, vector<1x128xf32>
    %28 = vector.broadcast %27 : vector<1x128xf32> to vector<128x128xf32>
    %29 = arith.addf %26, %28 : vector<128x128xf32>
    %c0_23 = arith.constant 0 : index
    %c0_24 = arith.constant 0 : index
    %30 = vector.load %arg10[%c0_23, %c0_24] : memref<128x128xf32, #tpu.memory_space<vmem>>, vector<128x128xf32>
    tpu.vector_store %arg10[%c0_23, %c0_24], %29 {strides = array<i32>} : memref<128x128xf32, #tpu.memory_space<vmem>>, vector<128x128xf32>,
    return
  }
  func.func @transform_0(%arg0: i32) -> (i32, i32) {
    %c0_i32 = arith.constant 0 : i32
    %c0_i32_0 = arith.constant 0 : i32
    return %arg0, %c0_i32 : i32, i32
  }
  func.func @transform_1(%arg0: i32) -> (i32, i32) {
    %c0_i32 = arith.constant 0 : i32
    %c0_i32_0 = arith.constant 0 : i32
    %c0_i32_1 = arith.constant 0 : i32
    return %c0_i32, %c0_i32_0 : i32, i32
  }
  func.func @transform_2(%arg0: i32) -> (i32, i32) {
    %c0_i32 = arith.constant 0 : i32
    %c0_i32_0 = arith.constant 0 : i32
    %c0_i32_1 = arith.constant 0 : i32
    return %c0_i32, %c0_i32_0 : i32, i32
  }
  func.func @transform_3(%arg0: i32) -> (i32, i32) {
    %c0_i32 = arith.constant 0 : i32
    %c0_i32_0 = arith.constant 0 : i32
    %c0_i32_1 = arith.constant 0 : i32
    return %c0_i32, %c0_i32_0 : i32, i32
  }
  func.func @transform_4(%arg0: i32) -> (i32, i32) {
    %c0_i32 = arith.constant 0 : i32
    %c0_i32_0 = arith.constant 0 : i32
    %c0_i32_1 = arith.constant 0 : i32
    return %c0_i32, %c0_i32_0 : i32, i32
  }
  func.func @transform_5(%arg0: i32) -> (i32, i32) {
    %c0_i32 = arith.constant 0 : i32
    %c0_i32_0 = arith.constant 0 : i32
    %c0_i32_1 = arith.constant 0 : i32
    return %c0_i32, %c0_i32_0 : i32, i32
  }
  func.func @transform_6(%arg0: i32) -> (i32, i32) {
    %c0_i32 = arith.constant 0 : i32
    %c0_i32_0 = arith.constant 0 : i32
    %c0_i32_1 = arith.constant 0 : i32
    return %c0_i32, %c0_i32_0 : i32, i32
  }
  func.func @transform_7(%arg0: i32) -> (i32, i32) {
    %c0_i32 = arith.constant 0 : i32
    %c0_i32_0 = arith.constant 0 : i32
    %c0_i32_1 = arith.constant 0 : i32
    return %c0_i32, %c0_i32_0 : i32, i32
  }
  func.func @transform_8(%arg0: i32) -> (i32, i32) {
    %c0_i32 = arith.constant 0 : i32
    %c0_i32_0 = arith.constant 0 : i32
    %c0_i32_1 = arith.constant 0 : i32
    return %c0_i32, %c0_i32_0 : i32, i32
  }
  func.func @transform_9(%arg0: i32) -> (i32, i32) {
    %c0_i32 = arith.constant 0 : i32
    %c0_i32_0 = arith.constant 0 : i32
    return %arg0, %c0_i32 : i32, i32
  }
}

</mosaic_0001>

<llo_original>
// kernel: tpu_custom_call.1
$region0: #{tpu_custom_call.1}
  #allocation0 [shape = 'u32[]', space=smem, size = 0x4, offset = 0x4, fixed_abs, tag = 'smem constant byte address 0x4 - core index']
  #allocation1 [shape = 'u32[144,128]{1,0:T(1,128)}', space=vmem, size = 0x12000, scoped, tag = 'internal scratch']
  %s0 = inlined_call_operand.hbm [shape: bf16[128,128], index: 0, kind: input, shape index: {}]
  %s1 = inlined_call_operand.hbm [shape: bf16[128,512], index: 1, kind: input, shape index: {}]
  %s2 = inlined_call_operand.vmem [shape: f32[1,512], index: 2, kind: input, shape index: {}]
  %s3 = inlined_call_operand.hbm [shape: bf16[512,512], index: 3, kind: input, shape index: {}]
  %s4 = inlined_call_operand.vmem [shape: f32[1,512], index: 4, kind: input, shape index: {}]
  %s5 = inlined_call_operand.hbm [shape: bf16[512,512], index: 5, kind: input, shape index: {}]
  %s6 = inlined_call_operand.vmem [shape: f32[1,512], index: 6, kind: input, shape index: {}]
  %s7 = inlined_call_operand.hbm [shape: bf16[512,128], index: 7, kind: input, shape index: {}]
  %s8 = inlined_call_operand.vmem [shape: f32[1,128], index: 8, kind: input, shape index: {}]
  %s9 = inlined_call_operand.hbm [shape: f32[128,128], index: 9, kind: output, shape index: {}]
  %s10 = sld [smem:[#allocation0]]
  $region66: #{tpu_custom_call.1} parent=0
    _
  %s12 = ssub.s32 1, %s10
  %s13 = scalar_select 0, %s12, %s10
  $region1: #{tpu_custom_call.1} parent=0
    #allocation2 [shape = 'u8[32768]{0}', space=vmem, size = 0x8000, scoped, tag = 'input window, operand 0, single buffered']
    #allocation3 [shape = 's32[1]{0}', space=sflag, size = 0x4, scoped, tag = 'scoped memory for tpu_custom_call.1']
    #allocation4 [shape = 's32[1]{0}', space=sflag, size = 0x4, scoped, tag = 'scoped memory for tpu_custom_call.1']
    #allocation5 [shape = 'u8[131072]{0}', space=vmem, size = 0x20000, scoped, tag = 'input window, operand 1, single buffered']
    #allocation6 [shape = 's32[1]{0}', space=sflag, size = 0x4, scoped, tag = 'scoped memory for tpu_custom_call.1']
    #allocation7 [shape = 'u8[524288]{0}', space=vmem, size = 0x80000, scoped, tag = 'input window, operand 3, single buffered']
    #allocation8 [shape = 'u8[524288]{0}', space=vmem, size = 0x80000, scoped, tag = 'input window, operand 5, single buffered']
    #allocation9 [shape = 's32[1]{0}', space=sflag, size = 0x4, scoped, tag = 'scoped memory for tpu_custom_call.1']
    #allocation10 [shape = 'u8[131072]{0}', space=vmem, size = 0x20000, scoped, tag = 'input window, operand 7, single buffered']
    #allocation11 [shape = 'u8[65536]{0}', space=vmem, size = 0x10000, scoped, tag = 'output window, operand 0, single buffered']
    %14 = vsyncpa [#allocation3], 0
    %15 = vsyncpa [#allocation6], 0
    %16 = vsyncpa [#allocation9], 0
    %17 = vsyncpa [#allocation4], 0
    // Predicated region
    $region2: #{tpu_custom_call.1} parent=1 // pred_check
      _
    $region3: #{tpu_custom_call.1} parent=1 // pred_check_branch
      %19 = sbr.rel (0) target = $region5
    $region4: #{tpu_custom_call.1} parent=1 // pred_region
      %s21 = ssub.s32 1024, 1024
      %22 = vsyncadd [#allocation3], %s21
      %s23 = sshll.u32 [#allocation2], 4
      %s24 = int_to_ptr.vmem [resolvable:$true] %s23
      %29 = dma.hbm_to_vmem [thread:$0]  %s0, 1024, %s24, [#allocation3], 64, 64, 4
    $region5: #{tpu_custom_call.1} parent=1 // pred_fallthru
      _
    // Predicated region
    $region6: #{tpu_custom_call.1} parent=1 // pred_check
      _
    $region7: #{tpu_custom_call.1} parent=1 // pred_check_branch
      %31 = sbr.rel (0) target = $region9
    $region8: #{tpu_custom_call.1} parent=1 // pred_region
      %s33 = ssub.s32 4096, 4096
      %34 = vsyncadd [#allocation6], %s33
      %s35 = sshll.u32 [#allocation5], 4
      %s36 = int_to_ptr.vmem [resolvable:$true] %s35
      %41 = dma.hbm_to_vmem [thread:$0]  %s1, 4096, %s36, [#allocation6], 256, 256, 16
    $region9: #{tpu_custom_call.1} parent=1 // pred_fallthru
      _
    // Predicated region
    $region10: #{tpu_custom_call.1} parent=1 // pred_check
      _
    $region11: #{tpu_custom_call.1} parent=1 // pred_check_branch
      %43 = sbr.rel (0) target = $region13
    $region12: #{tpu_custom_call.1} parent=1 // pred_region
      _
    $region13: #{tpu_custom_call.1} parent=1 // pred_fallthru
      _
    // Predicated region
    $region14: #{tpu_custom_call.1} parent=1 // pred_check
      _
    $region15: #{tpu_custom_call.1} parent=1 // pred_check_branch
      %45 = sbr.rel (0) target = $region17
    $region16: #{tpu_custom_call.1} parent=1 // pred_region
      %s47 = ssub.s32 16384, 16384
      %48 = vsyncadd [#allocation6], %s47
      %s49 = sshll.u32 [#allocation7], 4
      %s50 = int_to_ptr.vmem [resolvable:$true] %s49
      %55 = dma.hbm_to_vmem [thread:$0]  %s3, 16384, %s50, [#allocation6], 256, 256, 16
    $region17: #{tpu_custom_call.1} parent=1 // pred_fallthru
      _
    // Predicated region
    $region18: #{tpu_custom_call.1} parent=1 // pred_check
      _
    $region19: #{tpu_custom_call.1} parent=1 // pred_check_branch
      %57 = sbr.rel (0) target = $region21
    $region20: #{tpu_custom_call.1} parent=1 // pred_region
      _
    $region21: #{tpu_custom_call.1} parent=1 // pred_fallthru
      _
    // Predicated region
    $region22: #{tpu_custom_call.1} parent=1 // pred_check
      _
    $region23: #{tpu_custom_call.1} parent=1 // pred_check_branch
      %59 = sbr.rel (0) target = $region25
    $region24: #{tpu_custom_call.1} parent=1 // pred_region
      %s61 = ssub.s32 16384, 16384
      %62 = vsyncadd [#allocation9], %s61
      %s63 = sshll.u32 [#allocation8], 4
      %s64 = int_to_ptr.vmem [resolvable:$true] %s63
      %69 = dma.hbm_to_vmem [thread:$0]  %s5, 16384, %s64, [#allocation9], 256, 256, 16
    $region25: #{tpu_custom_call.1} parent=1 // pred_fallthru
      _
    // Predicated region
    $region26: #{tpu_custom_call.1} parent=1 // pred_check
      _
    $region27: #{tpu_custom_call.1} parent=1 // pred_check_branch
      %71 = sbr.rel (0) target = $region29
    $region28: #{tpu_custom_call.1} parent=1 // pred_region
      _
    $region29: #{tpu_custom_call.1} parent=1 // pred_fallthru
      _
    // Predicated region
    $region30: #{tpu_custom_call.1} parent=1 // pred_check
      _
    $region31: #{tpu_custom_call.1} parent=1 // pred_check_branch
      %73 = sbr.rel (0) target = $region33
    $region32: #{tpu_custom_call.1} parent=1 // pred_region
      %s75 = ssub.s32 4096, 4096
      %76 = vsyncadd [#allocation9], %s75
      %s77 = sshll.u32 [#allocation10], 4
      %s78 = int_to_ptr.vmem [resolvable:$true] %s77
      %83 = dma.hbm_to_vmem [thread:$0]  %s7, 4096, %s78, [#allocation9], 64, 64, 4
    $region33: #{tpu_custom_call.1} parent=1 // pred_fallthru
      _
    // Predicated region
    $region34: #{tpu_custom_call.1} parent=1 // pred_check
      _
    $region35: #{tpu_custom_call.1} parent=1 // pred_check_branch
      %85 = sbr.rel (0) target = $region37
    $region36: #{tpu_custom_call.1} parent=1 // pred_region
      _
    $region37: #{tpu_custom_call.1} parent=1 // pred_fallthru
      _
    // Predicated region
    $region38: #{tpu_custom_call.1} parent=1 // pred_check
      _
    $region39: #{tpu_custom_call.1} parent=1 // pred_check_branch
      %87 = sbr.rel (0) target = $region41
    $region40: #{tpu_custom_call.1} parent=1 // pred_region
      %88 = dma.done [#allocation3], 1024
    $region41: #{tpu_custom_call.1} parent=1 // pred_fallthru
      _
    // Predicated region
    $region42: #{tpu_custom_call.1} parent=1 // pred_check
      _
    $region43: #{tpu_custom_call.1} parent=1 // pred_check_branch
      %90 = sbr.rel (0) target = $region45
    $region44: #{tpu_custom_call.1} parent=1 // pred_region
      %91 = dma.done [#allocation6], 4096
    $region45: #{tpu_custom_call.1} parent=1 // pred_fallthru
      _
    // Predicated region
    $region46: #{tpu_custom_call.1} parent=1 // pred_check
      _
    $region47: #{tpu_custom_call.1} parent=1 // pred_check_branch
      %93 = sbr.rel (0) target = $region49
    $region48: #{tpu_custom_call.1} parent=1 // pred_region
      %94 = dma.done [#allocation6], 16384
    $region49: #{tpu_custom_call.1} parent=1 // pred_fallthru
      _
    // Predicated region
    $region50: #{tpu_custom_call.1} parent=1 // pred_check
      _
    $region51: #{tpu_custom_call.1} parent=1 // pred_check_branch
      %96 = sbr.rel (0) target = $region53
    $region52: #{tpu_custom_call.1} parent=1 // pred_region
      %97 = dma.done [#allocation9], 16384
    $region53: #{tpu_custom_call.1} parent=1 // pred_fallthru
      _
    // Predicated region
    $region54: #{tpu_custom_call.1} parent=1 // pred_check
      _
    $region55: #{tpu_custom_call.1} parent=1 // pred_check_branch
      %99 = sbr.rel (0) target = $region57
    $region56: #{tpu_custom_call.1} parent=1 // pred_region
      %100 = dma.done [#allocation9], 4096
    $region57: #{tpu_custom_call.1} parent=1 // pred_fallthru
      _
    %v102 = vld [vmem:[#allocation2] sm:$0xf]
    %v103 = vld [vmem:[#allocation2 + $0x4] sm:$0xf]
    %v104 = vld [vmem:[#allocation2 + $0x8] sm:$0xf]
    %v105 = vld [vmem:[#allocation2 + $0xc] sm:$0xf]
    %v106 = vld [vmem:[#allocation2 + $0x10] sm:$0xf]
    %v107 = vld [vmem:[#allocation2 + $0x14] sm:$0xf]
    %v108 = vld [vmem:[#allocation2 + $0x18] sm:$0xf]
    %v109 = vld [vmem:[#allocation2 + $0x1c] sm:$0xf]
    %v110 = vld [vmem:[#allocation2 + $0x20] sm:$0xf]
    %v111 = vld [vmem:[#allocation2 + $0x24] sm:$0xf]
    %v112 = vld [vmem:[#allocation2 + $0x28] sm:$0xf]
    %v113 = vld [vmem:[#allocation2 + $0x2c] sm:$0xf]
    %v114 = vld [vmem:[#allocation2 + $0x30] sm:$0xf]
    %v115 = vld [vmem:[#allocation2 + $0x34] sm:$0xf]
    %v116 = vld [vmem:[#allocation2 + $0x38] sm:$0xf]
    %v117 = vld [vmem:[#allocation2 + $0x3c] sm:$0xf]
    %v118 = vld [vmem:[#allocation5] sm:$0xff]
    %v119 = vld [vmem:[#allocation5 + $0x8] sm:$0xff]
    %v120 = vld [vmem:[#allocation5 + $0x10] sm:$0xff]
    %v121 = vld [vmem:[#allocation5 + $0x18] sm:$0xff]
    %v122 = vld [vmem:[#allocation5 + $0x20] sm:$0xff]
    %v123 = vld [vmem:[#allocation5 + $0x28] sm:$0xff]
    %v124 = vld [vmem:[#allocation5 + $0x30] sm:$0xff]
    %v125 = vld [vmem:[#allocation5 + $0x38] sm:$0xff]
    %v126 = vld [vmem:[#allocation5 + $0x40] sm:$0xff]
    %v127 = vld [vmem:[#allocation5 + $0x48] sm:$0xff]
    %v128 = vld [vmem:[#allocation5 + $0x50] sm:$0xff]
    %v129 = vld [vmem:[#allocation5 + $0x58] sm:$0xff]
    %v130 = vld [vmem:[#allocation5 + $0x60] sm:$0xff]
    %v131 = vld [vmem:[#allocation5 + $0x68] sm:$0xff]
    %v132 = vld [vmem:[#allocation5 + $0x70] sm:$0xff]
    %v133 = vld [vmem:[#allocation5 + $0x78] sm:$0xff]
    %v134 = vld [vmem:[#allocation5 + $0x80] sm:$0xff]
    %v135 = vld [vmem:[#allocation5 + $0x88] sm:$0xff]
    %v136 = vld [vmem:[#allocation5 + $0x90] sm:$0xff]
    %v137 = vld [vmem:[#allocation5 + $0x98] sm:$0xff]
    %v138 = vld [vmem:[#allocation5 + $0xa0] sm:$0xff]
    %v139 = vld [vmem:[#allocation5 + $0xa8] sm:$0xff]
    %v140 = vld [vmem:[#allocation5 + $0xb0] sm:$0xff]
    %v141 = vld [vmem:[#allocation5 + $0xb8] sm:$0xff]
    %v142 = vld [vmem:[#allocation5 + $0xc0] sm:$0xff]
    %v143 = vld [vmem:[#allocation5 + $0xc8] sm:$0xff]
    %v144 = vld [vmem:[#allocation5 + $0xd0] sm:$0xff]
    %v145 = vld [vmem:[#allocation5 + $0xd8] sm:$0xff]
    %v146 = vld [vmem:[#allocation5 + $0xe0] sm:$0xff]
    %v147 = vld [vmem:[#allocation5 + $0xe8] sm:$0xff]
    %v148 = vld [vmem:[#allocation5 + $0xf0] sm:$0xff]
    %v149 = vld [vmem:[#allocation5 + $0xf8] sm:$0xff]
    %v150 = vld [vmem:[%s2] sm:$0xf]
    %v152 = vlaneseq
    %v153 = vshrl.u32 %v152, 7
    %v154 = vsub.s32 0, %v153
    %v155 = vrot.slane %v150, %v154
    %v156 = vlaneseq
    %v157 = vshrl.u32 %v156, 7
    %v158 = vsub.s32 1, %v157
    %v159 = vrot.slane %v150, %v158
    %v160 = vlaneseq
    %v161 = vshrl.u32 %v160, 7
    %v162 = vsub.s32 2, %v161
    %v163 = vrot.slane %v150, %v162
    %v164 = vlaneseq
    %v165 = vshrl.u32 %v164, 7
    %v166 = vsub.s32 3, %v165
    %v167 = vrot.slane %v150, %v166
    %v188 = vunpack.c.l.b16 %v102
    %v189 = vunpack.c.l.b16 %v103
    %v190 = vunpack.c.l.b16 %v104
    %v191 = vunpack.c.l.b16 %v105
    %v192 = vunpack.c.l.b16 %v106
    %v193 = vunpack.c.l.b16 %v107
    %v194 = vunpack.c.l.b16 %v108
    %v195 = vunpack.c.l.b16 %v109
    %v196 = vunpack.c.l.b16 %v110
    %v197 = vunpack.c.l.b16 %v111
    %v198 = vunpack.c.l.b16 %v112
    %v199 = vunpack.c.l.b16 %v113
    %v200 = vunpack.c.l.b16 %v114
    %v201 = vunpack.c.l.b16 %v115
    %v202 = vunpack.c.l.b16 %v116
    %v203 = vunpack.c.l.b16 %v117
    %v204 = vpack.c.b16 %v189, %v188
    %v205 = vpack.c.b16 %v191, %v190
    %v206 = vpack.c.b16 %v193, %v192
    %v207 = vpack.c.b16 %v195, %v194
    %v208 = vpack.c.b16 %v197, %v196
    %v209 = vpack.c.b16 %v199, %v198
    %v210 = vpack.c.b16 %v201, %v200
    %v211 = vpack.c.b16 %v203, %v202
    %v252 = vunpack.c.l.b16 %v118
    %v253 = vunpack.c.h.b16 %v118
    %v254 = vunpack.c.l.b16 %v119
    %v255 = vunpack.c.h.b16 %v119
    %v256 = vunpack.c.l.b16 %v120
    %v257 = vunpack.c.h.b16 %v120
    %v258 = vunpack.c.l.b16 %v121
    %v259 = vunpack.c.h.b16 %v121
    %v260 = vunpack.c.l.b16 %v122
    %v261 = vunpack.c.h.b16 %v122
    %v262 = vunpack.c.l.b16 %v123
    %v263 = vunpack.c.h.b16 %v123
    %v264 = vunpack.c.l.b16 %v124
    %v265 = vunpack.c.h.b16 %v124
    %v266 = vunpack.c.l.b16 %v125
    %v267 = vunpack.c.h.b16 %v125
    %v268 = vunpack.c.l.b16 %v126
    %v269 = vunpack.c.h.b16 %v126
    %v270 = vunpack.c.l.b16 %v127
    %v271 = vunpack.c.h.b16 %v127
    %v272 = vunpack.c.l.b16 %v128
    %v273 = vunpack.c.h.b16 %v128
    %v274 = vunpack.c.l.b16 %v129
    %v275 = vunpack.c.h.b16 %v129
    %v276 = vunpack.c.l.b16 %v130
    %v277 = vunpack.c.h.b16 %v130
    %v278 = vunpack.c.l.b16 %v131
    %v279 = vunpack.c.h.b16 %v131
    %v280 = vunpack.c.l.b16 %v132
    %v281 = vunpack.c.h.b16 %v132
    %v282 = vunpack.c.l.b16 %v133
    %v283 = vunpack.c.h.b16 %v133
    %v284 = vunpack.c.l.b16 %v134
    %v285 = vunpack.c.h.b16 %v134
    %v286 = vunpack.c.l.b16 %v135
    %v287 = vunpack.c.h.b16 %v135
    %v288 = vunpack.c.l.b16 %v136
    %v289 = vunpack.c.h.b16 %v136
    %v290 = vunpack.c.l.b16 %v137
    %v291 = vunpack.c.h.b16 %v137
    %v292 = vunpack.c.l.b16 %v138
    %v293 = vunpack.c.h.b16 %v138
    %v294 = vunpack.c.l.b16 %v139
    %v295 = vunpack.c.h.b16 %v139
    %v296 = vunpack.c.l.b16 %v140
    %v297 = vunpack.c.h.b16 %v140
    %v298 = vunpack.c.l.b16 %v141
    %v299 = vunpack.c.h.b16 %v141
    %v300 = vunpack.c.l.b16 %v142
    %v301 = vunpack.c.h.b16 %v142
    %v302 = vunpack.c.l.b16 %v143
    %v303 = vunpack.c.h.b16 %v143
    %v304 = vunpack.c.l.b16 %v144
    %v305 = vunpack.c.h.b16 %v144
    %v306 = vunpack.c.l.b16 %v145
    %v307 = vunpack.c.h.b16 %v145
    %v308 = vunpack.c.l.b16 %v146
    %v309 = vunpack.c.h.b16 %v146
    %v310 = vunpack.c.l.b16 %v147
    %v311 = vunpack.c.h.b16 %v147
    %v312 = vunpack.c.l.b16 %v148
    %v313 = vunpack.c.h.b16 %v148
    %v314 = vunpack.c.l.b16 %v149
    %v315 = vunpack.c.h.b16 %v149
    %v316 = vpack.c.b16 %v256, %v252
    %v317 = vpack.c.b16 %v257, %v253
    %v318 = vpack.c.b16 %v258, %v254
    %v319 = vpack.c.b16 %v259, %v255
    %v320 = vpack.c.b16 %v264, %v260
    %v321 = vpack.c.b16 %v265, %v261
    %v322 = vpack.c.b16 %v266, %v262
    %v323 = vpack.c.b16 %v267, %v263
    %v324 = vpack.c.b16 %v272, %v268
    %v325 = vpack.c.b16 %v273, %v269
    %v326 = vpack.c.b16 %v274, %v270
    %v327 = vpack.c.b16 %v275, %v271
    %v328 = vpack.c.b16 %v280, %v276
    %v329 = vpack.c.b16 %v281, %v277
    %v330 = vpack.c.b16 %v282, %v278
    %v331 = vpack.c.b16 %v283, %v279
    %v332 = vpack.c.b16 %v288, %v284
    %v333 = vpack.c.b16 %v289, %v285
    %v334 = vpack.c.b16 %v290, %v286
    %v335 = vpack.c.b16 %v291, %v287
    %v336 = vpack.c.b16 %v296, %v292
    %v337 = vpack.c.b16 %v297, %v293
    %v338 = vpack.c.b16 %v298, %v294
    %v339 = vpack.c.b16 %v299, %v295
    %v340 = vpack.c.b16 %v304, %v300
    %v341 = vpack.c.b16 %v305, %v301
    %v342 = vpack.c.b16 %v306, %v302
    %v343 = vpack.c.b16 %v307, %v303
    %v344 = vpack.c.b16 %v312, %v308
    %v345 = vpack.c.b16 %v313, %v309
    %v346 = vpack.c.b16 %v314, %v310
    %v347 = vpack.c.b16 %v315, %v311
    %380 = vmatprep.subr.bf16.mxu0 %v317
    %381 = vmatpush1.bf16.msra.mxu0 %v316
    %382 = vmatprep.subr.bf16.mxu0 %v321
    %383 = vmatpush1.bf16.msra.mxu0 %v320
    %384 = vmatprep.subr.bf16.mxu0 %v325
    %385 = vmatpush1.bf16.msra.mxu0 %v324
    %386 = vmatprep.subr.bf16.mxu0 %v329
    %387 = vmatpush1.bf16.msra.mxu0 %v328
    %388 = vmatprep.subr.bf16.mxu0 %v333
    %389 = vmatpush1.bf16.msra.mxu0 %v332
    %390 = vmatprep.subr.bf16.mxu0 %v337
    %391 = vmatpush1.bf16.msra.mxu0 %v336
    %392 = vmatprep.subr.bf16.mxu0 %v341
    %393 = vmatpush1.bf16.msra.mxu0 %v340
    %394 = vmatprep.subr.bf16.mxu0 %v345
    %395 = vmatpush1.bf16.msra.mxu0 %v344
    %396 = vmatprep.subr.bf16.mxu0 0
    %397 = vmatpush1.bf16.msra.mxu0 0
    %398 = vmatprep.subr.bf16.mxu0 0
    %399 = vmatpush1.bf16.msra.mxu0 0
    %400 = vmatprep.subr.bf16.mxu0 0
    %401 = vmatpush1.bf16.msra.mxu0 0
    %402 = vmatprep.subr.bf16.mxu0 0
    %403 = vmatpush1.bf16.msra.mxu0 0
    %404 = vmatprep.subr.bf16.mxu0 0
    %405 = vmatpush1.bf16.msra.mxu0 0
    %406 = vmatprep.subr.bf16.mxu0 0
    %407 = vmatpush1.bf16.msra.mxu0 0
    %408 = vmatprep.subr.bf16.mxu0 0
    %409 = vmatpush1.bf16.msra.mxu0 0
    %410 = vmatprep.subr.bf16.mxu0 0
    %411 = vmatpush1.bf16.msra.mxu0 0
    %412 = vmatprep.mubr.bf16.mxu0 0
    %413 = vmatmul.mubr.bf16.gmra.mrb[0].mxu0 %v204
    %v414 = vpop.f32.mrb[0].mxu0
    %v415 = vadd.f32 %v155, %v414
    %v416 = vpop.f32.mrb[0].mxu0
    %v417 = vadd.f32 %v159, %v416
    %v418 = vpop.f32.mrb[0].mxu0
    %v419 = vadd.f32 %v155, %v418
    %v420 = vpop.f32.mrb[0].mxu0
    %v421 = vadd.f32 %v159, %v420
    %422 = vmatprep.mubr.bf16.mxu0 0
    %423 = vmatmul.mubr.bf16.gmra.mrb[0].mxu0 %v205
    %v424 = vpop.f32.mrb[0].mxu0
    %v425 = vadd.f32 %v155, %v424
    %v426 = vpop.f32.mrb[0].mxu0
    %v427 = vadd.f32 %v159, %v426
    %v428 = vpop.f32.mrb[0].mxu0
    %v429 = vadd.f32 %v155, %v428
    %v430 = vpop.f32.mrb[0].mxu0
    %v431 = vadd.f32 %v159, %v430
    %432 = vmatprep.mubr.bf16.mxu0 0
    %433 = vmatmul.mubr.bf16.gmra.mrb[0].mxu0 %v206
    %v434 = vpop.f32.mrb[0].mxu0
    %v435 = vadd.f32 %v155, %v434
    %v436 = vpop.f32.mrb[0].mxu0
    %v437 = vadd.f32 %v159, %v436
    %v438 = vpop.f32.mrb[0].mxu0
    %v439 = vadd.f32 %v155, %v438
    %v440 = vpop.f32.mrb[0].mxu0
    %v441 = vadd.f32 %v159, %v440
    %442 = vmatprep.mubr.bf16.mxu0 0
    %443 = vmatmul.mubr.bf16.gmra.mrb[0].mxu0 %v207
    %v444 = vpop.f32.mrb[0].mxu0
    %v445 = vadd.f32 %v155, %v444
    %v446 = vpop.f32.mrb[0].mxu0
    %v447 = vadd.f32 %v159, %v446
    %v448 = vpop.f32.mrb[0].mxu0
    %v449 = vadd.f32 %v155, %v448
    %v450 = vpop.f32.mrb[0].mxu0
    %v451 = vadd.f32 %v159, %v450
    %452 = vmatprep.mubr.bf16.mxu0 0
    %453 = vmatmul.mubr.bf16.gmra.mrb[0].mxu0 %v208
    %v454 = vpop.f32.mrb[0].mxu0
    %v455 = vadd.f32 %v155, %v454
    %v456 = vpop.f32.mrb[0].mxu0
    %v457 = vadd.f32 %v159, %v456
    %v458 = vpop.f32.mrb[0].mxu0
    %v459 = vadd.f32 %v155, %v458
    %v460 = vpop.f32.mrb[0].mxu0
    %v461 = vadd.f32 %v159, %v460
    %462 = vmatprep.mubr.bf16.mxu0 0
    %463 = vmatmul.mubr.bf16.gmra.mrb[0].mxu0 %v209
    %v464 = vpop.f32.mrb[0].mxu0
    %v465 = vadd.f32 %v155, %v464
    %v466 = vpop.f32.mrb[0].mxu0
    %v467 = vadd.f32 %v159, %v466
    %v468 = vpop.f32.mrb[0].mxu0
    %v469 = vadd.f32 %v155, %v468
    %v470 = vpop.f32.mrb[0].mxu0
    %v471 = vadd.f32 %v159, %v470
    %472 = vmatprep.mubr.bf16.mxu0 0
    %473 = vmatmul.mubr.bf16.gmra.mrb[0].mxu0 %v210
    %v474 = vpop.f32.mrb[0].mxu0
    %v475 = vadd.f32 %v155, %v474
    %v476 = vpop.f32.mrb[0].mxu0
    %v477 = vadd.f32 %v159, %v476
    %v478 = vpop.f32.mrb[0].mxu0
    %v479 = vadd.f32 %v155, %v478
    %v480 = vpop.f32.mrb[0].mxu0
    %v481 = vadd.f32 %v159, %v480
    %482 = vmatprep.mubr.bf16.mxu0 0
    %483 = vmatmul.mubr.bf16.gmra.mrb[0].mxu0 %v211
    %v484 = vpop.f32.mrb[0].mxu0
    %v485 = vadd.f32 %v155, %v484
    %v486 = vpop.f32.mrb[0].mxu0
    %v487 = vadd.f32 %v159, %v486
    %v488 = vpop.f32.mrb[0].mxu0
    %v489 = vadd.f32 %v155, %v488
    %v490 = vpop.f32.mrb[0].mxu0
    %v491 = vadd.f32 %v159, %v490
    %492 = vdwg.mxu0
    %493 = vmatprep.subr.bf16.mxu0 %v319
    %494 = vmatpush1.bf16.msra.mxu0 %v318
    %495 = vmatprep.subr.bf16.mxu0 %v323
    %496 = vmatpush1.bf16.msra.mxu0 %v322
    %497 = vmatprep.subr.bf16.mxu0 %v327
    %498 = vmatpush1.bf16.msra.mxu0 %v326
    %499 = vmatprep.subr.bf16.mxu0 %v331
    %500 = vmatpush1.bf16.msra.mxu0 %v330
    %501 = vmatprep.subr.bf16.mxu0 %v335
    %502 = vmatpush1.bf16.msra.mxu0 %v334
    %503 = vmatprep.subr.bf16.mxu0 %v339
    %504 = vmatpush1.bf16.msra.mxu0 %v338
    %505 = vmatprep.subr.bf16.mxu0 %v343
    %506 = vmatpush1.bf16.msra.mxu0 %v342
    %507 = vmatprep.subr.bf16.mxu0 %v347
    %508 = vmatpush1.bf16.msra.mxu0 %v346
    %509 = vmatprep.subr.bf16.mxu0 0
    %510 = vmatpush1.bf16.msra.mxu0 0
    %511 = vmatprep.subr.bf16.mxu0 0
    %512 = vmatpush1.bf16.msra.mxu0 0
    %513 = vmatprep.subr.bf16.mxu0 0
    %514 = vmatpush1.bf16.msra.mxu0 0
    %515 = vmatprep.subr.bf16.mxu0 0
    %516 = vmatpush1.bf16.msra.mxu0 0
    %517 = vmatprep.subr.bf16.mxu0 0
    %518 = vmatpush1.bf16.msra.mxu0 0
    %519 = vmatprep.subr.bf16.mxu0 0
    %520 = vmatpush1.bf16.msra.mxu0 0
    %521 = vmatprep.subr.bf16.mxu0 0
    %522 = vmatpush1.bf16.msra.mxu0 0
    %523 = vmatprep.subr.bf16.mxu0 0
    %524 = vmatpush1.bf16.msra.mxu0 0
    %525 = vmatprep.mubr.bf16.mxu0 0
    %526 = vmatmul.mubr.bf16.gmra.mrb[0].mxu0 %v204
    %v527 = vpop.f32.mrb[0].mxu0
    %v528 = vadd.f32 %v163, %v527
    %v529 = vpop.f32.mrb[0].mxu0
    %v530 = vadd.f32 %v167, %v529
    %v531 = vpop.f32.mrb[0].mxu0
    %v532 = vadd.f32 %v163, %v531
    %v533 = vpop.f32.mrb[0].mxu0
    %v534 = vadd.f32 %v167, %v533
    %535 = vmatprep.mubr.bf16.mxu0 0
    %536 = vmatmul.mubr.bf16.gmra.mrb[0].mxu0 %v205
    %v537 = vpop.f32.mrb[0].mxu0
    %v538 = vadd.f32 %v163, %v537
    %v539 = vpop.f32.mrb[0].mxu0
    %v540 = vadd.f32 %v167, %v539
    %v541 = vpop.f32.mrb[0].mxu0
    %v542 = vadd.f32 %v163, %v541
    %v543 = vpop.f32.mrb[0].mxu0
    %v544 = vadd.f32 %v167, %v543
    %545 = vmatprep.mubr.bf16.mxu0 0
    %546 = vmatmul.mubr.bf16.gmra.mrb[0].mxu0 %v206
    %v547 = vpop.f32.mrb[0].mxu0
    %v548 = vadd.f32 %v163, %v547
    %v549 = vpop.f32.mrb[0].mxu0
    %v550 = vadd.f32 %v167, %v549
    %v551 = vpop.f32.mrb[0].mxu0
    %v552 = vadd.f32 %v163, %v551
    %v553 = vpop.f32.mrb[0].mxu0
    %v554 = vadd.f32 %v167, %v553
    %555 = vmatprep.mubr.bf16.mxu0 0
    %556 = vmatmul.mubr.bf16.gmra.mrb[0].mxu0 %v207
    %v557 = vpop.f32.mrb[0].mxu0
    %v558 = vadd.f32 %v163, %v557
    %v559 = vpop.f32.mrb[0].mxu0
    %v560 = vadd.f32 %v167, %v559
    %v561 = vpop.f32.mrb[0].mxu0
    %v562 = vadd.f32 %v163, %v561
    %v563 = vpop.f32.mrb[0].mxu0
    %v564 = vadd.f32 %v167, %v563
    %565 = vmatprep.mubr.bf16.mxu0 0
    %566 = vmatmul.mubr.bf16.gmra.mrb[0].mxu0 %v208
    %v567 = vpop.f32.mrb[0].mxu0
    %v568 = vadd.f32 %v163, %v567
    %v569 = vpop.f32.mrb[0].mxu0
    %v570 = vadd.f32 %v167, %v569
    %v571 = vpop.f32.mrb[0].mxu0
    %v572 = vadd.f32 %v163, %v571
    %v573 = vpop.f32.mrb[0].mxu0
    %v574 = vadd.f32 %v167, %v573
    %575 = vmatprep.mubr.bf16.mxu0 0
    %576 = vmatmul.mubr.bf16.gmra.mrb[0].mxu0 %v209
    %v577 = vpop.f32.mrb[0].mxu0
    %v578 = vadd.f32 %v163, %v577
    %v579 = vpop.f32.mrb[0].mxu0
    %v580 = vadd.f32 %v167, %v579
    %v581 = vpop.f32.mrb[0].mxu0
    %v582 = vadd.f32 %v163, %v581
    %v583 = vpop.f32.mrb[0].mxu0
    %v584 = vadd.f32 %v167, %v583
    %585 = vmatprep.mubr.bf16.mxu0 0
    %586 = vmatmul.mubr.bf16.gmra.mrb[0].mxu0 %v210
    %v587 = vpop.f32.mrb[0].mxu0
    %v588 = vadd.f32 %v163, %v587
    %v589 = vpop.f32.mrb[0].mxu0
    %v590 = vadd.f32 %v167, %v589
    %v591 = vpop.f32.mrb[0].mxu0
    %v592 = vadd.f32 %v163, %v591
    %v593 = vpop.f32.mrb[0].mxu0
    %v594 = vadd.f32 %v167, %v593
    %595 = vmatprep.mubr.bf16.mxu0 0
    %596 = vmatmul.mubr.bf16.gmra.mrb[0].mxu0 %v211
    %v597 = vpop.f32.mrb[0].mxu0
    %v598 = vadd.f32 %v163, %v597
    %v599 = vpop.f32.mrb[0].mxu0
    %v600 = vadd.f32 %v167, %v599
    %v601 = vpop.f32.mrb[0].mxu0
    %v602 = vadd.f32 %v163, %v601
    %v603 = vpop.f32.mrb[0].mxu0
    %v604 = vadd.f32 %v167, %v603
    %605 = vdwg.mxu0
    %v606 = vmax.f32 %v415, 0.0
    %v607 = vmax.f32 %v417, 0.0
    %v608 = vmax.f32 %v528, 0.0
    %v609 = vmax.f32 %v530, 0.0
    %v610 = vmax.f32 %v419, 0.0
    %v611 = vmax.f32 %v421, 0.0
    %v612 = vmax.f32 %v532, 0.0
    %v613 = vmax.f32 %v534, 0.0
    %v614 = vmax.f32 %v425, 0.0
    %v615 = vmax.f32 %v427, 0.0
    %v616 = vmax.f32 %v538, 0.0
    %v617 = vmax.f32 %v540, 0.0
    %v618 = vmax.f32 %v429, 0.0
    %v619 = vmax.f32 %v431, 0.0
    %v620 = vmax.f32 %v542, 0.0
    %v621 = vmax.f32 %v544, 0.0
    %v622 = vmax.f32 %v435, 0.0
    %v623 = vmax.f32 %v437, 0.0
    %v624 = vmax.f32 %v548, 0.0
    %v625 = vmax.f32 %v550, 0.0
    %v626 = vmax.f32 %v439, 0.0
    %v627 = vmax.f32 %v441, 0.0
    %v628 = vmax.f32 %v552, 0.0
    %v629 = vmax.f32 %v554, 0.0
    %v630 = vmax.f32 %v445, 0.0
    %v631 = vmax.f32 %v447, 0.0
    %v632 = vmax.f32 %v558, 0.0
    %v633 = vmax.f32 %v560, 0.0
    %v634 = vmax.f32 %v449, 0.0
    %v635 = vmax.f32 %v451, 0.0
    %v636 = vmax.f32 %v562, 0.0
    %v637 = vmax.f32 %v564, 0.0
    %v638 = vmax.f32 %v455, 0.0
    %v639 = vmax.f32 %v457, 0.0
    %v640 = vmax.f32 %v568, 0.0
    %v641 = vmax.f32 %v570, 0.0
    %v642 = vmax.f32 %v459, 0.0
    %v643 = vmax.f32 %v461, 0.0
    %v644 = vmax.f32 %v572, 0.0
    %v645 = vmax.f32 %v574, 0.0
    %v646 = vmax.f32 %v465, 0.0
    %v647 = vmax.f32 %v467, 0.0
    %v648 = vmax.f32 %v578, 0.0
    %v649 = vmax.f32 %v580, 0.0
    %v650 = vmax.f32 %v469, 0.0
    %v651 = vmax.f32 %v471, 0.0
    %v652 = vmax.f32 %v582, 0.0
    %v653 = vmax.f32 %v584, 0.0
    %v654 = vmax.f32 %v475, 0.0
    %v655 = vmax.f32 %v477, 0.0
    %v656 = vmax.f32 %v588, 0.0
    %v657 = vmax.f32 %v590, 0.0
    %v658 = vmax.f32 %v479, 0.0
    %v659 = vmax.f32 %v481, 0.0
    %v660 = vmax.f32 %v592, 0.0
    %v661 = vmax.f32 %v594, 0.0
    %v662 = vmax.f32 %v485, 0.0
    %v663 = vmax.f32 %v487, 0.0
    %v664 = vmax.f32 %v598, 0.0
    %v665 = vmax.f32 %v600, 0.0
    %v666 = vmax.f32 %v489, 0.0
    %v667 = vmax.f32 %v491, 0.0
    %v668 = vmax.f32 %v602, 0.0
    %v669 = vmax.f32 %v604, 0.0
    %v670 = vpack.c.bf16 %v610, %v606
    %v671 = vpack.c.bf16 %v611, %v607
    %v672 = vpack.c.bf16 %v612, %v608
    %v673 = vpack.c.bf16 %v613, %v609
    %v674 = vpack.c.bf16 %v618, %v614
    %v675 = vpack.c.bf16 %v619, %v615
    %v676 = vpack.c.bf16 %v620, %v616
    %v677 = vpack.c.bf16 %v621, %v617
    %v678 = vpack.c.bf16 %v626, %v622
    %v679 = vpack.c.bf16 %v627, %v623
    %v680 = vpack.c.bf16 %v628, %v624
    %v681 = vpack.c.bf16 %v629, %v625
    %v682 = vpack.c.bf16 %v634, %v630
    %v683 = vpack.c.bf16 %v635, %v631
    %v684 = vpack.c.bf16 %v636, %v632
    %v685 = vpack.c.bf16 %v637, %v633
    %v686 = vpack.c.bf16 %v642, %v638
    %v687 = vpack.c.bf16 %v643, %v639
    %v688 = vpack.c.bf16 %v644, %v640
    %v689 = vpack.c.bf16 %v645, %v641
    %v690 = vpack.c.bf16 %v650, %v646
    %v691 = vpack.c.bf16 %v651, %v647
    %v692 = vpack.c.bf16 %v652, %v648
    %v693 = vpack.c.bf16 %v653, %v649
    %v694 = vpack.c.bf16 %v658, %v654
    %v695 = vpack.c.bf16 %v659, %v655
    %v696 = vpack.c.bf16 %v660, %v656
    %v697 = vpack.c.bf16 %v661, %v657
    %v698 = vpack.c.bf16 %v666, %v662
    %v699 = vpack.c.bf16 %v667, %v663
    %v700 = vpack.c.bf16 %v668, %v664
    %v701 = vpack.c.bf16 %v669, %v665
    %v702 = vld [vmem:[#allocation7] sm:$0xff]
    %v703 = vld [vmem:[#allocation7 + $0x8] sm:$0xff]
    %v704 = vld [vmem:[#allocation7 + $0x10] sm:$0xff]
    %v705 = vld [vmem:[#allocation7 + $0x18] sm:$0xff]
    %v706 = vld [vmem:[#allocation7 + $0x20] sm:$0xff]
    %v707 = vld [vmem:[#allocation7 + $0x28] sm:$0xff]
    %v708 = vld [vmem:[#allocation7 + $0x30] sm:$0xff]
    %v709 = vld [vmem:[#allocation7 + $0x38] sm:$0xff]
    %v710 = vld [vmem:[#allocation7 + $0x40] sm:$0xff]
    %v711 = vld [vmem:[#allocation7 + $0x48] sm:$0xff]
    %v712 = vld [vmem:[#allocation7 + $0x50] sm:$0xff]
    %v713 = vld [vmem:[#allocation7 + $0x58] sm:$0xff]
    %v714 = vld [vmem:[#allocation7 + $0x60] sm:$0xff]
    %v715 = vld [vmem:[#allocation7 + $0x68] sm:$0xff]
    %v716 = vld [vmem:[#allocation7 + $0x70] sm:$0xff]
    %v717 = vld [vmem:[#allocation7 + $0x78] sm:$0xff]
    %v718 = vld [vmem:[#allocation7 + $0x80] sm:$0xff]
    %v719 = vld [vmem:[#allocation7 + $0x88] sm:$0xff]
    %v720 = vld [vmem:[#allocation7 + $0x90] sm:$0xff]
    %v721 = vld [vmem:[#allocation7 + $0x98] sm:$0xff]
    %v722 = vld [vmem:[#allocation7 + $0xa0] sm:$0xff]
    %v723 = vld [vmem:[#allocation7 + $0xa8] sm:$0xff]
    %v724 = vld [vmem:[#allocation7 + $0xb0] sm:$0xff]
    %v725 = vld [vmem:[#allocation7 + $0xb8] sm:$0xff]
    %v726 = vld [vmem:[#allocation7 + $0xc0] sm:$0xff]
    %v727 = vld [vmem:[#allocation7 + $0xc8] sm:$0xff]
    %v728 = vld [vmem:[#allocation7 + $0xd0] sm:$0xff]
    %v729 = vld [vmem:[#allocation7 + $0xd8] sm:$0xff]
    %v730 = vld [vmem:[#allocation7 + $0xe0] sm:$0xff]
    %v731 = vld [vmem:[#allocation7 + $0xe8] sm:$0xff]
    %v732 = vld [vmem:[#allocation7 + $0xf0] sm:$0xff]
    %v733 = vld [vmem:[#allocation7 + $0xf8] sm:$0xff]
    %v734 = vld [vmem:[#allocation7 + $0x100] sm:$0xff]
    %v735 = vld [vmem:[#allocation7 + $0x108] sm:$0xff]
    %v736 = vld [vmem:[#allocation7 + $0x110] sm:$0xff]
    %v737 = vld [vmem:[#allocation7 + $0x118] sm:$0xff]
    %v738 = vld [vmem:[#allocation7 + $0x120] sm:$0xff]
    %v739 = vld [vmem:[#allocation7 + $0x128] sm:$0xff]
    %v740 = vld [vmem:[#allocation7 + $0x130] sm:$0xff]
    %v741 = vld [vmem:[#allocation7 + $0x138] sm:$0xff]
    %v742 = vld [vmem:[#allocation7 + $0x140] sm:$0xff]
    %v743 = vld [vmem:[#allocation7 + $0x148] sm:$0xff]
    %v744 = vld [vmem:[#allocation7 + $0x150] sm:$0xff]
    %v745 = vld [vmem:[#allocation7 + $0x158] sm:$0xff]
    %v746 = vld [vmem:[#allocation7 + $0x160] sm:$0xff]
    %v747 = vld [vmem:[#allocation7 + $0x168] sm:$0xff]
    %v748 = vld [vmem:[#allocation7 + $0x170] sm:$0xff]
    %v749 = vld [vmem:[#allocation7 + $0x178] sm:$0xff]
    %v750 = vld [vmem:[#allocation7 + $0x180] sm:$0xff]
    %v751 = vld [vmem:[#allocation7 + $0x188] sm:$0xff]
    %v752 = vld [vmem:[#allocation7 + $0x190] sm:$0xff]
    %v753 = vld [vmem:[#allocation7 + $0x198] sm:$0xff]
    %v754 = vld [vmem:[#allocation7 + $0x1a0] sm:$0xff]
    %v755 = vld [vmem:[#allocation7 + $0x1a8] sm:$0xff]
    %v756 = vld [vmem:[#allocation7 + $0x1b0] sm:$0xff]
    %v757 = vld [vmem:[#allocation7 + $0x1b8] sm:$0xff]
    %v758 = vld [vmem:[#allocation7 + $0x1c0] sm:$0xff]
    %v759 = vld [vmem:[#allocation7 + $0x1c8] sm:$0xff]
    %v760 = vld [vmem:[#allocation7 + $0x1d0] sm:$0xff]
    %v761 = vld [vmem:[#allocation7 + $0x1d8] sm:$0xff]
    %v762 = vld [vmem:[#allocation7 + $0x1e0] sm:$0xff]
    %v763 = vld [vmem:[#allocation7 + $0x1e8] sm:$0xff]
    %v764 = vld [vmem:[#allocation7 + $0x1f0] sm:$0xff]
    %v765 = vld [vmem:[#allocation7 + $0x1f8] sm:$0xff]
    %v766 = vld [vmem:[#allocation7 + $0x200] sm:$0xff]
    %v767 = vld [vmem:[#allocation7 + $0x208] sm:$0xff]
    %v768 = vld [vmem:[#allocation7 + $0x210] sm:$0xff]
    %v769 = vld [vmem:[#allocation7 + $0x218] sm:$0xff]
    %v770 = vld [vmem:[#allocation7 + $0x220] sm:$0xff]
    %v771 = vld [vmem:[#allocation7 + $0x228] sm:$0xff]
    %v772 = vld [vmem:[#allocation7 + $0x230] sm:$0xff]
    %v773 = vld [vmem:[#allocation7 + $0x238] sm:$0xff]
    %v774 = vld [vmem:[#allocation7 + $0x240] sm:$0xff]
    %v775 = vld [vmem:[#allocation7 + $0x248] sm:$0xff]
    %v776 = vld [vmem:[#allocation7 + $0x250] sm:$0xff]
    %v777 = vld [vmem:[#allocation7 + $0x258] sm:$0xff]
    %v778 = vld [vmem:[#allocation7 + $0x260] sm:$0xff]
    %v779 = vld [vmem:[#allocation7 + $0x268] sm:$0xff]
    %v780 = vld [vmem:[#allocation7 + $0x270] sm:$0xff]
    %v781 = vld [vmem:[#allocation7 + $0x278] sm:$0xff]
    %v782 = vld [vmem:[#allocation7 + $0x280] sm:$0xff]
    %v783 = vld [vmem:[#allocation7 + $0x288] sm:$0xff]
    %v784 = vld [vmem:[#allocation7 + $0x290] sm:$0xff]
    %v785 = vld [vmem:[#allocation7 + $0x298] sm:$0xff]
    %v786 = vld [vmem:[#allocation7 + $0x2a0] sm:$0xff]
    %v787 = vld [vmem:[#allocation7 + $0x2a8] sm:$0xff]
    %v788 = vld [vmem:[#allocation7 + $0x2b0] sm:$0xff]
    %v789 = vld [vmem:[#allocation7 + $0x2b8] sm:$0xff]
    %v790 = vld [vmem:[#allocation7 + $0x2c0] sm:$0xff]
    %v791 = vld [vmem:[#allocation7 + $0x2c8] sm:$0xff]
    %v792 = vld [vmem:[#allocation7 + $0x2d0] sm:$0xff]
    %v793 = vld [vmem:[#allocation7 + $0x2d8] sm:$0xff]
    %v794 = vld [vmem:[#allocation7 + $0x2e0] sm:$0xff]
    %v795 = vld [vmem:[#allocation7 + $0x2e8] sm:$0xff]
    %v796 = vld [vmem:[#allocation7 + $0x2f0] sm:$0xff]
    %v797 = vld [vmem:[#allocation7 + $0x2f8] sm:$0xff]
    %v798 = vld [vmem:[#allocation7 + $0x300] sm:$0xff]
    %v799 = vld [vmem:[#allocation7 + $0x308] sm:$0xff]
    %v800 = vld [vmem:[#allocation7 + $0x310] sm:$0xff]
    %v801 = vld [vmem:[#allocation7 + $0x318] sm:$0xff]
    %v802 = vld [vmem:[#allocation7 + $0x320] sm:$0xff]
    %v803 = vld [vmem:[#allocation7 + $0x328] sm:$0xff]
    %v804 = vld [vmem:[#allocation7 + $0x330] sm:$0xff]
    %v805 = vld [vmem:[#allocation7 + $0x338] sm:$0xff]
    %v806 = vld [vmem:[#allocation7 + $0x340] sm:$0xff]
    %v807 = vld [vmem:[#allocation7 + $0x348] sm:$0xff]
    %v808 = vld [vmem:[#allocation7 + $0x350] sm:$0xff]
    %v809 = vld [vmem:[#allocation7 + $0x358] sm:$0xff]
    %v810 = vld [vmem:[#allocation7 + $0x360] sm:$0xff]
    %v811 = vld [vmem:[#allocation7 + $0x368] sm:$0xff]
    %v812 = vld [vmem:[#allocation7 + $0x370] sm:$0xff]
    %v813 = vld [vmem:[#allocation7 + $0x378] sm:$0xff]
    %v814 = vld [vmem:[#allocation7 + $0x380] sm:$0xff]
    %v815 = vld [vmem:[#allocation7 + $0x388] sm:$0xff]
    %v816 = vld [vmem:[#allocation7 + $0x390] sm:$0xff]
    %v817 = vld [vmem:[#allocation7 + $0x398] sm:$0xff]
    %v818 = vld [vmem:[#allocation7 + $0x3a0] sm:$0xff]
    %v819 = vld [vmem:[#allocation7 + $0x3a8] sm:$0xff]
    %v820 = vld [vmem:[#allocation7 + $0x3b0] sm:$0xff]
    %v821 = vld [vmem:[#allocation7 + $0x3b8] sm:$0xff]
    %v822 = vld [vmem:[#allocation7 + $0x3c0] sm:$0xff]
    %v823 = vld [vmem:[#allocation7 + $0x3c8] sm:$0xff]
    %v824 = vld [vmem:[#allocation7 + $0x3d0] sm:$0xff]
    %v825 = vld [vmem:[#allocation7 + $0x3d8] sm:$0xff]
    %v826 = vld [vmem:[#allocation7 + $0x3e0] sm:$0xff]
    %v827 = vld [vmem:[#allocation7 + $0x3e8] sm:$0xff]
    %v828 = vld [vmem:[#allocation7 + $0x3f0] sm:$0xff]
    %v829 = vld [vmem:[#allocation7 + $0x3f8] sm:$0xff]
    %v830 = vld [vmem:[%s4] sm:$0xf]
    %v832 = vlaneseq
    %v833 = vshrl.u32 %v832, 7
    %v834 = vsub.s32 0, %v833
    %v835 = vrot.slane %v830, %v834
    %v836 = vlaneseq
    %v837 = vshrl.u32 %v836, 7
    %v838 = vsub.s32 1, %v837
    %v839 = vrot.slane %v830, %v838
    %v840 = vlaneseq
    %v841 = vshrl.u32 %v840, 7
    %v842 = vsub.s32 2, %v841
    %v843 = vrot.slane %v830, %v842
    %v844 = vlaneseq
    %v845 = vshrl.u32 %v844, 7
    %v846 = vsub.s32 3, %v845
    %v847 = vrot.slane %v830, %v846
    %v980 = vunpack.c.l.b16 %v702
    %v981 = vunpack.c.h.b16 %v702
    %v982 = vunpack.c.l.b16 %v703
    %v983 = vunpack.c.h.b16 %v703
    %v984 = vunpack.c.l.b16 %v704
    %v985 = vunpack.c.h.b16 %v704
    %v986 = vunpack.c.l.b16 %v705
    %v987 = vunpack.c.h.b16 %v705
    %v988 = vunpack.c.l.b16 %v706
    %v989 = vunpack.c.h.b16 %v706
    %v990 = vunpack.c.l.b16 %v707
    %v991 = vunpack.c.h.b16 %v707
    %v992 = vunpack.c.l.b16 %v708
    %v993 = vunpack.c.h.b16 %v708
    %v994 = vunpack.c.l.b16 %v709
    %v995 = vunpack.c.h.b16 %v709
    %v996 = vunpack.c.l.b16 %v710
    %v997 = vunpack.c.h.b16 %v710
    %v998 = vunpack.c.l.b16 %v711
    %v999 = vunpack.c.h.b16 %v711
    %v1000 = vunpack.c.l.b16 %v712
    %v1001 = vunpack.c.h.b16 %v712
    %v1002 = vunpack.c.l.b16 %v713
    %v1003 = vunpack.c.h.b16 %v713
    %v1004 = vunpack.c.l.b16 %v714
    %v1005 = vunpack.c.h.b16 %v714
    %v1006 = vunpack.c.l.b16 %v715
    %v1007 = vunpack.c.h.b16 %v715
    %v1008 = vunpack.c.l.b16 %v716
    %v1009 = vunpack.c.h.b16 %v716
    %v1010 = vunpack.c.l.b16 %v717
    %v1011 = vunpack.c.h.b16 %v717
    %v1012 = vunpack.c.l.b16 %v718
    %v1013 = vunpack.c.h.b16 %v718
    %v1014 = vunpack.c.l.b16 %v719
    %v1015 = vunpack.c.h.b16 %v719
    %v1016 = vunpack.c.l.b16 %v720
    %v1017 = vunpack.c.h.b16 %v720
    %v1018 = vunpack.c.l.b16 %v721
    %v1019 = vunpack.c.h.b16 %v721
    %v1020 = vunpack.c.l.b16 %v722
    %v1021 = vunpack.c.h.b16 %v722
    %v1022 = vunpack.c.l.b16 %v723
    %v1023 = vunpack.c.h.b16 %v723
    %v1024 = vunpack.c.l.b16 %v724
    %v1025 = vunpack.c.h.b16 %v724
    %v1026 = vunpack.c.l.b16 %v725
    %v1027 = vunpack.c.h.b16 %v725
    %v1028 = vunpack.c.l.b16 %v726
    %v1029 = vunpack.c.h.b16 %v726
    %v1030 = vunpack.c.l.b16 %v727
    %v1031 = vunpack.c.h.b16 %v727
    %v1032 = vunpack.c.l.b16 %v728
    %v1033 = vunpack.c.h.b16 %v728
    %v1034 = vunpack.c.l.b16 %v729
    %v1035 = vunpack.c.h.b16 %v729
    %v1036 = vunpack.c.l.b16 %v730
    %v1037 = vunpack.c.h.b16 %v730
    %v1038 = vunpack.c.l.b16 %v731
    %v1039 = vunpack.c.h.b16 %v731
    %v1040 = vunpack.c.l.b16 %v732
    %v1041 = vunpack.c.h.b16 %v732
    %v1042 = vunpack.c.l.b16 %v733
    %v1043 = vunpack.c.h.b16 %v733
    %v1044 = vunpack.c.l.b16 %v734
    %v1045 = vunpack.c.h.b16 %v734
    %v1046 = vunpack.c.l.b16 %v735
    %v1047 = vunpack.c.h.b16 %v735
    %v1048 = vunpack.c.l.b16 %v736
    %v1049 = vunpack.c.h.b16 %v736
    %v1050 = vunpack.c.l.b16 %v737
    %v1051 = vunpack.c.h.b16 %v737
    %v1052 = vunpack.c.l.b16 %v738
    %v1053 = vunpack.c.h.b16 %v738
    %v1054 = vunpack.c.l.b16 %v739
    %v1055 = vunpack.c.h.b16 %v739
    %v1056 = vunpack.c.l.b16 %v740
    %v1057 = vunpack.c.h.b16 %v740
    %v1058 = vunpack.c.l.b16 %v741
    %v1059 = vunpack.c.h.b16 %v741
    %v1060 = vunpack.c.l.b16 %v742
    %v1061 = vunpack.c.h.b16 %v742
    %v1062 = vunpack.c.l.b16 %v743
    %v1063 = vunpack.c.h.b16 %v743
    %v1064 = vunpack.c.l.b16 %v744
    %v1065 = vunpack.c.h.b16 %v744
    %v1066 = vunpack.c.l.b16 %v745
    %v1067 = vunpack.c.h.b16 %v745
    %v1068 = vunpack.c.l.b16 %v746
    %v1069 = vunpack.c.h.b16 %v746
    %v1070 = vunpack.c.l.b16 %v747
    %v1071 = vunpack.c.h.b16 %v747
    %v1072 = vunpack.c.l.b16 %v748
    %v1073 = vunpack.c.h.b16 %v748
    %v1074 = vunpack.c.l.b16 %v749
    %v1075 = vunpack.c.h.b16 %v749
    %v1076 = vunpack.c.l.b16 %v750
    %v1077 = vunpack.c.h.b16 %v750
    %v1078 = vunpack.c.l.b16 %v751
    %v1079 = vunpack.c.h.b16 %v751
    %v1080 = vunpack.c.l.b16 %v752
    %v1081 = vunpack.c.h.b16 %v752
    %v1082 = vunpack.c.l.b16 %v753
    %v1083 = vunpack.c.h.b16 %v753
    %v1084 = vunpack.c.l.b16 %v754
    %v1085 = vunpack.c.h.b16 %v754
    %v1086 = vunpack.c.l.b16 %v755
    %v1087 = vunpack.c.h.b16 %v755
    %v1088 = vunpack.c.l.b16 %v756
    %v1089 = vunpack.c.h.b16 %v756
    %v1090 = vunpack.c.l.b16 %v757
    %v1091 = vunpack.c.h.b16 %v757
    %v1092 = vunpack.c.l.b16 %v758
    %v1093 = vunpack.c.h.b16 %v758
    %v1094 = vunpack.c.l.b16 %v759
    %v1095 = vunpack.c.h.b16 %v759
    %v1096 = vunpack.c.l.b16 %v760
    %v1097 = vunpack.c.h.b16 %v760
    %v1098 = vunpack.c.l.b16 %v761
    %v1099 = vunpack.c.h.b16 %v761
    %v1100 = vunpack.c.l.b16 %v762
    %v1101 = vunpack.c.h.b16 %v762
    %v1102 = vunpack.c.l.b16 %v763
    %v1103 = vunpack.c.h.b16 %v763
    %v1104 = vunpack.c.l.b16 %v764
    %v1105 = vunpack.c.h.b16 %v764
    %v1106 = vunpack.c.l.b16 %v765
    %v1107 = vunpack.c.h.b16 %v765
    %v1108 = vunpack.c.l.b16 %v766
    %v1109 = vunpack.c.h.b16 %v766
    %v1110 = vunpack.c.l.b16 %v767
    %v1111 = vunpack.c.h.b16 %v767
    %v1112 = vunpack.c.l.b16 %v768
    %v1113 = vunpack.c.h.b16 %v768
    %v1114 = vunpack.c.l.b16 %v769
    %v1115 = vunpack.c.h.b16 %v769
    %v1116 = vunpack.c.l.b16 %v770
    %v1117 = vunpack.c.h.b16 %v770
    %v1118 = vunpack.c.l.b16 %v771
    %v1119 = vunpack.c.h.b16 %v771
    %v1120 = vunpack.c.l.b16 %v772
    %v1121 = vunpack.c.h.b16 %v772
    %v1122 = vunpack.c.l.b16 %v773
    %v1123 = vunpack.c.h.b16 %v773
    %v1124 = vunpack.c.l.b16 %v774
    %v1125 = vunpack.c.h.b16 %v774
    %v1126 = vunpack.c.l.b16 %v775
    %v1127 = vunpack.c.h.b16 %v775
    %v1128 = vunpack.c.l.b16 %v776
    %v1129 = vunpack.c.h.b16 %v776
    %v1130 = vunpack.c.l.b16 %v777
    %v1131 = vunpack.c.h.b16 %v777
    %v1132 = vunpack.c.l.b16 %v778
    %v1133 = vunpack.c.h.b16 %v778
    %v1134 = vunpack.c.l.b16 %v779
    %v1135 = vunpack.c.h.b16 %v779
    %v1136 = vunpack.c.l.b16 %v780
    %v1137 = vunpack.c.h.b16 %v780
    %v1138 = vunpack.c.l.b16 %v781
    %v1139 = vunpack.c.h.b16 %v781
    %v1140 = vunpack.c.l.b16 %v782
    %v1141 = vunpack.c.h.b16 %v782
    %v1142 = vunpack.c.l.b16 %v783
    %v1143 = vunpack.c.h.b16 %v783
    %v1144 = vunpack.c.l.b16 %v784
    %v1145 = vunpack.c.h.b16 %v784
    %v1146 = vunpack.c.l.b16 %v785
    %v1147 = vunpack.c.h.b16 %v785
    %v1148 = vunpack.c.l.b16 %v786
    %v1149 = vunpack.c.h.b16 %v786
    %v1150 = vunpack.c.l.b16 %v787
    %v1151 = vunpack.c.h.b16 %v787
    %v1152 = vunpack.c.l.b16 %v788
    %v1153 = vunpack.c.h.b16 %v788
    %v1154 = vunpack.c.l.b16 %v789
    %v1155 = vunpack.c.h.b16 %v789
    %v1156 = vunpack.c.l.b16 %v790
    %v1157 = vunpack.c.h.b16 %v790
    %v1158 = vunpack.c.l.b16 %v791
    %v1159 = vunpack.c.h.b16 %v791
    %v1160 = vunpack.c.l.b16 %v792
    %v1161 = vunpack.c.h.b16 %v792
    %v1162 = vunpack.c.l.b16 %v793
    %v1163 = vunpack.c.h.b16 %v793
    %v1164 = vunpack.c.l.b16 %v794
    %v1165 = vunpack.c.h.b16 %v794
    %v1166 = vunpack.c.l.b16 %v795
    %v1167 = vunpack.c.h.b16 %v795
    %v1168 = vunpack.c.l.b16 %v796
    %v1169 = vunpack.c.h.b16 %v796
    %v1170 = vunpack.c.l.b16 %v797
    %v1171 = vunpack.c.h.b16 %v797
    %v1172 = vunpack.c.l.b16 %v798
    %v1173 = vunpack.c.h.b16 %v798
    %v1174 = vunpack.c.l.b16 %v799
    %v1175 = vunpack.c.h.b16 %v799
    %v1176 = vunpack.c.l.b16 %v800
    %v1177 = vunpack.c.h.b16 %v800
    %v1178 = vunpack.c.l.b16 %v801
    %v1179 = vunpack.c.h.b16 %v801
    %v1180 = vunpack.c.l.b16 %v802
    %v1181 = vunpack.c.h.b16 %v802
    %v1182 = vunpack.c.l.b16 %v803
    %v1183 = vunpack.c.h.b16 %v803
    %v1184 = vunpack.c.l.b16 %v804
    %v1185 = vunpack.c.h.b16 %v804
    %v1186 = vunpack.c.l.b16 %v805
    %v1187 = vunpack.c.h.b16 %v805
    %v1188 = vunpack.c.l.b16 %v806
    %v1189 = vunpack.c.h.b16 %v806
    %v1190 = vunpack.c.l.b16 %v807
    %v1191 = vunpack.c.h.b16 %v807
    %v1192 = vunpack.c.l.b16 %v808
    %v1193 = vunpack.c.h.b16 %v808
    %v1194 = vunpack.c.l.b16 %v809
    %v1195 = vunpack.c.h.b16 %v809
    %v1196 = vunpack.c.l.b16 %v810
    %v1197 = vunpack.c.h.b16 %v810
    %v1198 = vunpack.c.l.b16 %v811
    %v1199 = vunpack.c.h.b16 %v811
    %v1200 = vunpack.c.l.b16 %v812
    %v1201 = vunpack.c.h.b16 %v812
    %v1202 = vunpack.c.l.b16 %v813
    %v1203 = vunpack.c.h.b16 %v813
    %v1204 = vunpack.c.l.b16 %v814
    %v1205 = vunpack.c.h.b16 %v814
    %v1206 = vunpack.c.l.b16 %v815
    %v1207 = vunpack.c.h.b16 %v815
    %v1208 = vunpack.c.l.b16 %v816
    %v1209 = vunpack.c.h.b16 %v816
    %v1210 = vunpack.c.l.b16 %v817
    %v1211 = vunpack.c.h.b16 %v817
    %v1212 = vunpack.c.l.b16 %v818
    %v1213 = vunpack.c.h.b16 %v818
    %v1214 = vunpack.c.l.b16 %v819
    %v1215 = vunpack.c.h.b16 %v819
    %v1216 = vunpack.c.l.b16 %v820
    %v1217 = vunpack.c.h.b16 %v820
    %v1218 = vunpack.c.l.b16 %v821
    %v1219 = vunpack.c.h.b16 %v821
    %v1220 = vunpack.c.l.b16 %v822
    %v1221 = vunpack.c.h.b16 %v822
    %v1222 = vunpack.c.l.b16 %v823
    %v1223 = vunpack.c.h.b16 %v823
    %v1224 = vunpack.c.l.b16 %v824
    %v1225 = vunpack.c.h.b16 %v824
    %v1226 = vunpack.c.l.b16 %v825
    %v1227 = vunpack.c.h.b16 %v825
    %v1228 = vunpack.c.l.b16 %v826
    %v1229 = vunpack.c.h.b16 %v826
    %v1230 = vunpack.c.l.b16 %v827
    %v1231 = vunpack.c.h.b16 %v827
    %v1232 = vunpack.c.l.b16 %v828
    %v1233 = vunpack.c.h.b16 %v828
    %v1234 = vunpack.c.l.b16 %v829
    %v1235 = vunpack.c.h.b16 %v829
    %v1236 = vpack.c.b16 %v984, %v980
    %v1237 = vpack.c.b16 %v985, %v981
    %v1238 = vpack.c.b16 %v986, %v982
    %v1239 = vpack.c.b16 %v987, %v983
    %v1240 = vpack.c.b16 %v992, %v988
    %v1241 = vpack.c.b16 %v993, %v989
    %v1242 = vpack.c.b16 %v994, %v990
    %v1243 = vpack.c.b16 %v995, %v991
    %v1244 = vpack.c.b16 %v1000, %v996
    %v1245 = vpack.c.b16 %v1001, %v997
    %v1246 = vpack.c.b16 %v1002, %v998
    %v1247 = vpack.c.b16 %v1003, %v999
    %v1248 = vpack.c.b16 %v1008, %v1004
    %v1249 = vpack.c.b16 %v1009, %v1005
    %v1250 = vpack.c.b16 %v1010, %v1006
    %v1251 = vpack.c.b16 %v1011, %v1007
    %v1252 = vpack.c.b16 %v1016, %v1012
    %v1253 = vpack.c.b16 %v1017, %v1013
    %v1254 = vpack.c.b16 %v1018, %v1014
    %v1255 = vpack.c.b16 %v1019, %v1015
    %v1256 = vpack.c.b16 %v1024, %v1020
    %v1257 = vpack.c.b16 %v1025, %v1021
    %v1258 = vpack.c.b16 %v1026, %v1022
    %v1259 = vpack.c.b16 %v1027, %v1023
    %v1260 = vpack.c.b16 %v1032, %v1028
    %v1261 = vpack.c.b16 %v1033, %v1029
    %v1262 = vpack.c.b16 %v1034, %v1030
    %v1263 = vpack.c.b16 %v1035, %v1031
    %v1264 = vpack.c.b16 %v1040, %v1036
    %v1265 = vpack.c.b16 %v1041, %v1037
    %v1266 = vpack.c.b16 %v1042, %v1038
    %v1267 = vpack.c.b16 %v1043, %v1039
    %v1268 = vpack.c.b16 %v1048, %v1044
    %v1269 = vpack.c.b16 %v1049, %v1045
    %v1270 = vpack.c.b16 %v1050, %v1046
    %v1271 = vpack.c.b16 %v1051, %v1047
    %v1272 = vpack.c.b16 %v1056, %v1052
    %v1273 = vpack.c.b16 %v1057, %v1053
    %v1274 = vpack.c.b16 %v1058, %v1054
    %v1275 = vpack.c.b16 %v1059, %v1055
    %v1276 = vpack.c.b16 %v1064, %v1060
    %v1277 = vpack.c.b16 %v1065, %v1061
    %v1278 = vpack.c.b16 %v1066, %v1062
    %v1279 = vpack.c.b16 %v1067, %v1063
    %v1280 = vpack.c.b16 %v1072, %v1068
    %v1281 = vpack.c.b16 %v1073, %v1069
    %v1282 = vpack.c.b16 %v1074, %v1070
    %v1283 = vpack.c.b16 %v1075, %v1071
    %v1284 = vpack.c.b16 %v1080, %v1076
    %v1285 = vpack.c.b16 %v1081, %v1077
    %v1286 = vpack.c.b16 %v1082, %v1078
    %v1287 = vpack.c.b16 %v1083, %v1079
    %v1288 = vpack.c.b16 %v1088, %v1084
    %v1289 = vpack.c.b16 %v1089, %v1085
    %v1290 = vpack.c.b16 %v1090, %v1086
    %v1291 = vpack.c.b16 %v1091, %v1087
    %v1292 = vpack.c.b16 %v1096, %v1092
    %v1293 = vpack.c.b16 %v1097, %v1093
    %v1294 = vpack.c.b16 %v1098, %v1094
    %v1295 = vpack.c.b16 %v1099, %v1095
    %v1296 = vpack.c.b16 %v1104, %v1100
    %v1297 = vpack.c.b16 %v1105, %v1101
    %v1298 = vpack.c.b16 %v1106, %v1102
    %v1299 = vpack.c.b16 %v1107, %v1103
    %v1300 = vpack.c.b16 %v1112, %v1108
    %v1301 = vpack.c.b16 %v1113, %v1109
    %v1302 = vpack.c.b16 %v1114, %v1110
    %v1303 = vpack.c.b16 %v1115, %v1111
    %v1304 = vpack.c.b16 %v1120, %v1116
    %v1305 = vpack.c.b16 %v1121, %v1117
    %v1306 = vpack.c.b16 %v1122, %v1118
    %v1307 = vpack.c.b16 %v1123, %v1119
    %v1308 = vpack.c.b16 %v1128, %v1124
    %v1309 = vpack.c.b16 %v1129, %v1125
    %v1310 = vpack.c.b16 %v1130, %v1126
    %v1311 = vpack.c.b16 %v1131, %v1127
    %v1312 = vpack.c.b16 %v1136, %v1132
    %v1313 = vpack.c.b16 %v1137, %v1133
    %v1314 = vpack.c.b16 %v1138, %v1134
    %v1315 = vpack.c.b16 %v1139, %v1135
    %v1316 = vpack.c.b16 %v1144, %v1140
    %v1317 = vpack.c.b16 %v1145, %v1141
    %v1318 = vpack.c.b16 %v1146, %v1142
    %v1319 = vpack.c.b16 %v1147, %v1143
    %v1320 = vpack.c.b16 %v1152, %v1148
    %v1321 = vpack.c.b16 %v1153, %v1149
    %v1322 = vpack.c.b16 %v1154, %v1150
    %v1323 = vpack.c.b16 %v1155, %v1151
    %v1324 = vpack.c.b16 %v1160, %v1156
    %v1325 = vpack.c.b16 %v1161, %v1157
    %v1326 = vpack.c.b16 %v1162, %v1158
    %v1327 = vpack.c.b16 %v1163, %v1159
    %v1328 = vpack.c.b16 %v1168, %v1164
    %v1329 = vpack.c.b16 %v1169, %v1165
    %v1330 = vpack.c.b16 %v1170, %v1166
    %v1331 = vpack.c.b16 %v1171, %v1167
    %v1332 = vpack.c.b16 %v1176, %v1172
    %v1333 = vpack.c.b16 %v1177, %v1173
    %v1334 = vpack.c.b16 %v1178, %v1174
    %v1335 = vpack.c.b16 %v1179, %v1175
    %v1336 = vpack.c.b16 %v1184, %v1180
    %v1337 = vpack.c.b16 %v1185, %v1181
    %v1338 = vpack.c.b16 %v1186, %v1182
    %v1339 = vpack.c.b16 %v1187, %v1183
    %v1340 = vpack.c.b16 %v1192, %v1188
    %v1341 = vpack.c.b16 %v1193, %v1189
    %v1342 = vpack.c.b16 %v1194, %v1190
    %v1343 = vpack.c.b16 %v1195, %v1191
    %v1344 = vpack.c.b16 %v1200, %v1196
    %v1345 = vpack.c.b16 %v1201, %v1197
    %v1346 = vpack.c.b16 %v1202, %v1198
    %v1347 = vpack.c.b16 %v1203, %v1199
    %v1348 = vpack.c.b16 %v1208, %v1204
    %v1349 = vpack.c.b16 %v1209, %v1205
    %v1350 = vpack.c.b16 %v1210, %v1206
    %v1351 = vpack.c.b16 %v1211, %v1207
    %v1352 = vpack.c.b16 %v1216, %v1212
    %v1353 = vpack.c.b16 %v1217, %v1213
    %v1354 = vpack.c.b16 %v1218, %v1214
    %v1355 = vpack.c.b16 %v1219, %v1215
    %v1356 = vpack.c.b16 %v1224, %v1220
    %v1357 = vpack.c.b16 %v1225, %v1221
    %v1358 = vpack.c.b16 %v1226, %v1222
    %v1359 = vpack.c.b16 %v1227, %v1223
    %v1360 = vpack.c.b16 %v1232, %v1228
    %v1361 = vpack.c.b16 %v1233, %v1229
    %v1362 = vpack.c.b16 %v1234, %v1230
    %v1363 = vpack.c.b16 %v1235, %v1231
    %1492 = vmatprep.subr.bf16.mxu0 %v1237
    %1493 = vmatpush1.bf16.msra.mxu0 %v1236
    %1494 = vmatprep.subr.bf16.mxu0 %v1241
    %1495 = vmatpush1.bf16.msra.mxu0 %v1240
    %1496 = vmatprep.subr.bf16.mxu0 %v1245
    %1497 = vmatpush1.bf16.msra.mxu0 %v1244
    %1498 = vmatprep.subr.bf16.mxu0 %v1249
    %1499 = vmatpush1.bf16.msra.mxu0 %v1248
    %1500 = vmatprep.subr.bf16.mxu0 %v1253
    %1501 = vmatpush1.bf16.msra.mxu0 %v1252
    %1502 = vmatprep.subr.bf16.mxu0 %v1257
    %1503 = vmatpush1.bf16.msra.mxu0 %v1256
    %1504 = vmatprep.subr.bf16.mxu0 %v1261
    %1505 = vmatpush1.bf16.msra.mxu0 %v1260
    %1506 = vmatprep.subr.bf16.mxu0 %v1265
    %1507 = vmatpush1.bf16.msra.mxu0 %v1264
    %1508 = vmatprep.subr.bf16.mxu0 %v1269
    %1509 = vmatpush1.bf16.msra.mxu0 %v1268
    %1510 = vmatprep.subr.bf16.mxu0 %v1273
    %1511 = vmatpush1.bf16.msra.mxu0 %v1272
    %1512 = vmatprep.subr.bf16.mxu0 %v1277
    %1513 = vmatpush1.bf16.msra.mxu0 %v1276
    %1514 = vmatprep.subr.bf16.mxu0 %v1281
    %1515 = vmatpush1.bf16.msra.mxu0 %v1280
    %1516 = vmatprep.subr.bf16.mxu0 %v1285
    %1517 = vmatpush1.bf16.msra.mxu0 %v1284
    %1518 = vmatprep.subr.bf16.mxu0 %v1289
    %1519 = vmatpush1.bf16.msra.mxu0 %v1288
    %1520 = vmatprep.subr.bf16.mxu0 %v1293
    %1521 = vmatpush1.bf16.msra.mxu0 %v1292
    %1522 = vmatprep.subr.bf16.mxu0 %v1297
    %1523 = vmatpush1.bf16.msra.mxu0 %v1296
    %1524 = vmatprep.mubr.bf16.mxu0 %v671
    %1525 = vmatmul.mubr.bf16.gmra.mrb[0].mxu0 %v670
    %v1526 = vpop.f32.mrb[0].mxu0
    %v1527 = vadd.f32 %v835, %v1526
    %v1528 = vpop.f32.mrb[0].mxu0
    %v1529 = vadd.f32 %v839, %v1528
    %v1530 = vpop.f32.mrb[0].mxu0
    %v1531 = vadd.f32 %v835, %v1530
    %v1532 = vpop.f32.mrb[0].mxu0
    %v1533 = vadd.f32 %v839, %v1532
    %1534 = vmatprep.mubr.bf16.mxu0 %v675
    %1535 = vmatmul.mubr.bf16.gmra.mrb[0].mxu0 %v674
    %v1536 = vpop.f32.mrb[0].mxu0
    %v1537 = vadd.f32 %v835, %v1536
    %v1538 = vpop.f32.mrb[0].mxu0
    %v1539 = vadd.f32 %v839, %v1538
    %v1540 = vpop.f32.mrb[0].mxu0
    %v1541 = vadd.f32 %v835, %v1540
    %v1542 = vpop.f32.mrb[0].mxu0
    %v1543 = vadd.f32 %v839, %v1542
    %1544 = vmatprep.mubr.bf16.mxu0 %v679
    %1545 = vmatmul.mubr.bf16.gmra.mrb[0].mxu0 %v678
    %v1546 = vpop.f32.mrb[0].mxu0
    %v1547 = vadd.f32 %v835, %v1546
    %v1548 = vpop.f32.mrb[0].mxu0
    %v1549 = vadd.f32 %v839, %v1548
    %v1550 = vpop.f32.mrb[0].mxu0
    %v1551 = vadd.f32 %v835, %v1550
    %v1552 = vpop.f32.mrb[0].mxu0
    %v1553 = vadd.f32 %v839, %v1552
    %1554 = vmatprep.mubr.bf16.mxu0 %v683
    %1555 = vmatmul.mubr.bf16.gmra.mrb[0].mxu0 %v682
    %v1556 = vpop.f32.mrb[0].mxu0
    %v1557 = vadd.f32 %v835, %v1556
    %v1558 = vpop.f32.mrb[0].mxu0
    %v1559 = vadd.f32 %v839, %v1558
    %v1560 = vpop.f32.mrb[0].mxu0
    %v1561 = vadd.f32 %v835, %v1560
    %v1562 = vpop.f32.mrb[0].mxu0
    %v1563 = vadd.f32 %v839, %v1562
    %1564 = vmatprep.mubr.bf16.mxu0 %v687
    %1565 = vmatmul.mubr.bf16.gmra.mrb[0].mxu0 %v686
    %v1566 = vpop.f32.mrb[0].mxu0
    %v1567 = vadd.f32 %v835, %v1566
    %v1568 = vpop.f32.mrb[0].mxu0
    %v1569 = vadd.f32 %v839, %v1568
    %v1570 = vpop.f32.mrb[0].mxu0
    %v1571 = vadd.f32 %v835, %v1570
    %v1572 = vpop.f32.mrb[0].mxu0
    %v1573 = vadd.f32 %v839, %v1572
    %1574 = vmatprep.mubr.bf16.mxu0 %v691
    %1575 = vmatmul.mubr.bf16.gmra.mrb[0].mxu0 %v690
    %v1576 = vpop.f32.mrb[0].mxu0
    %v1577 = vadd.f32 %v835, %v1576
    %v1578 = vpop.f32.mrb[0].mxu0
    %v1579 = vadd.f32 %v839, %v1578
    %v1580 = vpop.f32.mrb[0].mxu0
    %v1581 = vadd.f32 %v835, %v1580
    %v1582 = vpop.f32.mrb[0].mxu0
    %v1583 = vadd.f32 %v839, %v1582
    %1584 = vmatprep.mubr.bf16.mxu0 %v695
    %1585 = vmatmul.mubr.bf16.gmra.mrb[0].mxu0 %v694
    %v1586 = vpop.f32.mrb[0].mxu0
    %v1587 = vadd.f32 %v835, %v1586
    %v1588 = vpop.f32.mrb[0].mxu0
    %v1589 = vadd.f32 %v839, %v1588
    %v1590 = vpop.f32.mrb[0].mxu0
    %v1591 = vadd.f32 %v835, %v1590
    %v1592 = vpop.f32.mrb[0].mxu0
    %v1593 = vadd.f32 %v839, %v1592
    %1594 = vmatprep.mubr.bf16.mxu0 %v699
    %1595 = vmatmul.mubr.bf16.gmra.mrb[0].mxu0 %v698
    %v1596 = vpop.f32.mrb[0].mxu0
    %v1597 = vadd.f32 %v835, %v1596
    %v1598 = vpop.f32.mrb[0].mxu0
    %v1599 = vadd.f32 %v839, %v1598
    %v1600 = vpop.f32.mrb[0].mxu0
    %v1601 = vadd.f32 %v835, %v1600
    %v1602 = vpop.f32.mrb[0].mxu0
    %v1603 = vadd.f32 %v839, %v1602
    %1604 = vdwg.mxu0
    %1605 = vmatprep.subr.bf16.mxu0 %v1301
    %1606 = vmatpush1.bf16.msra.mxu0 %v1300
    %1607 = vmatprep.subr.bf16.mxu0 %v1305
    %1608 = vmatpush1.bf16.msra.mxu0 %v1304
    %1609 = vmatprep.subr.bf16.mxu0 %v1309
    %1610 = vmatpush1.bf16.msra.mxu0 %v1308
    %1611 = vmatprep.subr.bf16.mxu0 %v1313
    %1612 = vmatpush1.bf16.msra.mxu0 %v1312
    %1613 = vmatprep.subr.bf16.mxu0 %v1317
    %1614 = vmatpush1.bf16.msra.mxu0 %v1316
    %1615 = vmatprep.subr.bf16.mxu0 %v1321
    %1616 = vmatpush1.bf16.msra.mxu0 %v1320
    %1617 = vmatprep.subr.bf16.mxu0 %v1325
    %1618 = vmatpush1.bf16.msra.mxu0 %v1324
    %1619 = vmatprep.subr.bf16.mxu0 %v1329
    %1620 = vmatpush1.bf16.msra.mxu0 %v1328
    %1621 = vmatprep.subr.bf16.mxu0 %v1333
    %1622 = vmatpush1.bf16.msra.mxu0 %v1332
    %1623 = vmatprep.subr.bf16.mxu0 %v1337
    %1624 = vmatpush1.bf16.msra.mxu0 %v1336
    %1625 = vmatprep.subr.bf16.mxu0 %v1341
    %1626 = vmatpush1.bf16.msra.mxu0 %v1340
    %1627 = vmatprep.subr.bf16.mxu0 %v1345
    %1628 = vmatpush1.bf16.msra.mxu0 %v1344
    %1629 = vmatprep.subr.bf16.mxu0 %v1349
    %1630 = vmatpush1.bf16.msra.mxu0 %v1348
    %1631 = vmatprep.subr.bf16.mxu0 %v1353
    %1632 = vmatpush1.bf16.msra.mxu0 %v1352
    %1633 = vmatprep.subr.bf16.mxu0 %v1357
    %1634 = vmatpush1.bf16.msra.mxu0 %v1356
    %1635 = vmatprep.subr.bf16.mxu0 %v1361
    %1636 = vmatpush1.bf16.msra.mxu0 %v1360
    %1637 = vmatprep.mubr.bf16.mxu0 %v673
    %1638 = vmatmul.mubr.bf16.gmra.mrb[0].mxu0 %v672
    %v1639 = vpop.f32.mrb[0].mxu0
    %v1640 = vadd.f32 %v1527, %v1639
    %v1641 = vpop.f32.mrb[0].mxu0
    %v1642 = vadd.f32 %v1529, %v1641
    %v1643 = vpop.f32.mrb[0].mxu0
    %v1644 = vadd.f32 %v1531, %v1643
    %v1645 = vpop.f32.mrb[0].mxu0
    %v1646 = vadd.f32 %v1533, %v1645
    %1647 = vmatprep.mubr.bf16.mxu0 %v677
    %1648 = vmatmul.mubr.bf16.gmra.mrb[0].mxu0 %v676
    %v1649 = vpop.f32.mrb[0].mxu0
    %v1650 = vadd.f32 %v1537, %v1649
    %v1651 = vpop.f32.mrb[0].mxu0
    %v1652 = vadd.f32 %v1539, %v1651
    %v1653 = vpop.f32.mrb[0].mxu0
    %v1654 = vadd.f32 %v1541, %v1653
    %v1655 = vpop.f32.mrb[0].mxu0
    %v1656 = vadd.f32 %v1543, %v1655
    %1657 = vmatprep.mubr.bf16.mxu0 %v681
    %1658 = vmatmul.mubr.bf16.gmra.mrb[0].mxu0 %v680
    %v1659 = vpop.f32.mrb[0].mxu0
    %v1660 = vadd.f32 %v1547, %v1659
    %v1661 = vpop.f32.mrb[0].mxu0
    %v1662 = vadd.f32 %v1549, %v1661
    %v1663 = vpop.f32.mrb[0].mxu0
    %v1664 = vadd.f32 %v1551, %v1663
    %v1665 = vpop.f32.mrb[0].mxu0
    %v1666 = vadd.f32 %v1553, %v1665
    %1667 = vmatprep.mubr.bf16.mxu0 %v685
    %1668 = vmatmul.mubr.bf16.gmra.mrb[0].mxu0 %v684
    %v1669 = vpop.f32.mrb[0].mxu0
    %v1670 = vadd.f32 %v1557, %v1669
    %v1671 = vpop.f32.mrb[0].mxu0
    %v1672 = vadd.f32 %v1559, %v1671
    %v1673 = vpop.f32.mrb[0].mxu0
    %v1674 = vadd.f32 %v1561, %v1673
    %v1675 = vpop.f32.mrb[0].mxu0
    %v1676 = vadd.f32 %v1563, %v1675
    %1677 = vmatprep.mubr.bf16.mxu0 %v689
    %1678 = vmatmul.mubr.bf16.gmra.mrb[0].mxu0 %v688
    %v1679 = vpop.f32.mrb[0].mxu0
    %v1680 = vadd.f32 %v1567, %v1679
    %v1681 = vpop.f32.mrb[0].mxu0
    %v1682 = vadd.f32 %v1569, %v1681
    %v1683 = vpop.f32.mrb[0].mxu0
    %v1684 = vadd.f32 %v1571, %v1683
    %v1685 = vpop.f32.mrb[0].mxu0
    %v1686 = vadd.f32 %v1573, %v1685
    %1687 = vmatprep.mubr.bf16.mxu0 %v693
    %1688 = vmatmul.mubr.bf16.gmra.mrb[0].mxu0 %v692
    %v1689 = vpop.f32.mrb[0].mxu0
    %v1690 = vadd.f32 %v1577, %v1689
    %v1691 = vpop.f32.mrb[0].mxu0
    %v1692 = vadd.f32 %v1579, %v1691
    %v1693 = vpop.f32.mrb[0].mxu0
    %v1694 = vadd.f32 %v1581, %v1693
    %v1695 = vpop.f32.mrb[0].mxu0
    %v1696 = vadd.f32 %v1583, %v1695
    %1697 = vmatprep.mubr.bf16.mxu0 %v697
    %1698 = vmatmul.mubr.bf16.gmra.mrb[0].mxu0 %v696
    %v1699 = vpop.f32.mrb[0].mxu0
    %v1700 = vadd.f32 %v1587, %v1699
    %v1701 = vpop.f32.mrb[0].mxu0
    %v1702 = vadd.f32 %v1589, %v1701
    %v1703 = vpop.f32.mrb[0].mxu0
    %v1704 = vadd.f32 %v1591, %v1703
    %v1705 = vpop.f32.mrb[0].mxu0
    %v1706 = vadd.f32 %v1593, %v1705
    %1707 = vmatprep.mubr.bf16.mxu0 %v701
    %1708 = vmatmul.mubr.bf16.gmra.mrb[0].mxu0 %v700
    %v1709 = vpop.f32.mrb[0].mxu0
    %v1710 = vadd.f32 %v1597, %v1709
    %v1711 = vpop.f32.mrb[0].mxu0
    %v1712 = vadd.f32 %v1599, %v1711
    %v1713 = vpop.f32.mrb[0].mxu0
    %v1714 = vadd.f32 %v1601, %v1713
    %v1715 = vpop.f32.mrb[0].mxu0
    %v1716 = vadd.f32 %v1603, %v1715
    %1717 = vdwg.mxu0
    %1718 = vmatprep.subr.bf16.mxu0 %v1239
    %1719 = vmatpush1.bf16.msra.mxu0 %v1238
    %1720 = vmatprep.subr.bf16.mxu0 %v1243
    %1721 = vmatpush1.bf16.msra.mxu0 %v1242
    %1722 = vmatprep.subr.bf16.mxu0 %v1247
    %1723 = vmatpush1.bf16.msra.mxu0 %v1246
    %1724 = vmatprep.subr.bf16.mxu0 %v1251
    %1725 = vmatpush1.bf16.msra.mxu0 %v1250
    %1726 = vmatprep.subr.bf16.mxu0 %v1255
    %1727 = vmatpush1.bf16.msra.mxu0 %v1254
    %1728 = vmatprep.subr.bf16.mxu0 %v1259
    %1729 = vmatpush1.bf16.msra.mxu0 %v1258
    %1730 = vmatprep.subr.bf16.mxu0 %v1263
    %1731 = vmatpush1.bf16.msra.mxu0 %v1262
    %1732 = vmatprep.subr.bf16.mxu0 %v1267
    %1733 = vmatpush1.bf16.msra.mxu0 %v1266
    %1734 = vmatprep.subr.bf16.mxu0 %v1271
    %1735 = vmatpush1.bf16.msra.mxu0 %v1270
    %1736 = vmatprep.subr.bf16.mxu0 %v1275
    %1737 = vmatpush1.bf16.msra.mxu0 %v1274
    %1738 = vmatprep.subr.bf16.mxu0 %v1279
    %1739 = vmatpush1.bf16.msra.mxu0 %v1278
    %1740 = vmatprep.subr.bf16.mxu0 %v1283
    %1741 = vmatpush1.bf16.msra.mxu0 %v1282
    %1742 = vmatprep.subr.bf16.mxu0 %v1287
    %1743 = vmatpush1.bf16.msra.mxu0 %v1286
    %1744 = vmatprep.subr.bf16.mxu0 %v1291
    %1745 = vmatpush1.bf16.msra.mxu0 %v1290
    %1746 = vmatprep.subr.bf16.mxu0 %v1295
    %1747 = vmatpush1.bf16.msra.mxu0 %v1294
    %1748 = vmatprep.subr.bf16.mxu0 %v1299
    %1749 = vmatpush1.bf16.msra.mxu0 %v1298
    %1750 = vmatprep.mubr.bf16.mxu0 %v671
    %1751 = vmatmul.mubr.bf16.gmra.mrb[0].mxu0 %v670
    %v1752 = vpop.f32.mrb[0].mxu0
    %v1753 = vadd.f32 %v843, %v1752
    %v1754 = vpop.f32.mrb[0].mxu0
    %v1755 = vadd.f32 %v847, %v1754
    %v1756 = vpop.f32.mrb[0].mxu0
    %v1757 = vadd.f32 %v843, %v1756
    %v1758 = vpop.f32.mrb[0].mxu0
    %v1759 = vadd.f32 %v847, %v1758
    %1760 = vmatprep.mubr.bf16.mxu0 %v675
    %1761 = vmatmul.mubr.bf16.gmra.mrb[0].mxu0 %v674
    %v1762 = vpop.f32.mrb[0].mxu0
    %v1763 = vadd.f32 %v843, %v1762
    %v1764 = vpop.f32.mrb[0].mxu0
    %v1765 = vadd.f32 %v847, %v1764
    %v1766 = vpop.f32.mrb[0].mxu0
    %v1767 = vadd.f32 %v843, %v1766
    %v1768 = vpop.f32.mrb[0].mxu0
    %v1769 = vadd.f32 %v847, %v1768
    %1770 = vmatprep.mubr.bf16.mxu0 %v679
    %1771 = vmatmul.mubr.bf16.gmra.mrb[0].mxu0 %v678
    %v1772 = vpop.f32.mrb[0].mxu0
    %v1773 = vadd.f32 %v843, %v1772
    %v1774 = vpop.f32.mrb[0].mxu0
    %v1775 = vadd.f32 %v847, %v1774
    %v1776 = vpop.f32.mrb[0].mxu0
    %v1777 = vadd.f32 %v843, %v1776
    %v1778 = vpop.f32.mrb[0].mxu0
    %v1779 = vadd.f32 %v847, %v1778
    %1780 = vmatprep.mubr.bf16.mxu0 %v683
    %1781 = vmatmul.mubr.bf16.gmra.mrb[0].mxu0 %v682
    %v1782 = vpop.f32.mrb[0].mxu0
    %v1783 = vadd.f32 %v843, %v1782
    %v1784 = vpop.f32.mrb[0].mxu0
    %v1785 = vadd.f32 %v847, %v1784
    %v1786 = vpop.f32.mrb[0].mxu0
    %v1787 = vadd.f32 %v843, %v1786
    %v1788 = vpop.f32.mrb[0].mxu0
    %v1789 = vadd.f32 %v847, %v1788
    %1790 = vmatprep.mubr.bf16.mxu0 %v687
    %1791 = vmatmul.mubr.bf16.gmra.mrb[0].mxu0 %v686
    %v1792 = vpop.f32.mrb[0].mxu0
    %v1793 = vadd.f32 %v843, %v1792
    %v1794 = vpop.f32.mrb[0].mxu0
    %v1795 = vadd.f32 %v847, %v1794
    %v1796 = vpop.f32.mrb[0].mxu0
    %v1797 = vadd.f32 %v843, %v1796
    %v1798 = vpop.f32.mrb[0].mxu0
    %v1799 = vadd.f32 %v847, %v1798
    %1800 = vmatprep.mubr.bf16.mxu0 %v691
    %1801 = vmatmul.mubr.bf16.gmra.mrb[0].mxu0 %v690
    %v1802 = vpop.f32.mrb[0].mxu0
    %v1803 = vadd.f32 %v843, %v1802
    %v1804 = vpop.f32.mrb[0].mxu0
    %v1805 = vadd.f32 %v847, %v1804
    %v1806 = vpop.f32.mrb[0].mxu0
    %v1807 = vadd.f32 %v843, %v1806
    %v1808 = vpop.f32.mrb[0].mxu0
    %v1809 = vadd.f32 %v847, %v1808
    %1810 = vmatprep.mubr.bf16.mxu0 %v695
    %1811 = vmatmul.mubr.bf16.gmra.mrb[0].mxu0 %v694
    %v1812 = vpop.f32.mrb[0].mxu0
    %v1813 = vadd.f32 %v843, %v1812
    %v1814 = vpop.f32.mrb[0].mxu0
    %v1815 = vadd.f32 %v847, %v1814
    %v1816 = vpop.f32.mrb[0].mxu0
    %v1817 = vadd.f32 %v843, %v1816
    %v1818 = vpop.f32.mrb[0].mxu0
    %v1819 = vadd.f32 %v847, %v1818
    %1820 = vmatprep.mubr.bf16.mxu0 %v699
    %1821 = vmatmul.mubr.bf16.gmra.mrb[0].mxu0 %v698
    %v1822 = vpop.f32.mrb[0].mxu0
    %v1823 = vadd.f32 %v843, %v1822
    %v1824 = vpop.f32.mrb[0].mxu0
    %v1825 = vadd.f32 %v847, %v1824
    %v1826 = vpop.f32.mrb[0].mxu0
    %v1827 = vadd.f32 %v843, %v1826
    %v1828 = vpop.f32.mrb[0].mxu0
    %v1829 = vadd.f32 %v847, %v1828
    %1830 = vdwg.mxu0
    %1831 = vmatprep.subr.bf16.mxu0 %v1303
    %1832 = vmatpush1.bf16.msra.mxu0 %v1302
    %1833 = vmatprep.subr.bf16.mxu0 %v1307
    %1834 = vmatpush1.bf16.msra.mxu0 %v1306
    %1835 = vmatprep.subr.bf16.mxu0 %v1311
    %1836 = vmatpush1.bf16.msra.mxu0 %v1310
    %1837 = vmatprep.subr.bf16.mxu0 %v1315
    %1838 = vmatpush1.bf16.msra.mxu0 %v1314
    %1839 = vmatprep.subr.bf16.mxu0 %v1319
    %1840 = vmatpush1.bf16.msra.mxu0 %v1318
    %1841 = vmatprep.subr.bf16.mxu0 %v1323
    %1842 = vmatpush1.bf16.msra.mxu0 %v1322
    %1843 = vmatprep.subr.bf16.mxu0 %v1327
    %1844 = vmatpush1.bf16.msra.mxu0 %v1326
    %1845 = vmatprep.subr.bf16.mxu0 %v1331
    %1846 = vmatpush1.bf16.msra.mxu0 %v1330
    %1847 = vmatprep.subr.bf16.mxu0 %v1335
    %1848 = vmatpush1.bf16.msra.mxu0 %v1334
    %1849 = vmatprep.subr.bf16.mxu0 %v1339
    %1850 = vmatpush1.bf16.msra.mxu0 %v1338
    %1851 = vmatprep.subr.bf16.mxu0 %v1343
    %1852 = vmatpush1.bf16.msra.mxu0 %v1342
    %1853 = vmatprep.subr.bf16.mxu0 %v1347
    %1854 = vmatpush1.bf16.msra.mxu0 %v1346
    %1855 = vmatprep.subr.bf16.mxu0 %v1351
    %1856 = vmatpush1.bf16.msra.mxu0 %v1350
    %1857 = vmatprep.subr.bf16.mxu0 %v1355
    %1858 = vmatpush1.bf16.msra.mxu0 %v1354
    %1859 = vmatprep.subr.bf16.mxu0 %v1359
    %1860 = vmatpush1.bf16.msra.mxu0 %v1358
    %1861 = vmatprep.subr.bf16.mxu0 %v1363
    %1862 = vmatpush1.bf16.msra.mxu0 %v1362
    %1863 = vmatprep.mubr.bf16.mxu0 %v673
    %1864 = vmatmul.mubr.bf16.gmra.mrb[0].mxu0 %v672
    %v1865 = vpop.f32.mrb[0].mxu0
    %v1866 = vadd.f32 %v1753, %v1865
    %v1867 = vpop.f32.mrb[0].mxu0
    %v1868 = vadd.f32 %v1755, %v1867
    %v1869 = vpop.f32.mrb[0].mxu0
    %v1870 = vadd.f32 %v1757, %v1869
    %v1871 = vpop.f32.mrb[0].mxu0
    %v1872 = vadd.f32 %v1759, %v1871
    %1873 = vmatprep.mubr.bf16.mxu0 %v677
    %1874 = vmatmul.mubr.bf16.gmra.mrb[0].mxu0 %v676
    %v1875 = vpop.f32.mrb[0].mxu0
    %v1876 = vadd.f32 %v1763, %v1875
    %v1877 = vpop.f32.mrb[0].mxu0
    %v1878 = vadd.f32 %v1765, %v1877
    %v1879 = vpop.f32.mrb[0].mxu0
    %v1880 = vadd.f32 %v1767, %v1879
    %v1881 = vpop.f32.mrb[0].mxu0
    %v1882 = vadd.f32 %v1769, %v1881
    %1883 = vmatprep.mubr.bf16.mxu0 %v681
    %1884 = vmatmul.mubr.bf16.gmra.mrb[0].mxu0 %v680
    %v1885 = vpop.f32.mrb[0].mxu0
    %v1886 = vadd.f32 %v1773, %v1885
    %v1887 = vpop.f32.mrb[0].mxu0
    %v1888 = vadd.f32 %v1775, %v1887
    %v1889 = vpop.f32.mrb[0].mxu0
    %v1890 = vadd.f32 %v1777, %v1889
    %v1891 = vpop.f32.mrb[0].mxu0
    %v1892 = vadd.f32 %v1779, %v1891
    %1893 = vmatprep.mubr.bf16.mxu0 %v685
    %1894 = vmatmul.mubr.bf16.gmra.mrb[0].mxu0 %v684
    %v1895 = vpop.f32.mrb[0].mxu0
    %v1896 = vadd.f32 %v1783, %v1895
    %v1897 = vpop.f32.mrb[0].mxu0
    %v1898 = vadd.f32 %v1785, %v1897
    %v1899 = vpop.f32.mrb[0].mxu0
    %v1900 = vadd.f32 %v1787, %v1899
    %v1901 = vpop.f32.mrb[0].mxu0
    %v1902 = vadd.f32 %v1789, %v1901
    %1903 = vmatprep.mubr.bf16.mxu0 %v689
    %1904 = vmatmul.mubr.bf16.gmra.mrb[0].mxu0 %v688
    %v1905 = vpop.f32.mrb[0].mxu0
    %v1906 = vadd.f32 %v1793, %v1905
    %v1907 = vpop.f32.mrb[0].mxu0
    %v1908 = vadd.f32 %v1795, %v1907
    %v1909 = vpop.f32.mrb[0].mxu0
    %v1910 = vadd.f32 %v1797, %v1909
    %v1911 = vpop.f32.mrb[0].mxu0
    %v1912 = vadd.f32 %v1799, %v1911
    %1913 = vmatprep.mubr.bf16.mxu0 %v693
    %1914 = vmatmul.mubr.bf16.gmra.mrb[0].mxu0 %v692
    %v1915 = vpop.f32.mrb[0].mxu0
    %v1916 = vadd.f32 %v1803, %v1915
    %v1917 = vpop.f32.mrb[0].mxu0
    %v1918 = vadd.f32 %v1805, %v1917
    %v1919 = vpop.f32.mrb[0].mxu0
    %v1920 = vadd.f32 %v1807, %v1919
    %v1921 = vpop.f32.mrb[0].mxu0
    %v1922 = vadd.f32 %v1809, %v1921
    %1923 = vmatprep.mubr.bf16.mxu0 %v697
    %1924 = vmatmul.mubr.bf16.gmra.mrb[0].mxu0 %v696
    %v1925 = vpop.f32.mrb[0].mxu0
    %v1926 = vadd.f32 %v1813, %v1925
    %v1927 = vpop.f32.mrb[0].mxu0
    %v1928 = vadd.f32 %v1815, %v1927
    %v1929 = vpop.f32.mrb[0].mxu0
    %v1930 = vadd.f32 %v1817, %v1929
    %v1931 = vpop.f32.mrb[0].mxu0
    %v1932 = vadd.f32 %v1819, %v1931
    %1933 = vmatprep.mubr.bf16.mxu0 %v701
    %1934 = vmatmul.mubr.bf16.gmra.mrb[0].mxu0 %v700
    %v1935 = vpop.f32.mrb[0].mxu0
    %v1936 = vadd.f32 %v1823, %v1935
    %v1937 = vpop.f32.mrb[0].mxu0
    %v1938 = vadd.f32 %v1825, %v1937
    %v1939 = vpop.f32.mrb[0].mxu0
    %v1940 = vadd.f32 %v1827, %v1939
    %v1941 = vpop.f32.mrb[0].mxu0
    %v1942 = vadd.f32 %v1829, %v1941
    %1943 = vdwg.mxu0
    %v1944 = vmax.f32 %v1640, 0.0
    %v1945 = vmax.f32 %v1642, 0.0
    %v1946 = vmax.f32 %v1866, 0.0
    %v1947 = vmax.f32 %v1868, 0.0
    %v1948 = vmax.f32 %v1644, 0.0
    %v1949 = vmax.f32 %v1646, 0.0
    %v1950 = vmax.f32 %v1870, 0.0
    %v1951 = vmax.f32 %v1872, 0.0
    %v1952 = vmax.f32 %v1650, 0.0
    %v1953 = vmax.f32 %v1652, 0.0
    %v1954 = vmax.f32 %v1876, 0.0
    %v1955 = vmax.f32 %v1878, 0.0
    %v1956 = vmax.f32 %v1654, 0.0
    %v1957 = vmax.f32 %v1656, 0.0
    %v1958 = vmax.f32 %v1880, 0.0
    %v1959 = vmax.f32 %v1882, 0.0
    %v1960 = vmax.f32 %v1660, 0.0
    %v1961 = vmax.f32 %v1662, 0.0
    %v1962 = vmax.f32 %v1886, 0.0
    %v1963 = vmax.f32 %v1888, 0.0
    %v1964 = vmax.f32 %v1664, 0.0
    %v1965 = vmax.f32 %v1666, 0.0
    %v1966 = vmax.f32 %v1890, 0.0
    %v1967 = vmax.f32 %v1892, 0.0
    %v1968 = vmax.f32 %v1670, 0.0
    %v1969 = vmax.f32 %v1672, 0.0
    %v1970 = vmax.f32 %v1896, 0.0
    %v1971 = vmax.f32 %v1898, 0.0
    %v1972 = vmax.f32 %v1674, 0.0
    %v1973 = vmax.f32 %v1676, 0.0
    %v1974 = vmax.f32 %v1900, 0.0
    %v1975 = vmax.f32 %v1902, 0.0
    %v1976 = vmax.f32 %v1680, 0.0
    %v1977 = vmax.f32 %v1682, 0.0
    %v1978 = vmax.f32 %v1906, 0.0
    %v1979 = vmax.f32 %v1908, 0.0
    %v1980 = vmax.f32 %v1684, 0.0
    %v1981 = vmax.f32 %v1686, 0.0
    %v1982 = vmax.f32 %v1910, 0.0
    %v1983 = vmax.f32 %v1912, 0.0
    %v1984 = vmax.f32 %v1690, 0.0
    %v1985 = vmax.f32 %v1692, 0.0
    %v1986 = vmax.f32 %v1916, 0.0
    %v1987 = vmax.f32 %v1918, 0.0
    %v1988 = vmax.f32 %v1694, 0.0
    %v1989 = vmax.f32 %v1696, 0.0
    %v1990 = vmax.f32 %v1920, 0.0
    %v1991 = vmax.f32 %v1922, 0.0
    %v1992 = vmax.f32 %v1700, 0.0
    %v1993 = vmax.f32 %v1702, 0.0
    %v1994 = vmax.f32 %v1926, 0.0
    %v1995 = vmax.f32 %v1928, 0.0
    %v1996 = vmax.f32 %v1704, 0.0
    %v1997 = vmax.f32 %v1706, 0.0
    %v1998 = vmax.f32 %v1930, 0.0
    %v1999 = vmax.f32 %v1932, 0.0
    %v2000 = vmax.f32 %v1710, 0.0
    %v2001 = vmax.f32 %v1712, 0.0
    %v2002 = vmax.f32 %v1936, 0.0
    %v2003 = vmax.f32 %v1938, 0.0
    %v2004 = vmax.f32 %v1714, 0.0
    %v2005 = vmax.f32 %v1716, 0.0
    %v2006 = vmax.f32 %v1940, 0.0
    %v2007 = vmax.f32 %v1942, 0.0
    %v2008 = vpack.c.bf16 %v1948, %v1944
    %v2009 = vpack.c.bf16 %v1949, %v1945
    %v2010 = vpack.c.bf16 %v1950, %v1946
    %v2011 = vpack.c.bf16 %v1951, %v1947
    %v2012 = vpack.c.bf16 %v1956, %v1952
    %v2013 = vpack.c.bf16 %v1957, %v1953
    %v2014 = vpack.c.bf16 %v1958, %v1954
    %v2015 = vpack.c.bf16 %v1959, %v1955
    %v2016 = vpack.c.bf16 %v1964, %v1960
    %v2017 = vpack.c.bf16 %v1965, %v1961
    %v2018 = vpack.c.bf16 %v1966, %v1962
    %v2019 = vpack.c.bf16 %v1967, %v1963
    %v2020 = vpack.c.bf16 %v1972, %v1968
    %v2021 = vpack.c.bf16 %v1973, %v1969
    %v2022 = vpack.c.bf16 %v1974, %v1970
    %v2023 = vpack.c.bf16 %v1975, %v1971
    %v2024 = vpack.c.bf16 %v1980, %v1976
    %v2025 = vpack.c.bf16 %v1981, %v1977
    %v2026 = vpack.c.bf16 %v1982, %v1978
    %v2027 = vpack.c.bf16 %v1983, %v1979
    %v2028 = vpack.c.bf16 %v1988, %v1984
    %v2029 = vpack.c.bf16 %v1989, %v1985
    %v2030 = vpack.c.bf16 %v1990, %v1986
    %v2031 = vpack.c.bf16 %v1991, %v1987
    %v2032 = vpack.c.bf16 %v1996, %v1992
    %v2033 = vpack.c.bf16 %v1997, %v1993
    %v2034 = vpack.c.bf16 %v1998, %v1994
    %v2035 = vpack.c.bf16 %v1999, %v1995
    %v2036 = vpack.c.bf16 %v2004, %v2000
    %v2037 = vpack.c.bf16 %v2005, %v2001
    %v2038 = vpack.c.bf16 %v2006, %v2002
    %v2039 = vpack.c.bf16 %v2007, %v2003
    %v2040 = vld [vmem:[#allocation8] sm:$0xff]
    %v2041 = vld [vmem:[#allocation8 + $0x8] sm:$0xff]
    %v2042 = vld [vmem:[#allocation8 + $0x10] sm:$0xff]
    %v2043 = vld [vmem:[#allocation8 + $0x18] sm:$0xff]
    %v2044 = vld [vmem:[#allocation8 + $0x20] sm:$0xff]
    %v2045 = vld [vmem:[#allocation8 + $0x28] sm:$0xff]
    %v2046 = vld [vmem:[#allocation8 + $0x30] sm:$0xff]
    %v2047 = vld [vmem:[#allocation8 + $0x38] sm:$0xff]
    %v2048 = vld [vmem:[#allocation8 + $0x40] sm:$0xff]
    %v2049 = vld [vmem:[#allocation8 + $0x48] sm:$0xff]
    %v2050 = vld [vmem:[#allocation8 + $0x50] sm:$0xff]
    %v2051 = vld [vmem:[#allocation8 + $0x58] sm:$0xff]
    %v2052 = vld [vmem:[#allocation8 + $0x60] sm:$0xff]
    %v2053 = vld [vmem:[#allocation8 + $0x68] sm:$0xff]
    %v2054 = vld [vmem:[#allocation8 + $0x70] sm:$0xff]
    %v2055 = vld [vmem:[#allocation8 + $0x78] sm:$0xff]
    %v2056 = vld [vmem:[#allocation8 + $0x80] sm:$0xff]
    %v2057 = vld [vmem:[#allocation8 + $0x88] sm:$0xff]
    %v2058 = vld [vmem:[#allocation8 + $0x90] sm:$0xff]
    %v2059 = vld [vmem:[#allocation8 + $0x98] sm:$0xff]
    %v2060 = vld [vmem:[#allocation8 + $0xa0] sm:$0xff]
    %v2061 = vld [vmem:[#allocation8 + $0xa8] sm:$0xff]
    %v2062 = vld [vmem:[#allocation8 + $0xb0] sm:$0xff]
    %v2063 = vld [vmem:[#allocation8 + $0xb8] sm:$0xff]
    %v2064 = vld [vmem:[#allocation8 + $0xc0] sm:$0xff]
    %v2065 = vld [vmem:[#allocation8 + $0xc8] sm:$0xff]
    %v2066 = vld [vmem:[#allocation8 + $0xd0] sm:$0xff]
    %v2067 = vld [vmem:[#allocation8 + $0xd8] sm:$0xff]
    %v2068 = vld [vmem:[#allocation8 + $0xe0] sm:$0xff]
    %v2069 = vld [vmem:[#allocation8 + $0xe8] sm:$0xff]
    %v2070 = vld [vmem:[#allocation8 + $0xf0] sm:$0xff]
    %v2071 = vld [vmem:[#allocation8 + $0xf8] sm:$0xff]
    %v2072 = vld [vmem:[#allocation8 + $0x100] sm:$0xff]
    %v2073 = vld [vmem:[#allocation8 + $0x108] sm:$0xff]
    %v2074 = vld [vmem:[#allocation8 + $0x110] sm:$0xff]
    %v2075 = vld [vmem:[#allocation8 + $0x118] sm:$0xff]
    %v2076 = vld [vmem:[#allocation8 + $0x120] sm:$0xff]
    %v2077 = vld [vmem:[#allocation8 + $0x128] sm:$0xff]
    %v2078 = vld [vmem:[#allocation8 + $0x130] sm:$0xff]
    %v2079 = vld [vmem:[#allocation8 + $0x138] sm:$0xff]
    %v2080 = vld [vmem:[#allocation8 + $0x140] sm:$0xff]
    %v2081 = vld [vmem:[#allocation8 + $0x148] sm:$0xff]
    %v2082 = vld [vmem:[#allocation8 + $0x150] sm:$0xff]
    %v2083 = vld [vmem:[#allocation8 + $0x158] sm:$0xff]
    %v2084 = vld [vmem:[#allocation8 + $0x160] sm:$0xff]
    %v2085 = vld [vmem:[#allocation8 + $0x168] sm:$0xff]
    %v2086 = vld [vmem:[#allocation8 + $0x170] sm:$0xff]
    %v2087 = vld [vmem:[#allocation8 + $0x178] sm:$0xff]
    %v2088 = vld [vmem:[#allocation8 + $0x180] sm:$0xff]
    %v2089 = vld [vmem:[#allocation8 + $0x188] sm:$0xff]
    %v2090 = vld [vmem:[#allocation8 + $0x190] sm:$0xff]
    %v2091 = vld [vmem:[#allocation8 + $0x198] sm:$0xff]
    %v2092 = vld [vmem:[#allocation8 + $0x1a0] sm:$0xff]
    %v2093 = vld [vmem:[#allocation8 + $0x1a8] sm:$0xff]
    %v2094 = vld [vmem:[#allocation8 + $0x1b0] sm:$0xff]
    %v2095 = vld [vmem:[#allocation8 + $0x1b8] sm:$0xff]
    %v2096 = vld [vmem:[#allocation8 + $0x1c0] sm:$0xff]
    %v2097 = vld [vmem:[#allocation8 + $0x1c8] sm:$0xff]
    %v2098 = vld [vmem:[#allocation8 + $0x1d0] sm:$0xff]
    %v2099 = vld [vmem:[#allocation8 + $0x1d8] sm:$0xff]
    %v2100 = vld [vmem:[#allocation8 + $0x1e0] sm:$0xff]
    %v2101 = vld [vmem:[#allocation8 + $0x1e8] sm:$0xff]
    %v2102 = vld [vmem:[#allocation8 + $0x1f0] sm:$0xff]
    %v2103 = vld [vmem:[#allocation8 + $0x1f8] sm:$0xff]
    %v2104 = vld [vmem:[#allocation8 + $0x200] sm:$0xff]
    %v2105 = vld [vmem:[#allocation8 + $0x208] sm:$0xff]
    %v2106 = vld [vmem:[#allocation8 + $0x210] sm:$0xff]
    %v2107 = vld [vmem:[#allocation8 + $0x218] sm:$0xff]
    %v2108 = vld [vmem:[#allocation8 + $0x220] sm:$0xff]
    %v2109 = vld [vmem:[#allocation8 + $0x228] sm:$0xff]
    %v2110 = vld [vmem:[#allocation8 + $0x230] sm:$0xff]
    %v2111 = vld [vmem:[#allocation8 + $0x238] sm:$0xff]
    %v2112 = vld [vmem:[#allocation8 + $0x240] sm:$0xff]
    %v2113 = vld [vmem:[#allocation8 + $0x248] sm:$0xff]
    %v2114 = vld [vmem:[#allocation8 + $0x250] sm:$0xff]
    %v2115 = vld [vmem:[#allocation8 + $0x258] sm:$0xff]
    %v2116 = vld [vmem:[#allocation8 + $0x260] sm:$0xff]
    %v2117 = vld [vmem:[#allocation8 + $0x268] sm:$0xff]
    %v2118 = vld [vmem:[#allocation8 + $0x270] sm:$0xff]
    %v2119 = vld [vmem:[#allocation8 + $0x278] sm:$0xff]
    %v2120 = vld [vmem:[#allocation8 + $0x280] sm:$0xff]
    %v2121 = vld [vmem:[#allocation8 + $0x288] sm:$0xff]
    %v2122 = vld [vmem:[#allocation8 + $0x290] sm:$0xff]
    %v2123 = vld [vmem:[#allocation8 + $0x298] sm:$0xff]
    %v2124 = vld [vmem:[#allocation8 + $0x2a0] sm:$0xff]
    %v2125 = vld [vmem:[#allocation8 + $0x2a8] sm:$0xff]
    %v2126 = vld [vmem:[#allocation8 + $0x2b0] sm:$0xff]
    %v2127 = vld [vmem:[#allocation8 + $0x2b8] sm:$0xff]
    %v2128 = vld [vmem:[#allocation8 + $0x2c0] sm:$0xff]
    %v2129 = vld [vmem:[#allocation8 + $0x2c8] sm:$0xff]
    %v2130 = vld [vmem:[#allocation8 + $0x2d0] sm:$0xff]
    %v2131 = vld [vmem:[#allocation8 + $0x2d8] sm:$0xff]
    %v2132 = vld [vmem:[#allocation8 + $0x2e0] sm:$0xff]
    %v2133 = vld [vmem:[#allocation8 + $0x2e8] sm:$0xff]
    %v2134 = vld [vmem:[#allocation8 + $0x2f0] sm:$0xff]
    %v2135 = vld [vmem:[#allocation8 + $0x2f8] sm:$0xff]
    %v2136 = vld [vmem:[#allocation8 + $0x300] sm:$0xff]
    %v2137 = vld [vmem:[#allocation8 + $0x308] sm:$0xff]
    %v2138 = vld [vmem:[#allocation8 + $0x310] sm:$0xff]
    %v2139 = vld [vmem:[#allocation8 + $0x318] sm:$0xff]
    %v2140 = vld [vmem:[#allocation8 + $0x320] sm:$0xff]
    %v2141 = vld [vmem:[#allocation8 + $0x328] sm:$0xff]
    %v2142 = vld [vmem:[#allocation8 + $0x330] sm:$0xff]
    %v2143 = vld [vmem:[#allocation8 + $0x338] sm:$0xff]
    %v2144 = vld [vmem:[#allocation8 + $0x340] sm:$0xff]
    %v2145 = vld [vmem:[#allocation8 + $0x348] sm:$0xff]
    %v2146 = vld [vmem:[#allocation8 + $0x350] sm:$0xff]
    %v2147 = vld [vmem:[#allocation8 + $0x358] sm:$0xff]
    %v2148 = vld [vmem:[#allocation8 + $0x360] sm:$0xff]
    %v2149 = vld [vmem:[#allocation8 + $0x368] sm:$0xff]
    %v2150 = vld [vmem:[#allocation8 + $0x370] sm:$0xff]
    %v2151 = vld [vmem:[#allocation8 + $0x378] sm:$0xff]
    %v2152 = vld [vmem:[#allocation8 + $0x380] sm:$0xff]
    %v2153 = vld [vmem:[#allocation8 + $0x388] sm:$0xff]
    %v2154 = vld [vmem:[#allocation8 + $0x390] sm:$0xff]
    %v2155 = vld [vmem:[#allocation8 + $0x398] sm:$0xff]
    %v2156 = vld [vmem:[#allocation8 + $0x3a0] sm:$0xff]
    %v2157 = vld [vmem:[#allocation8 + $0x3a8] sm:$0xff]
    %v2158 = vld [vmem:[#allocation8 + $0x3b0] sm:$0xff]
    %v2159 = vld [vmem:[#allocation8 + $0x3b8] sm:$0xff]
    %v2160 = vld [vmem:[#allocation8 + $0x3c0] sm:$0xff]
    %v2161 = vld [vmem:[#allocation8 + $0x3c8] sm:$0xff]
    %v2162 = vld [vmem:[#allocation8 + $0x3d0] sm:$0xff]
    %v2163 = vld [vmem:[#allocation8 + $0x3d8] sm:$0xff]
    %v2164 = vld [vmem:[#allocation8 + $0x3e0] sm:$0xff]
    %v2165 = vld [vmem:[#allocation8 + $0x3e8] sm:$0xff]
    %v2166 = vld [vmem:[#allocation8 + $0x3f0] sm:$0xff]
    %v2167 = vld [vmem:[#allocation8 + $0x3f8] sm:$0xff]
    %v2168 = vld [vmem:[%s6] sm:$0xf]
    %v2170 = vlaneseq
    %v2171 = vshrl.u32 %v2170, 7
    %v2172 = vsub.s32 0, %v2171
    %v2173 = vrot.slane %v2168, %v2172
    %v2174 = vlaneseq
    %v2175 = vshrl.u32 %v2174, 7
    %v2176 = vsub.s32 1, %v2175
    %v2177 = vrot.slane %v2168, %v2176
    %v2178 = vlaneseq
    %v2179 = vshrl.u32 %v2178, 7
    %v2180 = vsub.s32 2, %v2179
    %v2181 = vrot.slane %v2168, %v2180
    %v2182 = vlaneseq
    %v2183 = vshrl.u32 %v2182, 7
    %v2184 = vsub.s32 3, %v2183
    %v2185 = vrot.slane %v2168, %v2184
    %v2318 = vunpack.c.l.b16 %v2040
    %v2319 = vunpack.c.h.b16 %v2040
    %v2320 = vunpack.c.l.b16 %v2041
    %v2321 = vunpack.c.h.b16 %v2041
    %v2322 = vunpack.c.l.b16 %v2042
    %v2323 = vunpack.c.h.b16 %v2042
    %v2324 = vunpack.c.l.b16 %v2043
    %v2325 = vunpack.c.h.b16 %v2043
    %v2326 = vunpack.c.l.b16 %v2044
    %v2327 = vunpack.c.h.b16 %v2044
    %v2328 = vunpack.c.l.b16 %v2045
    %v2329 = vunpack.c.h.b16 %v2045
    %v2330 = vunpack.c.l.b16 %v2046
    %v2331 = vunpack.c.h.b16 %v2046
    %v2332 = vunpack.c.l.b16 %v2047
    %v2333 = vunpack.c.h.b16 %v2047
    %v2334 = vunpack.c.l.b16 %v2048
    %v2335 = vunpack.c.h.b16 %v2048
    %v2336 = vunpack.c.l.b16 %v2049
    %v2337 = vunpack.c.h.b16 %v2049
    %v2338 = vunpack.c.l.b16 %v2050
    %v2339 = vunpack.c.h.b16 %v2050
    %v2340 = vunpack.c.l.b16 %v2051
    %v2341 = vunpack.c.h.b16 %v2051
    %v2342 = vunpack.c.l.b16 %v2052
    %v2343 = vunpack.c.h.b16 %v2052
    %v2344 = vunpack.c.l.b16 %v2053
    %v2345 = vunpack.c.h.b16 %v2053
    %v2346 = vunpack.c.l.b16 %v2054
    %v2347 = vunpack.c.h.b16 %v2054
    %v2348 = vunpack.c.l.b16 %v2055
    %v2349 = vunpack.c.h.b16 %v2055
    %v2350 = vunpack.c.l.b16 %v2056
    %v2351 = vunpack.c.h.b16 %v2056
    %v2352 = vunpack.c.l.b16 %v2057
    %v2353 = vunpack.c.h.b16 %v2057
    %v2354 = vunpack.c.l.b16 %v2058
    %v2355 = vunpack.c.h.b16 %v2058
    %v2356 = vunpack.c.l.b16 %v2059
    %v2357 = vunpack.c.h.b16 %v2059
    %v2358 = vunpack.c.l.b16 %v2060
    %v2359 = vunpack.c.h.b16 %v2060
    %v2360 = vunpack.c.l.b16 %v2061
    %v2361 = vunpack.c.h.b16 %v2061
    %v2362 = vunpack.c.l.b16 %v2062
    %v2363 = vunpack.c.h.b16 %v2062
    %v2364 = vunpack.c.l.b16 %v2063
    %v2365 = vunpack.c.h.b16 %v2063
    %v2366 = vunpack.c.l.b16 %v2064
    %v2367 = vunpack.c.h.b16 %v2064
    %v2368 = vunpack.c.l.b16 %v2065
    %v2369 = vunpack.c.h.b16 %v2065
    %v2370 = vunpack.c.l.b16 %v2066
    %v2371 = vunpack.c.h.b16 %v2066
    %v2372 = vunpack.c.l.b16 %v2067
    %v2373 = vunpack.c.h.b16 %v2067
    %v2374 = vunpack.c.l.b16 %v2068
    %v2375 = vunpack.c.h.b16 %v2068
    %v2376 = vunpack.c.l.b16 %v2069
    %v2377 = vunpack.c.h.b16 %v2069
    %v2378 = vunpack.c.l.b16 %v2070
    %v2379 = vunpack.c.h.b16 %v2070
    %v2380 = vunpack.c.l.b16 %v2071
    %v2381 = vunpack.c.h.b16 %v2071
    %v2382 = vunpack.c.l.b16 %v2072
    %v2383 = vunpack.c.h.b16 %v2072
    %v2384 = vunpack.c.l.b16 %v2073
    %v2385 = vunpack.c.h.b16 %v2073
    %v2386 = vunpack.c.l.b16 %v2074
    %v2387 = vunpack.c.h.b16 %v2074
    %v2388 = vunpack.c.l.b16 %v2075
    %v2389 = vunpack.c.h.b16 %v2075
    %v2390 = vunpack.c.l.b16 %v2076
    %v2391 = vunpack.c.h.b16 %v2076
    %v2392 = vunpack.c.l.b16 %v2077
    %v2393 = vunpack.c.h.b16 %v2077
    %v2394 = vunpack.c.l.b16 %v2078
    %v2395 = vunpack.c.h.b16 %v2078
    %v2396 = vunpack.c.l.b16 %v2079
    %v2397 = vunpack.c.h.b16 %v2079
    %v2398 = vunpack.c.l.b16 %v2080
    %v2399 = vunpack.c.h.b16 %v2080
    %v2400 = vunpack.c.l.b16 %v2081
    %v2401 = vunpack.c.h.b16 %v2081
    %v2402 = vunpack.c.l.b16 %v2082
    %v2403 = vunpack.c.h.b16 %v2082
    %v2404 = vunpack.c.l.b16 %v2083
    %v2405 = vunpack.c.h.b16 %v2083
    %v2406 = vunpack.c.l.b16 %v2084
    %v2407 = vunpack.c.h.b16 %v2084
    %v2408 = vunpack.c.l.b16 %v2085
    %v2409 = vunpack.c.h.b16 %v2085
    %v2410 = vunpack.c.l.b16 %v2086
    %v2411 = vunpack.c.h.b16 %v2086
    %v2412 = vunpack.c.l.b16 %v2087
    %v2413 = vunpack.c.h.b16 %v2087
    %v2414 = vunpack.c.l.b16 %v2088
    %v2415 = vunpack.c.h.b16 %v2088
    %v2416 = vunpack.c.l.b16 %v2089
    %v2417 = vunpack.c.h.b16 %v2089
    %v2418 = vunpack.c.l.b16 %v2090
    %v2419 = vunpack.c.h.b16 %v2090
    %v2420 = vunpack.c.l.b16 %v2091
    %v2421 = vunpack.c.h.b16 %v2091
    %v2422 = vunpack.c.l.b16 %v2092
    %v2423 = vunpack.c.h.b16 %v2092
    %v2424 = vunpack.c.l.b16 %v2093
    %v2425 = vunpack.c.h.b16 %v2093
    %v2426 = vunpack.c.l.b16 %v2094
    %v2427 = vunpack.c.h.b16 %v2094
    %v2428 = vunpack.c.l.b16 %v2095
    %v2429 = vunpack.c.h.b16 %v2095
    %v2430 = vunpack.c.l.b16 %v2096
    %v2431 = vunpack.c.h.b16 %v2096
    %v2432 = vunpack.c.l.b16 %v2097
    %v2433 = vunpack.c.h.b16 %v2097
    %v2434 = vunpack.c.l.b16 %v2098
    %v2435 = vunpack.c.h.b16 %v2098
    %v2436 = vunpack.c.l.b16 %v2099
    %v2437 = vunpack.c.h.b16 %v2099
    %v2438 = vunpack.c.l.b16 %v2100
    %v2439 = vunpack.c.h.b16 %v2100
    %v2440 = vunpack.c.l.b16 %v2101
    %v2441 = vunpack.c.h.b16 %v2101
    %v2442 = vunpack.c.l.b16 %v2102
    %v2443 = vunpack.c.h.b16 %v2102
    %v2444 = vunpack.c.l.b16 %v2103
    %v2445 = vunpack.c.h.b16 %v2103
    %v2446 = vunpack.c.l.b16 %v2104
    %v2447 = vunpack.c.h.b16 %v2104
    %v2448 = vunpack.c.l.b16 %v2105
    %v2449 = vunpack.c.h.b16 %v2105
    %v2450 = vunpack.c.l.b16 %v2106
    %v2451 = vunpack.c.h.b16 %v2106
    %v2452 = vunpack.c.l.b16 %v2107
    %v2453 = vunpack.c.h.b16 %v2107
    %v2454 = vunpack.c.l.b16 %v2108
    %v2455 = vunpack.c.h.b16 %v2108
    %v2456 = vunpack.c.l.b16 %v2109
    %v2457 = vunpack.c.h.b16 %v2109
    %v2458 = vunpack.c.l.b16 %v2110
    %v2459 = vunpack.c.h.b16 %v2110
    %v2460 = vunpack.c.l.b16 %v2111
    %v2461 = vunpack.c.h.b16 %v2111
    %v2462 = vunpack.c.l.b16 %v2112
    %v2463 = vunpack.c.h.b16 %v2112
    %v2464 = vunpack.c.l.b16 %v2113
    %v2465 = vunpack.c.h.b16 %v2113
    %v2466 = vunpack.c.l.b16 %v2114
    %v2467 = vunpack.c.h.b16 %v2114
    %v2468 = vunpack.c.l.b16 %v2115
    %v2469 = vunpack.c.h.b16 %v2115
    %v2470 = vunpack.c.l.b16 %v2116
    %v2471 = vunpack.c.h.b16 %v2116
    %v2472 = vunpack.c.l.b16 %v2117
    %v2473 = vunpack.c.h.b16 %v2117
    %v2474 = vunpack.c.l.b16 %v2118
    %v2475 = vunpack.c.h.b16 %v2118
    %v2476 = vunpack.c.l.b16 %v2119
    %v2477 = vunpack.c.h.b16 %v2119
    %v2478 = vunpack.c.l.b16 %v2120
    %v2479 = vunpack.c.h.b16 %v2120
    %v2480 = vunpack.c.l.b16 %v2121
    %v2481 = vunpack.c.h.b16 %v2121
    %v2482 = vunpack.c.l.b16 %v2122
    %v2483 = vunpack.c.h.b16 %v2122
    %v2484 = vunpack.c.l.b16 %v2123
    %v2485 = vunpack.c.h.b16 %v2123
    %v2486 = vunpack.c.l.b16 %v2124
    %v2487 = vunpack.c.h.b16 %v2124
    %v2488 = vunpack.c.l.b16 %v2125
    %v2489 = vunpack.c.h.b16 %v2125
    %v2490 = vunpack.c.l.b16 %v2126
    %v2491 = vunpack.c.h.b16 %v2126
    %v2492 = vunpack.c.l.b16 %v2127
    %v2493 = vunpack.c.h.b16 %v2127
    %v2494 = vunpack.c.l.b16 %v2128
    %v2495 = vunpack.c.h.b16 %v2128
    %v2496 = vunpack.c.l.b16 %v2129
    %v2497 = vunpack.c.h.b16 %v2129
    %v2498 = vunpack.c.l.b16 %v2130
    %v2499 = vunpack.c.h.b16 %v2130
    %v2500 = vunpack.c.l.b16 %v2131
    %v2501 = vunpack.c.h.b16 %v2131
    %v2502 = vunpack.c.l.b16 %v2132
    %v2503 = vunpack.c.h.b16 %v2132
    %v2504 = vunpack.c.l.b16 %v2133
    %v2505 = vunpack.c.h.b16 %v2133
    %v2506 = vunpack.c.l.b16 %v2134
    %v2507 = vunpack.c.h.b16 %v2134
    %v2508 = vunpack.c.l.b16 %v2135
    %v2509 = vunpack.c.h.b16 %v2135
    %v2510 = vunpack.c.l.b16 %v2136
    %v2511 = vunpack.c.h.b16 %v2136
    %v2512 = vunpack.c.l.b16 %v2137
    %v2513 = vunpack.c.h.b16 %v2137
    %v2514 = vunpack.c.l.b16 %v2138
    %v2515 = vunpack.c.h.b16 %v2138
    %v2516 = vunpack.c.l.b16 %v2139
    %v2517 = vunpack.c.h.b16 %v2139
    %v2518 = vunpack.c.l.b16 %v2140
    %v2519 = vunpack.c.h.b16 %v2140
    %v2520 = vunpack.c.l.b16 %v2141
    %v2521 = vunpack.c.h.b16 %v2141
    %v2522 = vunpack.c.l.b16 %v2142
    %v2523 = vunpack.c.h.b16 %v2142
    %v2524 = vunpack.c.l.b16 %v2143
    %v2525 = vunpack.c.h.b16 %v2143
    %v2526 = vunpack.c.l.b16 %v2144
    %v2527 = vunpack.c.h.b16 %v2144
    %v2528 = vunpack.c.l.b16 %v2145
    %v2529 = vunpack.c.h.b16 %v2145
    %v2530 = vunpack.c.l.b16 %v2146
    %v2531 = vunpack.c.h.b16 %v2146
    %v2532 = vunpack.c.l.b16 %v2147
    %v2533 = vunpack.c.h.b16 %v2147
    %v2534 = vunpack.c.l.b16 %v2148
    %v2535 = vunpack.c.h.b16 %v2148
    %v2536 = vunpack.c.l.b16 %v2149
    %v2537 = vunpack.c.h.b16 %v2149
    %v2538 = vunpack.c.l.b16 %v2150
    %v2539 = vunpack.c.h.b16 %v2150
    %v2540 = vunpack.c.l.b16 %v2151
    %v2541 = vunpack.c.h.b16 %v2151
    %v2542 = vunpack.c.l.b16 %v2152
    %v2543 = vunpack.c.h.b16 %v2152
    %v2544 = vunpack.c.l.b16 %v2153
    %v2545 = vunpack.c.h.b16 %v2153
    %v2546 = vunpack.c.l.b16 %v2154
    %v2547 = vunpack.c.h.b16 %v2154
    %v2548 = vunpack.c.l.b16 %v2155
    %v2549 = vunpack.c.h.b16 %v2155
    %v2550 = vunpack.c.l.b16 %v2156
    %v2551 = vunpack.c.h.b16 %v2156
    %v2552 = vunpack.c.l.b16 %v2157
    %v2553 = vunpack.c.h.b16 %v2157
    %v2554 = vunpack.c.l.b16 %v2158
    %v2555 = vunpack.c.h.b16 %v2158
    %v2556 = vunpack.c.l.b16 %v2159
    %v2557 = vunpack.c.h.b16 %v2159
    %v2558 = vunpack.c.l.b16 %v2160
    %v2559 = vunpack.c.h.b16 %v2160
    %v2560 = vunpack.c.l.b16 %v2161
    %v2561 = vunpack.c.h.b16 %v2161
    %v2562 = vunpack.c.l.b16 %v2162
    %v2563 = vunpack.c.h.b16 %v2162
    %v2564 = vunpack.c.l.b16 %v2163
    %v2565 = vunpack.c.h.b16 %v2163
    %v2566 = vunpack.c.l.b16 %v2164
    %v2567 = vunpack.c.h.b16 %v2164
    %v2568 = vunpack.c.l.b16 %v2165
    %v2569 = vunpack.c.h.b16 %v2165
    %v2570 = vunpack.c.l.b16 %v2166
    %v2571 = vunpack.c.h.b16 %v2166
    %v2572 = vunpack.c.l.b16 %v2167
    %v2573 = vunpack.c.h.b16 %v2167
    %v2574 = vpack.c.b16 %v2322, %v2318
    %v2575 = vpack.c.b16 %v2323, %v2319
    %v2576 = vpack.c.b16 %v2324, %v2320
    %v2577 = vpack.c.b16 %v2325, %v2321
    %v2578 = vpack.c.b16 %v2330, %v2326
    %v2579 = vpack.c.b16 %v2331, %v2327
    %v2580 = vpack.c.b16 %v2332, %v2328
    %v2581 = vpack.c.b16 %v2333, %v2329
    %v2582 = vpack.c.b16 %v2338, %v2334
    %v2583 = vpack.c.b16 %v2339, %v2335
    %v2584 = vpack.c.b16 %v2340, %v2336
    %v2585 = vpack.c.b16 %v2341, %v2337
    %v2586 = vpack.c.b16 %v2346, %v2342
    %v2587 = vpack.c.b16 %v2347, %v2343
    %v2588 = vpack.c.b16 %v2348, %v2344
    %v2589 = vpack.c.b16 %v2349, %v2345
    %v2590 = vpack.c.b16 %v2354, %v2350
    %v2591 = vpack.c.b16 %v2355, %v2351
    %v2592 = vpack.c.b16 %v2356, %v2352
    %v2593 = vpack.c.b16 %v2357, %v2353
    %v2594 = vpack.c.b16 %v2362, %v2358
    %v2595 = vpack.c.b16 %v2363, %v2359
    %v2596 = vpack.c.b16 %v2364, %v2360
    %v2597 = vpack.c.b16 %v2365, %v2361
    %v2598 = vpack.c.b16 %v2370, %v2366
    %v2599 = vpack.c.b16 %v2371, %v2367
    %v2600 = vpack.c.b16 %v2372, %v2368
    %v2601 = vpack.c.b16 %v2373, %v2369
    %v2602 = vpack.c.b16 %v2378, %v2374
    %v2603 = vpack.c.b16 %v2379, %v2375
    %v2604 = vpack.c.b16 %v2380, %v2376
    %v2605 = vpack.c.b16 %v2381, %v2377
    %v2606 = vpack.c.b16 %v2386, %v2382
    %v2607 = vpack.c.b16 %v2387, %v2383
    %v2608 = vpack.c.b16 %v2388, %v2384
    %v2609 = vpack.c.b16 %v2389, %v2385
    %v2610 = vpack.c.b16 %v2394, %v2390
    %v2611 = vpack.c.b16 %v2395, %v2391
    %v2612 = vpack.c.b16 %v2396, %v2392
    %v2613 = vpack.c.b16 %v2397, %v2393
    %v2614 = vpack.c.b16 %v2402, %v2398
    %v2615 = vpack.c.b16 %v2403, %v2399
    %v2616 = vpack.c.b16 %v2404, %v2400
    %v2617 = vpack.c.b16 %v2405, %v2401
    %v2618 = vpack.c.b16 %v2410, %v2406
    %v2619 = vpack.c.b16 %v2411, %v2407
    %v2620 = vpack.c.b16 %v2412, %v2408
    %v2621 = vpack.c.b16 %v2413, %v2409
    %v2622 = vpack.c.b16 %v2418, %v2414
    %v2623 = vpack.c.b16 %v2419, %v2415
    %v2624 = vpack.c.b16 %v2420, %v2416
    %v2625 = vpack.c.b16 %v2421, %v2417
    %v2626 = vpack.c.b16 %v2426, %v2422
    %v2627 = vpack.c.b16 %v2427, %v2423
    %v2628 = vpack.c.b16 %v2428, %v2424
    %v2629 = vpack.c.b16 %v2429, %v2425
    %v2630 = vpack.c.b16 %v2434, %v2430
    %v2631 = vpack.c.b16 %v2435, %v2431
    %v2632 = vpack.c.b16 %v2436, %v2432
    %v2633 = vpack.c.b16 %v2437, %v2433
    %v2634 = vpack.c.b16 %v2442, %v2438
    %v2635 = vpack.c.b16 %v2443, %v2439
    %v2636 = vpack.c.b16 %v2444, %v2440
    %v2637 = vpack.c.b16 %v2445, %v2441
    %v2638 = vpack.c.b16 %v2450, %v2446
    %v2639 = vpack.c.b16 %v2451, %v2447
    %v2640 = vpack.c.b16 %v2452, %v2448
    %v2641 = vpack.c.b16 %v2453, %v2449
    %v2642 = vpack.c.b16 %v2458, %v2454
    %v2643 = vpack.c.b16 %v2459, %v2455
    %v2644 = vpack.c.b16 %v2460, %v2456
    %v2645 = vpack.c.b16 %v2461, %v2457
    %v2646 = vpack.c.b16 %v2466, %v2462
    %v2647 = vpack.c.b16 %v2467, %v2463
    %v2648 = vpack.c.b16 %v2468, %v2464
    %v2649 = vpack.c.b16 %v2469, %v2465
    %v2650 = vpack.c.b16 %v2474, %v2470
    %v2651 = vpack.c.b16 %v2475, %v2471
    %v2652 = vpack.c.b16 %v2476, %v2472
    %v2653 = vpack.c.b16 %v2477, %v2473
    %v2654 = vpack.c.b16 %v2482, %v2478
    %v2655 = vpack.c.b16 %v2483, %v2479
    %v2656 = vpack.c.b16 %v2484, %v2480
    %v2657 = vpack.c.b16 %v2485, %v2481
    %v2658 = vpack.c.b16 %v2490, %v2486
    %v2659 = vpack.c.b16 %v2491, %v2487
    %v2660 = vpack.c.b16 %v2492, %v2488
    %v2661 = vpack.c.b16 %v2493, %v2489
    %v2662 = vpack.c.b16 %v2498, %v2494
    %v2663 = vpack.c.b16 %v2499, %v2495
    %v2664 = vpack.c.b16 %v2500, %v2496
    %v2665 = vpack.c.b16 %v2501, %v2497
    %v2666 = vpack.c.b16 %v2506, %v2502
    %v2667 = vpack.c.b16 %v2507, %v2503
    %v2668 = vpack.c.b16 %v2508, %v2504
    %v2669 = vpack.c.b16 %v2509, %v2505
    %v2670 = vpack.c.b16 %v2514, %v2510
    %v2671 = vpack.c.b16 %v2515, %v2511
    %v2672 = vpack.c.b16 %v2516, %v2512
    %v2673 = vpack.c.b16 %v2517, %v2513
    %v2674 = vpack.c.b16 %v2522, %v2518
    %v2675 = vpack.c.b16 %v2523, %v2519
    %v2676 = vpack.c.b16 %v2524, %v2520
    %v2677 = vpack.c.b16 %v2525, %v2521
    %v2678 = vpack.c.b16 %v2530, %v2526
    %v2679 = vpack.c.b16 %v2531, %v2527
    %v2680 = vpack.c.b16 %v2532, %v2528
    %v2681 = vpack.c.b16 %v2533, %v2529
    %v2682 = vpack.c.b16 %v2538, %v2534
    %v2683 = vpack.c.b16 %v2539, %v2535
    %v2684 = vpack.c.b16 %v2540, %v2536
    %v2685 = vpack.c.b16 %v2541, %v2537
    %v2686 = vpack.c.b16 %v2546, %v2542
    %v2687 = vpack.c.b16 %v2547, %v2543
    %v2688 = vpack.c.b16 %v2548, %v2544
    %v2689 = vpack.c.b16 %v2549, %v2545
    %v2690 = vpack.c.b16 %v2554, %v2550
    %v2691 = vpack.c.b16 %v2555, %v2551
    %v2692 = vpack.c.b16 %v2556, %v2552
    %v2693 = vpack.c.b16 %v2557, %v2553
    %v2694 = vpack.c.b16 %v2562, %v2558
    %v2695 = vpack.c.b16 %v2563, %v2559
    %v2696 = vpack.c.b16 %v2564, %v2560
    %v2697 = vpack.c.b16 %v2565, %v2561
    %v2698 = vpack.c.b16 %v2570, %v2566
    %v2699 = vpack.c.b16 %v2571, %v2567
    %v2700 = vpack.c.b16 %v2572, %v2568
    %v2701 = vpack.c.b16 %v2573, %v2569
    %2830 = vmatprep.subr.bf16.mxu0 %v2575
    %2831 = vmatpush1.bf16.msra.mxu0 %v2574
    %2832 = vmatprep.subr.bf16.mxu0 %v2579
    %2833 = vmatpush1.bf16.msra.mxu0 %v2578
    %2834 = vmatprep.subr.bf16.mxu0 %v2583
    %2835 = vmatpush1.bf16.msra.mxu0 %v2582
    %2836 = vmatprep.subr.bf16.mxu0 %v2587
    %2837 = vmatpush1.bf16.msra.mxu0 %v2586
    %2838 = vmatprep.subr.bf16.mxu0 %v2591
    %2839 = vmatpush1.bf16.msra.mxu0 %v2590
    %2840 = vmatprep.subr.bf16.mxu0 %v2595
    %2841 = vmatpush1.bf16.msra.mxu0 %v2594
    %2842 = vmatprep.subr.bf16.mxu0 %v2599
    %2843 = vmatpush1.bf16.msra.mxu0 %v2598
    %2844 = vmatprep.subr.bf16.mxu0 %v2603
    %2845 = vmatpush1.bf16.msra.mxu0 %v2602
    %2846 = vmatprep.subr.bf16.mxu0 %v2607
    %2847 = vmatpush1.bf16.msra.mxu0 %v2606
    %2848 = vmatprep.subr.bf16.mxu0 %v2611
    %2849 = vmatpush1.bf16.msra.mxu0 %v2610
    %2850 = vmatprep.subr.bf16.mxu0 %v2615
    %2851 = vmatpush1.bf16.msra.mxu0 %v2614
    %2852 = vmatprep.subr.bf16.mxu0 %v2619
    %2853 = vmatpush1.bf16.msra.mxu0 %v2618
    %2854 = vmatprep.subr.bf16.mxu0 %v2623
    %2855 = vmatpush1.bf16.msra.mxu0 %v2622
    %2856 = vmatprep.subr.bf16.mxu0 %v2627
    %2857 = vmatpush1.bf16.msra.mxu0 %v2626
    %2858 = vmatprep.subr.bf16.mxu0 %v2631
    %2859 = vmatpush1.bf16.msra.mxu0 %v2630
    %2860 = vmatprep.subr.bf16.mxu0 %v2635
    %2861 = vmatpush1.bf16.msra.mxu0 %v2634
    %2862 = vmatprep.mubr.bf16.mxu0 %v2009
    %2863 = vmatmul.mubr.bf16.gmra.mrb[0].mxu0 %v2008
    %v2864 = vpop.f32.mrb[0].mxu0
    %v2865 = vadd.f32 %v2173, %v2864
    %v2866 = vpop.f32.mrb[0].mxu0
    %v2867 = vadd.f32 %v2177, %v2866
    %v2868 = vpop.f32.mrb[0].mxu0
    %v2869 = vadd.f32 %v2173, %v2868
    %v2870 = vpop.f32.mrb[0].mxu0
    %v2871 = vadd.f32 %v2177, %v2870
    %2872 = vmatprep.mubr.bf16.mxu0 %v2013
    %2873 = vmatmul.mubr.bf16.gmra.mrb[0].mxu0 %v2012
    %v2874 = vpop.f32.mrb[0].mxu0
    %v2875 = vadd.f32 %v2173, %v2874
    %v2876 = vpop.f32.mrb[0].mxu0
    %v2877 = vadd.f32 %v2177, %v2876
    %v2878 = vpop.f32.mrb[0].mxu0
    %v2879 = vadd.f32 %v2173, %v2878
    %v2880 = vpop.f32.mrb[0].mxu0
    %v2881 = vadd.f32 %v2177, %v2880
    %2882 = vmatprep.mubr.bf16.mxu0 %v2017
    %2883 = vmatmul.mubr.bf16.gmra.mrb[0].mxu0 %v2016
    %v2884 = vpop.f32.mrb[0].mxu0
    %v2885 = vadd.f32 %v2173, %v2884
    %v2886 = vpop.f32.mrb[0].mxu0
    %v2887 = vadd.f32 %v2177, %v2886
    %v2888 = vpop.f32.mrb[0].mxu0
    %v2889 = vadd.f32 %v2173, %v2888
    %v2890 = vpop.f32.mrb[0].mxu0
    %v2891 = vadd.f32 %v2177, %v2890
    %2892 = vmatprep.mubr.bf16.mxu0 %v2021
    %2893 = vmatmul.mubr.bf16.gmra.mrb[0].mxu0 %v2020
    %v2894 = vpop.f32.mrb[0].mxu0
    %v2895 = vadd.f32 %v2173, %v2894
    %v2896 = vpop.f32.mrb[0].mxu0
    %v2897 = vadd.f32 %v2177, %v2896
    %v2898 = vpop.f32.mrb[0].mxu0
    %v2899 = vadd.f32 %v2173, %v2898
    %v2900 = vpop.f32.mrb[0].mxu0
    %v2901 = vadd.f32 %v2177, %v2900
    %2902 = vmatprep.mubr.bf16.mxu0 %v2025
    %2903 = vmatmul.mubr.bf16.gmra.mrb[0].mxu0 %v2024
    %v2904 = vpop.f32.mrb[0].mxu0
    %v2905 = vadd.f32 %v2173, %v2904
    %v2906 = vpop.f32.mrb[0].mxu0
    %v2907 = vadd.f32 %v2177, %v2906
    %v2908 = vpop.f32.mrb[0].mxu0
    %v2909 = vadd.f32 %v2173, %v2908
    %v2910 = vpop.f32.mrb[0].mxu0
    %v2911 = vadd.f32 %v2177, %v2910
    %2912 = vmatprep.mubr.bf16.mxu0 %v2029
    %2913 = vmatmul.mubr.bf16.gmra.mrb[0].mxu0 %v2028
    %v2914 = vpop.f32.mrb[0].mxu0
    %v2915 = vadd.f32 %v2173, %v2914
    %v2916 = vpop.f32.mrb[0].mxu0
    %v2917 = vadd.f32 %v2177, %v2916
    %v2918 = vpop.f32.mrb[0].mxu0
    %v2919 = vadd.f32 %v2173, %v2918
    %v2920 = vpop.f32.mrb[0].mxu0
    %v2921 = vadd.f32 %v2177, %v2920
    %2922 = vmatprep.mubr.bf16.mxu0 %v2033
    %2923 = vmatmul.mubr.bf16.gmra.mrb[0].mxu0 %v2032
    %v2924 = vpop.f32.mrb[0].mxu0
    %v2925 = vadd.f32 %v2173, %v2924
    %v2926 = vpop.f32.mrb[0].mxu0
    %v2927 = vadd.f32 %v2177, %v2926
    %v2928 = vpop.f32.mrb[0].mxu0
    %v2929 = vadd.f32 %v2173, %v2928
    %v2930 = vpop.f32.mrb[0].mxu0
    %v2931 = vadd.f32 %v2177, %v2930
    %2932 = vmatprep.mubr.bf16.mxu0 %v2037
    %2933 = vmatmul.mubr.bf16.gmra.mrb[0].mxu0 %v2036
    %v2934 = vpop.f32.mrb[0].mxu0
    %v2935 = vadd.f32 %v2173, %v2934
    %v2936 = vpop.f32.mrb[0].mxu0
    %v2937 = vadd.f32 %v2177, %v2936
    %v2938 = vpop.f32.mrb[0].mxu0
    %v2939 = vadd.f32 %v2173, %v2938
    %v2940 = vpop.f32.mrb[0].mxu0
    %v2941 = vadd.f32 %v2177, %v2940
    %2942 = vdwg.mxu0
    %2943 = vmatprep.subr.bf16.mxu0 %v2639
    %2944 = vmatpush1.bf16.msra.mxu0 %v2638
    %2945 = vmatprep.subr.bf16.mxu0 %v2643
    %2946 = vmatpush1.bf16.msra.mxu0 %v2642
    %2947 = vmatprep.subr.bf16.mxu0 %v2647
    %2948 = vmatpush1.bf16.msra.mxu0 %v2646
    %2949 = vmatprep.subr.bf16.mxu0 %v2651
    %2950 = vmatpush1.bf16.msra.mxu0 %v2650
    %2951 = vmatprep.subr.bf16.mxu0 %v2655
    %2952 = vmatpush1.bf16.msra.mxu0 %v2654
    %2953 = vmatprep.subr.bf16.mxu0 %v2659
    %2954 = vmatpush1.bf16.msra.mxu0 %v2658
    %2955 = vmatprep.subr.bf16.mxu0 %v2663
    %2956 = vmatpush1.bf16.msra.mxu0 %v2662
    %2957 = vmatprep.subr.bf16.mxu0 %v2667
    %2958 = vmatpush1.bf16.msra.mxu0 %v2666
    %2959 = vmatprep.subr.bf16.mxu0 %v2671
    %2960 = vmatpush1.bf16.msra.mxu0 %v2670
    %2961 = vmatprep.subr.bf16.mxu0 %v2675
    %2962 = vmatpush1.bf16.msra.mxu0 %v2674
    %2963 = vmatprep.subr.bf16.mxu0 %v2679
    %2964 = vmatpush1.bf16.msra.mxu0 %v2678
    %2965 = vmatprep.subr.bf16.mxu0 %v2683
    %2966 = vmatpush1.bf16.msra.mxu0 %v2682
    %2967 = vmatprep.subr.bf16.mxu0 %v2687
    %2968 = vmatpush1.bf16.msra.mxu0 %v2686
    %2969 = vmatprep.subr.bf16.mxu0 %v2691
    %2970 = vmatpush1.bf16.msra.mxu0 %v2690
    %2971 = vmatprep.subr.bf16.mxu0 %v2695
    %2972 = vmatpush1.bf16.msra.mxu0 %v2694
    %2973 = vmatprep.subr.bf16.mxu0 %v2699
    %2974 = vmatpush1.bf16.msra.mxu0 %v2698
    %2975 = vmatprep.mubr.bf16.mxu0 %v2011
    %2976 = vmatmul.mubr.bf16.gmra.mrb[0].mxu0 %v2010
    %v2977 = vpop.f32.mrb[0].mxu0
    %v2978 = vadd.f32 %v2865, %v2977
    %v2979 = vpop.f32.mrb[0].mxu0
    %v2980 = vadd.f32 %v2867, %v2979
    %v2981 = vpop.f32.mrb[0].mxu0
    %v2982 = vadd.f32 %v2869, %v2981
    %v2983 = vpop.f32.mrb[0].mxu0
    %v2984 = vadd.f32 %v2871, %v2983
    %2985 = vmatprep.mubr.bf16.mxu0 %v2015
    %2986 = vmatmul.mubr.bf16.gmra.mrb[0].mxu0 %v2014
    %v2987 = vpop.f32.mrb[0].mxu0
    %v2988 = vadd.f32 %v2875, %v2987
    %v2989 = vpop.f32.mrb[0].mxu0
    %v2990 = vadd.f32 %v2877, %v2989
    %v2991 = vpop.f32.mrb[0].mxu0
    %v2992 = vadd.f32 %v2879, %v2991
    %v2993 = vpop.f32.mrb[0].mxu0
    %v2994 = vadd.f32 %v2881, %v2993
    %2995 = vmatprep.mubr.bf16.mxu0 %v2019
    %2996 = vmatmul.mubr.bf16.gmra.mrb[0].mxu0 %v2018
    %v2997 = vpop.f32.mrb[0].mxu0
    %v2998 = vadd.f32 %v2885, %v2997
    %v2999 = vpop.f32.mrb[0].mxu0
    %v3000 = vadd.f32 %v2887, %v2999
    %v3001 = vpop.f32.mrb[0].mxu0
    %v3002 = vadd.f32 %v2889, %v3001
    %v3003 = vpop.f32.mrb[0].mxu0
    %v3004 = vadd.f32 %v2891, %v3003
    %3005 = vmatprep.mubr.bf16.mxu0 %v2023
    %3006 = vmatmul.mubr.bf16.gmra.mrb[0].mxu0 %v2022
    %v3007 = vpop.f32.mrb[0].mxu0
    %v3008 = vadd.f32 %v2895, %v3007
    %v3009 = vpop.f32.mrb[0].mxu0
    %v3010 = vadd.f32 %v2897, %v3009
    %v3011 = vpop.f32.mrb[0].mxu0
    %v3012 = vadd.f32 %v2899, %v3011
    %v3013 = vpop.f32.mrb[0].mxu0
    %v3014 = vadd.f32 %v2901, %v3013
    %3015 = vmatprep.mubr.bf16.mxu0 %v2027
    %3016 = vmatmul.mubr.bf16.gmra.mrb[0].mxu0 %v2026
    %v3017 = vpop.f32.mrb[0].mxu0
    %v3018 = vadd.f32 %v2905, %v3017
    %v3019 = vpop.f32.mrb[0].mxu0
    %v3020 = vadd.f32 %v2907, %v3019
    %v3021 = vpop.f32.mrb[0].mxu0
    %v3022 = vadd.f32 %v2909, %v3021
    %v3023 = vpop.f32.mrb[0].mxu0
    %v3024 = vadd.f32 %v2911, %v3023
    %3025 = vmatprep.mubr.bf16.mxu0 %v2031
    %3026 = vmatmul.mubr.bf16.gmra.mrb[0].mxu0 %v2030
    %v3027 = vpop.f32.mrb[0].mxu0
    %v3028 = vadd.f32 %v2915, %v3027
    %v3029 = vpop.f32.mrb[0].mxu0
    %v3030 = vadd.f32 %v2917, %v3029
    %v3031 = vpop.f32.mrb[0].mxu0
    %v3032 = vadd.f32 %v2919, %v3031
    %v3033 = vpop.f32.mrb[0].mxu0
    %v3034 = vadd.f32 %v2921, %v3033
    %3035 = vmatprep.mubr.bf16.mxu0 %v2035
    %3036 = vmatmul.mubr.bf16.gmra.mrb[0].mxu0 %v2034
    %v3037 = vpop.f32.mrb[0].mxu0
    %v3038 = vadd.f32 %v2925, %v3037
    %v3039 = vpop.f32.mrb[0].mxu0
    %v3040 = vadd.f32 %v2927, %v3039
    %v3041 = vpop.f32.mrb[0].mxu0
    %v3042 = vadd.f32 %v2929, %v3041
    %v3043 = vpop.f32.mrb[0].mxu0
    %v3044 = vadd.f32 %v2931, %v3043
    %3045 = vmatprep.mubr.bf16.mxu0 %v2039
    %3046 = vmatmul.mubr.bf16.gmra.mrb[0].mxu0 %v2038
    %v3047 = vpop.f32.mrb[0].mxu0
    %v3048 = vadd.f32 %v2935, %v3047
    %v3049 = vpop.f32.mrb[0].mxu0
    %v3050 = vadd.f32 %v2937, %v3049
    %v3051 = vpop.f32.mrb[0].mxu0
    %v3052 = vadd.f32 %v2939, %v3051
    %v3053 = vpop.f32.mrb[0].mxu0
    %v3054 = vadd.f32 %v2941, %v3053
    %3055 = vdwg.mxu0
    %3056 = vmatprep.subr.bf16.mxu0 %v2577
    %3057 = vmatpush1.bf16.msra.mxu0 %v2576
    %3058 = vmatprep.subr.bf16.mxu0 %v2581
    %3059 = vmatpush1.bf16.msra.mxu0 %v2580
    %3060 = vmatprep.subr.bf16.mxu0 %v2585
    %3061 = vmatpush1.bf16.msra.mxu0 %v2584
    %3062 = vmatprep.subr.bf16.mxu0 %v2589
    %3063 = vmatpush1.bf16.msra.mxu0 %v2588
    %3064 = vmatprep.subr.bf16.mxu0 %v2593
    %3065 = vmatpush1.bf16.msra.mxu0 %v2592
    %3066 = vmatprep.subr.bf16.mxu0 %v2597
    %3067 = vmatpush1.bf16.msra.mxu0 %v2596
    %3068 = vmatprep.subr.bf16.mxu0 %v2601
    %3069 = vmatpush1.bf16.msra.mxu0 %v2600
    %3070 = vmatprep.subr.bf16.mxu0 %v2605
    %3071 = vmatpush1.bf16.msra.mxu0 %v2604
    %3072 = vmatprep.subr.bf16.mxu0 %v2609
    %3073 = vmatpush1.bf16.msra.mxu0 %v2608
    %3074 = vmatprep.subr.bf16.mxu0 %v2613
    %3075 = vmatpush1.bf16.msra.mxu0 %v2612
    %3076 = vmatprep.subr.bf16.mxu0 %v2617
    %3077 = vmatpush1.bf16.msra.mxu0 %v2616
    %3078 = vmatprep.subr.bf16.mxu0 %v2621
    %3079 = vmatpush1.bf16.msra.mxu0 %v2620
    %3080 = vmatprep.subr.bf16.mxu0 %v2625
    %3081 = vmatpush1.bf16.msra.mxu0 %v2624
    %3082 = vmatprep.subr.bf16.mxu0 %v2629
    %3083 = vmatpush1.bf16.msra.mxu0 %v2628
    %3084 = vmatprep.subr.bf16.mxu0 %v2633
    %3085 = vmatpush1.bf16.msra.mxu0 %v2632
    %3086 = vmatprep.subr.bf16.mxu0 %v2637
    %3087 = vmatpush1.bf16.msra.mxu0 %v2636
    %3088 = vmatprep.mubr.bf16.mxu0 %v2009
    %3089 = vmatmul.mubr.bf16.gmra.mrb[0].mxu0 %v2008
    %v3090 = vpop.f32.mrb[0].mxu0
    %v3091 = vadd.f32 %v2181, %v3090
    %v3092 = vpop.f32.mrb[0].mxu0
    %v3093 = vadd.f32 %v2185, %v3092
    %v3094 = vpop.f32.mrb[0].mxu0
    %v3095 = vadd.f32 %v2181, %v3094
    %v3096 = vpop.f32.mrb[0].mxu0
    %v3097 = vadd.f32 %v2185, %v3096
    %3098 = vmatprep.mubr.bf16.mxu0 %v2013
    %3099 = vmatmul.mubr.bf16.gmra.mrb[0].mxu0 %v2012
    %v3100 = vpop.f32.mrb[0].mxu0
    %v3101 = vadd.f32 %v2181, %v3100
    %v3102 = vpop.f32.mrb[0].mxu0
    %v3103 = vadd.f32 %v2185, %v3102
    %v3104 = vpop.f32.mrb[0].mxu0
    %v3105 = vadd.f32 %v2181, %v3104
    %v3106 = vpop.f32.mrb[0].mxu0
    %v3107 = vadd.f32 %v2185, %v3106
    %3108 = vmatprep.mubr.bf16.mxu0 %v2017
    %3109 = vmatmul.mubr.bf16.gmra.mrb[0].mxu0 %v2016
    %v3110 = vpop.f32.mrb[0].mxu0
    %v3111 = vadd.f32 %v2181, %v3110
    %v3112 = vpop.f32.mrb[0].mxu0
    %v3113 = vadd.f32 %v2185, %v3112
    %v3114 = vpop.f32.mrb[0].mxu0
    %v3115 = vadd.f32 %v2181, %v3114
    %v3116 = vpop.f32.mrb[0].mxu0
    %v3117 = vadd.f32 %v2185, %v3116
    %3118 = vmatprep.mubr.bf16.mxu0 %v2021
    %3119 = vmatmul.mubr.bf16.gmra.mrb[0].mxu0 %v2020
    %v3120 = vpop.f32.mrb[0].mxu0
    %v3121 = vadd.f32 %v2181, %v3120
    %v3122 = vpop.f32.mrb[0].mxu0
    %v3123 = vadd.f32 %v2185, %v3122
    %v3124 = vpop.f32.mrb[0].mxu0
    %v3125 = vadd.f32 %v2181, %v3124
    %v3126 = vpop.f32.mrb[0].mxu0
    %v3127 = vadd.f32 %v2185, %v3126
    %3128 = vmatprep.mubr.bf16.mxu0 %v2025
    %3129 = vmatmul.mubr.bf16.gmra.mrb[0].mxu0 %v2024
    %v3130 = vpop.f32.mrb[0].mxu0
    %v3131 = vadd.f32 %v2181, %v3130
    %v3132 = vpop.f32.mrb[0].mxu0
    %v3133 = vadd.f32 %v2185, %v3132
    %v3134 = vpop.f32.mrb[0].mxu0
    %v3135 = vadd.f32 %v2181, %v3134
    %v3136 = vpop.f32.mrb[0].mxu0
    %v3137 = vadd.f32 %v2185, %v3136
    %3138 = vmatprep.mubr.bf16.mxu0 %v2029
    %3139 = vmatmul.mubr.bf16.gmra.mrb[0].mxu0 %v2028
    %v3140 = vpop.f32.mrb[0].mxu0
    %v3141 = vadd.f32 %v2181, %v3140
    %v3142 = vpop.f32.mrb[0].mxu0
    %v3143 = vadd.f32 %v2185, %v3142
    %v3144 = vpop.f32.mrb[0].mxu0
    %v3145 = vadd.f32 %v2181, %v3144
    %v3146 = vpop.f32.mrb[0].mxu0
    %v3147 = vadd.f32 %v2185, %v3146
    %3148 = vmatprep.mubr.bf16.mxu0 %v2033
    %3149 = vmatmul.mubr.bf16.gmra.mrb[0].mxu0 %v2032
    %v3150 = vpop.f32.mrb[0].mxu0
    %v3151 = vadd.f32 %v2181, %v3150
    %v3152 = vpop.f32.mrb[0].mxu0
    %v3153 = vadd.f32 %v2185, %v3152
    %v3154 = vpop.f32.mrb[0].mxu0
    %v3155 = vadd.f32 %v2181, %v3154
    %v3156 = vpop.f32.mrb[0].mxu0
    %v3157 = vadd.f32 %v2185, %v3156
    %3158 = vmatprep.mubr.bf16.mxu0 %v2037
    %3159 = vmatmul.mubr.bf16.gmra.mrb[0].mxu0 %v2036
    %v3160 = vpop.f32.mrb[0].mxu0
    %v3161 = vadd.f32 %v2181, %v3160
    %v3162 = vpop.f32.mrb[0].mxu0
    %v3163 = vadd.f32 %v2185, %v3162
    %v3164 = vpop.f32.mrb[0].mxu0
    %v3165 = vadd.f32 %v2181, %v3164
    %v3166 = vpop.f32.mrb[0].mxu0
    %v3167 = vadd.f32 %v2185, %v3166
    %3168 = vdwg.mxu0
    %3169 = vmatprep.subr.bf16.mxu0 %v2641
    %3170 = vmatpush1.bf16.msra.mxu0 %v2640
    %3171 = vmatprep.subr.bf16.mxu0 %v2645
    %3172 = vmatpush1.bf16.msra.mxu0 %v2644
    %3173 = vmatprep.subr.bf16.mxu0 %v2649
    %3174 = vmatpush1.bf16.msra.mxu0 %v2648
    %3175 = vmatprep.subr.bf16.mxu0 %v2653
    %3176 = vmatpush1.bf16.msra.mxu0 %v2652
    %3177 = vmatprep.subr.bf16.mxu0 %v2657
    %3178 = vmatpush1.bf16.msra.mxu0 %v2656
    %3179 = vmatprep.subr.bf16.mxu0 %v2661
    %3180 = vmatpush1.bf16.msra.mxu0 %v2660
    %3181 = vmatprep.subr.bf16.mxu0 %v2665
    %3182 = vmatpush1.bf16.msra.mxu0 %v2664
    %3183 = vmatprep.subr.bf16.mxu0 %v2669
    %3184 = vmatpush1.bf16.msra.mxu0 %v2668
    %3185 = vmatprep.subr.bf16.mxu0 %v2673
    %3186 = vmatpush1.bf16.msra.mxu0 %v2672
    %3187 = vmatprep.subr.bf16.mxu0 %v2677
    %3188 = vmatpush1.bf16.msra.mxu0 %v2676
    %3189 = vmatprep.subr.bf16.mxu0 %v2681
    %3190 = vmatpush1.bf16.msra.mxu0 %v2680
    %3191 = vmatprep.subr.bf16.mxu0 %v2685
    %3192 = vmatpush1.bf16.msra.mxu0 %v2684
    %3193 = vmatprep.subr.bf16.mxu0 %v2689
    %3194 = vmatpush1.bf16.msra.mxu0 %v2688
    %3195 = vmatprep.subr.bf16.mxu0 %v2693
    %3196 = vmatpush1.bf16.msra.mxu0 %v2692
    %3197 = vmatprep.subr.bf16.mxu0 %v2697
    %3198 = vmatpush1.bf16.msra.mxu0 %v2696
    %3199 = vmatprep.subr.bf16.mxu0 %v2701
    %3200 = vmatpush1.bf16.msra.mxu0 %v2700
    %3201 = vmatprep.mubr.bf16.mxu0 %v2011
    %3202 = vmatmul.mubr.bf16.gmra.mrb[0].mxu0 %v2010
    %v3203 = vpop.f32.mrb[0].mxu0
    %v3204 = vadd.f32 %v3091, %v3203
    %v3205 = vpop.f32.mrb[0].mxu0
    %v3206 = vadd.f32 %v3093, %v3205
    %v3207 = vpop.f32.mrb[0].mxu0
    %v3208 = vadd.f32 %v3095, %v3207
    %v3209 = vpop.f32.mrb[0].mxu0
    %v3210 = vadd.f32 %v3097, %v3209
    %3211 = vmatprep.mubr.bf16.mxu0 %v2015
    %3212 = vmatmul.mubr.bf16.gmra.mrb[0].mxu0 %v2014
    %v3213 = vpop.f32.mrb[0].mxu0
    %v3214 = vadd.f32 %v3101, %v3213
    %v3215 = vpop.f32.mrb[0].mxu0
    %v3216 = vadd.f32 %v3103, %v3215
    %v3217 = vpop.f32.mrb[0].mxu0
    %v3218 = vadd.f32 %v3105, %v3217
    %v3219 = vpop.f32.mrb[0].mxu0
    %v3220 = vadd.f32 %v3107, %v3219
    %3221 = vmatprep.mubr.bf16.mxu0 %v2019
    %3222 = vmatmul.mubr.bf16.gmra.mrb[0].mxu0 %v2018
    %v3223 = vpop.f32.mrb[0].mxu0
    %v3224 = vadd.f32 %v3111, %v3223
    %v3225 = vpop.f32.mrb[0].mxu0
    %v3226 = vadd.f32 %v3113, %v3225
    %v3227 = vpop.f32.mrb[0].mxu0
    %v3228 = vadd.f32 %v3115, %v3227
    %v3229 = vpop.f32.mrb[0].mxu0
    %v3230 = vadd.f32 %v3117, %v3229
    %3231 = vmatprep.mubr.bf16.mxu0 %v2023
    %3232 = vmatmul.mubr.bf16.gmra.mrb[0].mxu0 %v2022
    %v3233 = vpop.f32.mrb[0].mxu0
    %v3234 = vadd.f32 %v3121, %v3233
    %v3235 = vpop.f32.mrb[0].mxu0
    %v3236 = vadd.f32 %v3123, %v3235
    %v3237 = vpop.f32.mrb[0].mxu0
    %v3238 = vadd.f32 %v3125, %v3237
    %v3239 = vpop.f32.mrb[0].mxu0
    %v3240 = vadd.f32 %v3127, %v3239
    %3241 = vmatprep.mubr.bf16.mxu0 %v2027
    %3242 = vmatmul.mubr.bf16.gmra.mrb[0].mxu0 %v2026
    %v3243 = vpop.f32.mrb[0].mxu0
    %v3244 = vadd.f32 %v3131, %v3243
    %v3245 = vpop.f32.mrb[0].mxu0
    %v3246 = vadd.f32 %v3133, %v3245
    %v3247 = vpop.f32.mrb[0].mxu0
    %v3248 = vadd.f32 %v3135, %v3247
    %v3249 = vpop.f32.mrb[0].mxu0
    %v3250 = vadd.f32 %v3137, %v3249
    %3251 = vmatprep.mubr.bf16.mxu0 %v2031
    %3252 = vmatmul.mubr.bf16.gmra.mrb[0].mxu0 %v2030
    %v3253 = vpop.f32.mrb[0].mxu0
    %v3254 = vadd.f32 %v3141, %v3253
    %v3255 = vpop.f32.mrb[0].mxu0
    %v3256 = vadd.f32 %v3143, %v3255
    %v3257 = vpop.f32.mrb[0].mxu0
    %v3258 = vadd.f32 %v3145, %v3257
    %v3259 = vpop.f32.mrb[0].mxu0
    %v3260 = vadd.f32 %v3147, %v3259
    %3261 = vmatprep.mubr.bf16.mxu0 %v2035
    %3262 = vmatmul.mubr.bf16.gmra.mrb[0].mxu0 %v2034
    %v3263 = vpop.f32.mrb[0].mxu0
    %v3264 = vadd.f32 %v3151, %v3263
    %v3265 = vpop.f32.mrb[0].mxu0
    %v3266 = vadd.f32 %v3153, %v3265
    %v3267 = vpop.f32.mrb[0].mxu0
    %v3268 = vadd.f32 %v3155, %v3267
    %v3269 = vpop.f32.mrb[0].mxu0
    %v3270 = vadd.f32 %v3157, %v3269
    %3271 = vmatprep.mubr.bf16.mxu0 %v2039
    %3272 = vmatmul.mubr.bf16.gmra.mrb[0].mxu0 %v2038
    %v3273 = vpop.f32.mrb[0].mxu0
    %v3274 = vadd.f32 %v3161, %v3273
    %v3275 = vpop.f32.mrb[0].mxu0
    %v3276 = vadd.f32 %v3163, %v3275
    %v3277 = vpop.f32.mrb[0].mxu0
    %v3278 = vadd.f32 %v3165, %v3277
    %v3279 = vpop.f32.mrb[0].mxu0
    %v3280 = vadd.f32 %v3167, %v3279
    %3281 = vdwg.mxu0
    %v3282 = vmax.f32 %v2978, 0.0
    %v3283 = vmax.f32 %v2980, 0.0
    %v3284 = vmax.f32 %v3204, 0.0
    %v3285 = vmax.f32 %v3206, 0.0
    %v3286 = vmax.f32 %v2982, 0.0
    %v3287 = vmax.f32 %v2984, 0.0
    %v3288 = vmax.f32 %v3208, 0.0
    %v3289 = vmax.f32 %v3210, 0.0
    %v3290 = vmax.f32 %v2988, 0.0
    %v3291 = vmax.f32 %v2990, 0.0
    %v3292 = vmax.f32 %v3214, 0.0
    %v3293 = vmax.f32 %v3216, 0.0
    %v3294 = vmax.f32 %v2992, 0.0
    %v3295 = vmax.f32 %v2994, 0.0
    %v3296 = vmax.f32 %v3218, 0.0
    %v3297 = vmax.f32 %v3220, 0.0
    %v3298 = vmax.f32 %v2998, 0.0
    %v3299 = vmax.f32 %v3000, 0.0
    %v3300 = vmax.f32 %v3224, 0.0
    %v3301 = vmax.f32 %v3226, 0.0
    %v3302 = vmax.f32 %v3002, 0.0
    %v3303 = vmax.f32 %v3004, 0.0
    %v3304 = vmax.f32 %v3228, 0.0
    %v3305 = vmax.f32 %v3230, 0.0
    %v3306 = vmax.f32 %v3008, 0.0
    %v3307 = vmax.f32 %v3010, 0.0
    %v3308 = vmax.f32 %v3234, 0.0
    %v3309 = vmax.f32 %v3236, 0.0
    %v3310 = vmax.f32 %v3012, 0.0
    %v3311 = vmax.f32 %v3014, 0.0
    %v3312 = vmax.f32 %v3238, 0.0
    %v3313 = vmax.f32 %v3240, 0.0
    %v3314 = vmax.f32 %v3018, 0.0
    %v3315 = vmax.f32 %v3020, 0.0
    %v3316 = vmax.f32 %v3244, 0.0
    %v3317 = vmax.f32 %v3246, 0.0
    %v3318 = vmax.f32 %v3022, 0.0
    %v3319 = vmax.f32 %v3024, 0.0
    %v3320 = vmax.f32 %v3248, 0.0
    %v3321 = vmax.f32 %v3250, 0.0
    %v3322 = vmax.f32 %v3028, 0.0
    %v3323 = vmax.f32 %v3030, 0.0
    %v3324 = vmax.f32 %v3254, 0.0
    %v3325 = vmax.f32 %v3256, 0.0
    %v3326 = vmax.f32 %v3032, 0.0
    %v3327 = vmax.f32 %v3034, 0.0
    %v3328 = vmax.f32 %v3258, 0.0
    %v3329 = vmax.f32 %v3260, 0.0
    %v3330 = vmax.f32 %v3038, 0.0
    %v3331 = vmax.f32 %v3040, 0.0
    %v3332 = vmax.f32 %v3264, 0.0
    %v3333 = vmax.f32 %v3266, 0.0
    %v3334 = vmax.f32 %v3042, 0.0
    %v3335 = vmax.f32 %v3044, 0.0
    %v3336 = vmax.f32 %v3268, 0.0
    %v3337 = vmax.f32 %v3270, 0.0
    %v3338 = vmax.f32 %v3048, 0.0
    %v3339 = vmax.f32 %v3050, 0.0
    %v3340 = vmax.f32 %v3274, 0.0
    %v3341 = vmax.f32 %v3276, 0.0
    %v3342 = vmax.f32 %v3052, 0.0
    %v3343 = vmax.f32 %v3054, 0.0
    %v3344 = vmax.f32 %v3278, 0.0
    %v3345 = vmax.f32 %v3280, 0.0
    %v3346 = vpack.c.bf16 %v3286, %v3282
    %v3347 = vpack.c.bf16 %v3287, %v3283
    %v3348 = vpack.c.bf16 %v3288, %v3284
    %v3349 = vpack.c.bf16 %v3289, %v3285
    %v3350 = vpack.c.bf16 %v3294, %v3290
    %v3351 = vpack.c.bf16 %v3295, %v3291
    %v3352 = vpack.c.bf16 %v3296, %v3292
    %v3353 = vpack.c.bf16 %v3297, %v3293
    %v3354 = vpack.c.bf16 %v3302, %v3298
    %v3355 = vpack.c.bf16 %v3303, %v3299
    %v3356 = vpack.c.bf16 %v3304, %v3300
    %v3357 = vpack.c.bf16 %v3305, %v3301
    %v3358 = vpack.c.bf16 %v3310, %v3306
    %v3359 = vpack.c.bf16 %v3311, %v3307
    %v3360 = vpack.c.bf16 %v3312, %v3308
    %v3361 = vpack.c.bf16 %v3313, %v3309
    %v3362 = vpack.c.bf16 %v3318, %v3314
    %v3363 = vpack.c.bf16 %v3319, %v3315
    %v3364 = vpack.c.bf16 %v3320, %v3316
    %v3365 = vpack.c.bf16 %v3321, %v3317
    %v3366 = vpack.c.bf16 %v3326, %v3322
    %v3367 = vpack.c.bf16 %v3327, %v3323
    %v3368 = vpack.c.bf16 %v3328, %v3324
    %v3369 = vpack.c.bf16 %v3329, %v3325
    %v3370 = vpack.c.bf16 %v3334, %v3330
    %v3371 = vpack.c.bf16 %v3335, %v3331
    %v3372 = vpack.c.bf16 %v3336, %v3332
    %v3373 = vpack.c.bf16 %v3337, %v3333
    %v3374 = vpack.c.bf16 %v3342, %v3338
    %v3375 = vpack.c.bf16 %v3343, %v3339
    %v3376 = vpack.c.bf16 %v3344, %v3340
    %v3377 = vpack.c.bf16 %v3345, %v3341
    %v3378 = vld [vmem:[#allocation10] sm:$0xf]
    %v3379 = vld [vmem:[#allocation10 + $0x4] sm:$0xf]
    %v3380 = vld [vmem:[#allocation10 + $0x8] sm:$0xf]
    %v3381 = vld [vmem:[#allocation10 + $0xc] sm:$0xf]
    %v3382 = vld [vmem:[#allocation10 + $0x10] sm:$0xf]
    %v3383 = vld [vmem:[#allocation10 + $0x14] sm:$0xf]
    %v3384 = vld [vmem:[#allocation10 + $0x18] sm:$0xf]
    %v3385 = vld [vmem:[#allocation10 + $0x1c] sm:$0xf]
    %v3386 = vld [vmem:[#allocation10 + $0x20] sm:$0xf]
    %v3387 = vld [vmem:[#allocation10 + $0x24] sm:$0xf]
    %v3388 = vld [vmem:[#allocation10 + $0x28] sm:$0xf]
    %v3389 = vld [vmem:[#allocation10 + $0x2c] sm:$0xf]
    %v3390 = vld [vmem:[#allocation10 + $0x30] sm:$0xf]
    %v3391 = vld [vmem:[#allocation10 + $0x34] sm:$0xf]
    %v3392 = vld [vmem:[#allocation10 + $0x38] sm:$0xf]
    %v3393 = vld [vmem:[#allocation10 + $0x3c] sm:$0xf]
    %v3394 = vld [vmem:[#allocation10 + $0x40] sm:$0xf]
    %v3395 = vld [vmem:[#allocation10 + $0x44] sm:$0xf]
    %v3396 = vld [vmem:[#allocation10 + $0x48] sm:$0xf]
    %v3397 = vld [vmem:[#allocation10 + $0x4c] sm:$0xf]
    %v3398 = vld [vmem:[#allocation10 + $0x50] sm:$0xf]
    %v3399 = vld [vmem:[#allocation10 + $0x54] sm:$0xf]
    %v3400 = vld [vmem:[#allocation10 + $0x58] sm:$0xf]
    %v3401 = vld [vmem:[#allocation10 + $0x5c] sm:$0xf]
    %v3402 = vld [vmem:[#allocation10 + $0x60] sm:$0xf]
    %v3403 = vld [vmem:[#allocation10 + $0x64] sm:$0xf]
    %v3404 = vld [vmem:[#allocation10 + $0x68] sm:$0xf]
    %v3405 = vld [vmem:[#allocation10 + $0x6c] sm:$0xf]
    %v3406 = vld [vmem:[#allocation10 + $0x70] sm:$0xf]
    %v3407 = vld [vmem:[#allocation10 + $0x74] sm:$0xf]
    %v3408 = vld [vmem:[#allocation10 + $0x78] sm:$0xf]
    %v3409 = vld [vmem:[#allocation10 + $0x7c] sm:$0xf]
    %v3410 = vld [vmem:[#allocation10 + $0x80] sm:$0xf]
    %v3411 = vld [vmem:[#allocation10 + $0x84] sm:$0xf]
    %v3412 = vld [vmem:[#allocation10 + $0x88] sm:$0xf]
    %v3413 = vld [vmem:[#allocation10 + $0x8c] sm:$0xf]
    %v3414 = vld [vmem:[#allocation10 + $0x90] sm:$0xf]
    %v3415 = vld [vmem:[#allocation10 + $0x94] sm:$0xf]
    %v3416 = vld [vmem:[#allocation10 + $0x98] sm:$0xf]
    %v3417 = vld [vmem:[#allocation10 + $0x9c] sm:$0xf]
    %v3418 = vld [vmem:[#allocation10 + $0xa0] sm:$0xf]
    %v3419 = vld [vmem:[#allocation10 + $0xa4] sm:$0xf]
    %v3420 = vld [vmem:[#allocation10 + $0xa8] sm:$0xf]
    %v3421 = vld [vmem:[#allocation10 + $0xac] sm:$0xf]
    %v3422 = vld [vmem:[#allocation10 + $0xb0] sm:$0xf]
    %v3423 = vld [vmem:[#allocation10 + $0xb4] sm:$0xf]
    %v3424 = vld [vmem:[#allocation10 + $0xb8] sm:$0xf]
    %v3425 = vld [vmem:[#allocation10 + $0xbc] sm:$0xf]
    %v3426 = vld [vmem:[#allocation10 + $0xc0] sm:$0xf]
    %v3427 = vld [vmem:[#allocation10 + $0xc4] sm:$0xf]
    %v3428 = vld [vmem:[#allocation10 + $0xc8] sm:$0xf]
    %v3429 = vld [vmem:[#allocation10 + $0xcc] sm:$0xf]
    %v3430 = vld [vmem:[#allocation10 + $0xd0] sm:$0xf]
    %v3431 = vld [vmem:[#allocation10 + $0xd4] sm:$0xf]
    %v3432 = vld [vmem:[#allocation10 + $0xd8] sm:$0xf]
    %v3433 = vld [vmem:[#allocation10 + $0xdc] sm:$0xf]
    %v3434 = vld [vmem:[#allocation10 + $0xe0] sm:$0xf]
    %v3435 = vld [vmem:[#allocation10 + $0xe4] sm:$0xf]
    %v3436 = vld [vmem:[#allocation10 + $0xe8] sm:$0xf]
    %v3437 = vld [vmem:[#allocation10 + $0xec] sm:$0xf]
    %v3438 = vld [vmem:[#allocation10 + $0xf0] sm:$0xf]
    %v3439 = vld [vmem:[#allocation10 + $0xf4] sm:$0xf]
    %v3440 = vld [vmem:[#allocation10 + $0xf8] sm:$0xf]
    %v3441 = vld [vmem:[#allocation10 + $0xfc] sm:$0xf]
    %v3442 = vld [vmem:[%s8] sm:$0x1]
    %v3444 = vlaneseq
    %v3445 = vshrl.u32 %v3444, 7
    %v3446 = vsub.s32 0, %v3445
    %v3447 = vrot.slane %v3442, %v3446
    %v3513 = vunpack.c.l.b16 %v3378
    %v3514 = vunpack.c.l.b16 %v3379
    %v3515 = vunpack.c.l.b16 %v3380
    %v3516 = vunpack.c.l.b16 %v3381
    %v3517 = vunpack.c.l.b16 %v3382
    %v3518 = vunpack.c.l.b16 %v3383
    %v3519 = vunpack.c.l.b16 %v3384
    %v3520 = vunpack.c.l.b16 %v3385
    %v3521 = vunpack.c.l.b16 %v3386
    %v3522 = vunpack.c.l.b16 %v3387
    %v3523 = vunpack.c.l.b16 %v3388
    %v3524 = vunpack.c.l.b16 %v3389
    %v3525 = vunpack.c.l.b16 %v3390
    %v3526 = vunpack.c.l.b16 %v3391
    %v3527 = vunpack.c.l.b16 %v3392
    %v3528 = vunpack.c.l.b16 %v3393
    %v3529 = vunpack.c.l.b16 %v3394
    %v3530 = vunpack.c.l.b16 %v3395
    %v3531 = vunpack.c.l.b16 %v3396
    %v3532 = vunpack.c.l.b16 %v3397
    %v3533 = vunpack.c.l.b16 %v3398
    %v3534 = vunpack.c.l.b16 %v3399
    %v3535 = vunpack.c.l.b16 %v3400
    %v3536 = vunpack.c.l.b16 %v3401
    %v3537 = vunpack.c.l.b16 %v3402
    %v3538 = vunpack.c.l.b16 %v3403
    %v3539 = vunpack.c.l.b16 %v3404
    %v3540 = vunpack.c.l.b16 %v3405
    %v3541 = vunpack.c.l.b16 %v3406
    %v3542 = vunpack.c.l.b16 %v3407
    %v3543 = vunpack.c.l.b16 %v3408
    %v3544 = vunpack.c.l.b16 %v3409
    %v3545 = vunpack.c.l.b16 %v3410
    %v3546 = vunpack.c.l.b16 %v3411
    %v3547 = vunpack.c.l.b16 %v3412
    %v3548 = vunpack.c.l.b16 %v3413
    %v3549 = vunpack.c.l.b16 %v3414
    %v3550 = vunpack.c.l.b16 %v3415
    %v3551 = vunpack.c.l.b16 %v3416
    %v3552 = vunpack.c.l.b16 %v3417
    %v3553 = vunpack.c.l.b16 %v3418
    %v3554 = vunpack.c.l.b16 %v3419
    %v3555 = vunpack.c.l.b16 %v3420
    %v3556 = vunpack.c.l.b16 %v3421
    %v3557 = vunpack.c.l.b16 %v3422
    %v3558 = vunpack.c.l.b16 %v3423
    %v3559 = vunpack.c.l.b16 %v3424
    %v3560 = vunpack.c.l.b16 %v3425
    %v3561 = vunpack.c.l.b16 %v3426
    %v3562 = vunpack.c.l.b16 %v3427
    %v3563 = vunpack.c.l.b16 %v3428
    %v3564 = vunpack.c.l.b16 %v3429
    %v3565 = vunpack.c.l.b16 %v3430
    %v3566 = vunpack.c.l.b16 %v3431
    %v3567 = vunpack.c.l.b16 %v3432
    %v3568 = vunpack.c.l.b16 %v3433
    %v3569 = vunpack.c.l.b16 %v3434
    %v3570 = vunpack.c.l.b16 %v3435
    %v3571 = vunpack.c.l.b16 %v3436
    %v3572 = vunpack.c.l.b16 %v3437
    %v3573 = vunpack.c.l.b16 %v3438
    %v3574 = vunpack.c.l.b16 %v3439
    %v3575 = vunpack.c.l.b16 %v3440
    %v3576 = vunpack.c.l.b16 %v3441
    %v3577 = vpack.c.b16 %v3514, %v3513
    %v3578 = vpack.c.b16 %v3516, %v3515
    %v3579 = vpack.c.b16 %v3518, %v3517
    %v3580 = vpack.c.b16 %v3520, %v3519
    %v3581 = vpack.c.b16 %v3522, %v3521
    %v3582 = vpack.c.b16 %v3524, %v3523
    %v3583 = vpack.c.b16 %v3526, %v3525
    %v3584 = vpack.c.b16 %v3528, %v3527
    %v3585 = vpack.c.b16 %v3530, %v3529
    %v3586 = vpack.c.b16 %v3532, %v3531
    %v3587 = vpack.c.b16 %v3534, %v3533
    %v3588 = vpack.c.b16 %v3536, %v3535
    %v3589 = vpack.c.b16 %v3538, %v3537
    %v3590 = vpack.c.b16 %v3540, %v3539
    %v3591 = vpack.c.b16 %v3542, %v3541
    %v3592 = vpack.c.b16 %v3544, %v3543
    %v3593 = vpack.c.b16 %v3546, %v3545
    %v3594 = vpack.c.b16 %v3548, %v3547
    %v3595 = vpack.c.b16 %v3550, %v3549
    %v3596 = vpack.c.b16 %v3552, %v3551
    %v3597 = vpack.c.b16 %v3554, %v3553
    %v3598 = vpack.c.b16 %v3556, %v3555
    %v3599 = vpack.c.b16 %v3558, %v3557
    %v3600 = vpack.c.b16 %v3560, %v3559
    %v3601 = vpack.c.b16 %v3562, %v3561
    %v3602 = vpack.c.b16 %v3564, %v3563
    %v3603 = vpack.c.b16 %v3566, %v3565
    %v3604 = vpack.c.b16 %v3568, %v3567
    %v3605 = vpack.c.b16 %v3570, %v3569
    %v3606 = vpack.c.b16 %v3572, %v3571
    %v3607 = vpack.c.b16 %v3574, %v3573
    %v3608 = vpack.c.b16 %v3576, %v3575
    %3641 = vmatprep.subr.bf16.mxu0 0
    %3642 = vmatpush1.bf16.msra.mxu0 %v3577
    %3643 = vmatprep.subr.bf16.mxu0 0
    %3644 = vmatpush1.bf16.msra.mxu0 %v3578
    %3645 = vmatprep.subr.bf16.mxu0 0
    %3646 = vmatpush1.bf16.msra.mxu0 %v3579
    %3647 = vmatprep.subr.bf16.mxu0 0
    %3648 = vmatpush1.bf16.msra.mxu0 %v3580
    %3649 = vmatprep.subr.bf16.mxu0 0
    %3650 = vmatpush1.bf16.msra.mxu0 %v3581
    %3651 = vmatprep.subr.bf16.mxu0 0
    %3652 = vmatpush1.bf16.msra.mxu0 %v3582
    %3653 = vmatprep.subr.bf16.mxu0 0
    %3654 = vmatpush1.bf16.msra.mxu0 %v3583
    %3655 = vmatprep.subr.bf16.mxu0 0
    %3656 = vmatpush1.bf16.msra.mxu0 %v3584
    %3657 = vmatprep.subr.bf16.mxu0 0
    %3658 = vmatpush1.bf16.msra.mxu0 %v3585
    %3659 = vmatprep.subr.bf16.mxu0 0
    %3660 = vmatpush1.bf16.msra.mxu0 %v3586
    %3661 = vmatprep.subr.bf16.mxu0 0
    %3662 = vmatpush1.bf16.msra.mxu0 %v3587
    %3663 = vmatprep.subr.bf16.mxu0 0
    %3664 = vmatpush1.bf16.msra.mxu0 %v3588
    %3665 = vmatprep.subr.bf16.mxu0 0
    %3666 = vmatpush1.bf16.msra.mxu0 %v3589
    %3667 = vmatprep.subr.bf16.mxu0 0
    %3668 = vmatpush1.bf16.msra.mxu0 %v3590
    %3669 = vmatprep.subr.bf16.mxu0 0
    %3670 = vmatpush1.bf16.msra.mxu0 %v3591
    %3671 = vmatprep.subr.bf16.mxu0 0
    %3672 = vmatpush1.bf16.msra.mxu0 %v3592
    %3673 = vmatprep.mubr.bf16.mxu0 %v3347
    %3674 = vmatmul.mubr.bf16.gmra.mrb[0].mxu0 %v3346
    %v3675 = vpop.f32.mrb[0].mxu0
    %v3676 = vadd.f32 %v3447, %v3675
    %v3677 = vpop.f32.mrb[0].mxu0
    %v3678 = vpop.f32.mrb[0].mxu0
    %v3679 = vadd.f32 %v3447, %v3678
    %v3680 = vpop.f32.mrb[0].mxu0
    %3681 = vmatprep.mubr.bf16.mxu0 %v3351
    %3682 = vmatmul.mubr.bf16.gmra.mrb[0].mxu0 %v3350
    %v3683 = vpop.f32.mrb[0].mxu0
    %v3684 = vadd.f32 %v3447, %v3683
    %v3685 = vpop.f32.mrb[0].mxu0
    %v3686 = vpop.f32.mrb[0].mxu0
    %v3687 = vadd.f32 %v3447, %v3686
    %v3688 = vpop.f32.mrb[0].mxu0
    %3689 = vmatprep.mubr.bf16.mxu0 %v3355
    %3690 = vmatmul.mubr.bf16.gmra.mrb[0].mxu0 %v3354
    %v3691 = vpop.f32.mrb[0].mxu0
    %v3692 = vadd.f32 %v3447, %v3691
    %v3693 = vpop.f32.mrb[0].mxu0
    %v3694 = vpop.f32.mrb[0].mxu0
    %v3695 = vadd.f32 %v3447, %v3694
    %v3696 = vpop.f32.mrb[0].mxu0
    %3697 = vmatprep.mubr.bf16.mxu0 %v3359
    %3698 = vmatmul.mubr.bf16.gmra.mrb[0].mxu0 %v3358
    %v3699 = vpop.f32.mrb[0].mxu0
    %v3700 = vadd.f32 %v3447, %v3699
    %v3701 = vpop.f32.mrb[0].mxu0
    %v3702 = vpop.f32.mrb[0].mxu0
    %v3703 = vadd.f32 %v3447, %v3702
    %v3704 = vpop.f32.mrb[0].mxu0
    %3705 = vmatprep.mubr.bf16.mxu0 %v3363
    %3706 = vmatmul.mubr.bf16.gmra.mrb[0].mxu0 %v3362
    %v3707 = vpop.f32.mrb[0].mxu0
    %v3708 = vadd.f32 %v3447, %v3707
    %v3709 = vpop.f32.mrb[0].mxu0
    %v3710 = vpop.f32.mrb[0].mxu0
    %v3711 = vadd.f32 %v3447, %v3710
    %v3712 = vpop.f32.mrb[0].mxu0
    %3713 = vmatprep.mubr.bf16.mxu0 %v3367
    %3714 = vmatmul.mubr.bf16.gmra.mrb[0].mxu0 %v3366
    %v3715 = vpop.f32.mrb[0].mxu0
    %v3716 = vadd.f32 %v3447, %v3715
    %v3717 = vpop.f32.mrb[0].mxu0
    %v3718 = vpop.f32.mrb[0].mxu0
    %v3719 = vadd.f32 %v3447, %v3718
    %v3720 = vpop.f32.mrb[0].mxu0
    %3721 = vmatprep.mubr.bf16.mxu0 %v3371
    %3722 = vmatmul.mubr.bf16.gmra.mrb[0].mxu0 %v3370
    %v3723 = vpop.f32.mrb[0].mxu0
    %v3724 = vadd.f32 %v3447, %v3723
    %v3725 = vpop.f32.mrb[0].mxu0
    %v3726 = vpop.f32.mrb[0].mxu0
    %v3727 = vadd.f32 %v3447, %v3726
    %v3728 = vpop.f32.mrb[0].mxu0
    %3729 = vmatprep.mubr.bf16.mxu0 %v3375
    %3730 = vmatmul.mubr.bf16.gmra.mrb[0].mxu0 %v3374
    %v3731 = vpop.f32.mrb[0].mxu0
    %v3732 = vadd.f32 %v3447, %v3731
    %v3733 = vpop.f32.mrb[0].mxu0
    %v3734 = vpop.f32.mrb[0].mxu0
    %v3735 = vadd.f32 %v3447, %v3734
    %v3736 = vpop.f32.mrb[0].mxu0
    %3737 = vdwg.mxu0
    %3738 = vmatprep.subr.bf16.mxu0 0
    %3739 = vmatpush1.bf16.msra.mxu0 %v3593
    %3740 = vmatprep.subr.bf16.mxu0 0
    %3741 = vmatpush1.bf16.msra.mxu0 %v3594
    %3742 = vmatprep.subr.bf16.mxu0 0
    %3743 = vmatpush1.bf16.msra.mxu0 %v3595
    %3744 = vmatprep.subr.bf16.mxu0 0
    %3745 = vmatpush1.bf16.msra.mxu0 %v3596
    %3746 = vmatprep.subr.bf16.mxu0 0
    %3747 = vmatpush1.bf16.msra.mxu0 %v3597
    %3748 = vmatprep.subr.bf16.mxu0 0
    %3749 = vmatpush1.bf16.msra.mxu0 %v3598
    %3750 = vmatprep.subr.bf16.mxu0 0
    %3751 = vmatpush1.bf16.msra.mxu0 %v3599
    %3752 = vmatprep.subr.bf16.mxu0 0
    %3753 = vmatpush1.bf16.msra.mxu0 %v3600
    %3754 = vmatprep.subr.bf16.mxu0 0
    %3755 = vmatpush1.bf16.msra.mxu0 %v3601
    %3756 = vmatprep.subr.bf16.mxu0 0
    %3757 = vmatpush1.bf16.msra.mxu0 %v3602
    %3758 = vmatprep.subr.bf16.mxu0 0
    %3759 = vmatpush1.bf16.msra.mxu0 %v3603
    %3760 = vmatprep.subr.bf16.mxu0 0
    %3761 = vmatpush1.bf16.msra.mxu0 %v3604
    %3762 = vmatprep.subr.bf16.mxu0 0
    %3763 = vmatpush1.bf16.msra.mxu0 %v3605
    %3764 = vmatprep.subr.bf16.mxu0 0
    %3765 = vmatpush1.bf16.msra.mxu0 %v3606
    %3766 = vmatprep.subr.bf16.mxu0 0
    %3767 = vmatpush1.bf16.msra.mxu0 %v3607
    %3768 = vmatprep.subr.bf16.mxu0 0
    %3769 = vmatpush1.bf16.msra.mxu0 %v3608
    %3770 = vmatprep.mubr.bf16.mxu0 %v3349
    %3771 = vmatmul.mubr.bf16.gmra.mrb[0].mxu0 %v3348
    %v3772 = vpop.f32.mrb[0].mxu0
    %v3773 = vadd.f32 %v3676, %v3772
    %v3774 = vpop.f32.mrb[0].mxu0
    %v3775 = vpop.f32.mrb[0].mxu0
    %v3776 = vadd.f32 %v3679, %v3775
    %v3777 = vpop.f32.mrb[0].mxu0
    %3778 = vmatprep.mubr.bf16.mxu0 %v3353
    %3779 = vmatmul.mubr.bf16.gmra.mrb[0].mxu0 %v3352
    %v3780 = vpop.f32.mrb[0].mxu0
    %v3781 = vadd.f32 %v3684, %v3780
    %v3782 = vpop.f32.mrb[0].mxu0
    %v3783 = vpop.f32.mrb[0].mxu0
    %v3784 = vadd.f32 %v3687, %v3783
    %v3785 = vpop.f32.mrb[0].mxu0
    %3786 = vmatprep.mubr.bf16.mxu0 %v3357
    %3787 = vmatmul.mubr.bf16.gmra.mrb[0].mxu0 %v3356
    %v3788 = vpop.f32.mrb[0].mxu0
    %v3789 = vadd.f32 %v3692, %v3788
    %v3790 = vpop.f32.mrb[0].mxu0
    %v3791 = vpop.f32.mrb[0].mxu0
    %v3792 = vadd.f32 %v3695, %v3791
    %v3793 = vpop.f32.mrb[0].mxu0
    %3794 = vmatprep.mubr.bf16.mxu0 %v3361
    %3795 = vmatmul.mubr.bf16.gmra.mrb[0].mxu0 %v3360
    %v3796 = vpop.f32.mrb[0].mxu0
    %v3797 = vadd.f32 %v3700, %v3796
    %v3798 = vpop.f32.mrb[0].mxu0
    %v3799 = vpop.f32.mrb[0].mxu0
    %v3800 = vadd.f32 %v3703, %v3799
    %v3801 = vpop.f32.mrb[0].mxu0
    %3802 = vmatprep.mubr.bf16.mxu0 %v3365
    %3803 = vmatmul.mubr.bf16.gmra.mrb[0].mxu0 %v3364
    %v3804 = vpop.f32.mrb[0].mxu0
    %v3805 = vadd.f32 %v3708, %v3804
    %v3806 = vpop.f32.mrb[0].mxu0
    %v3807 = vpop.f32.mrb[0].mxu0
    %v3808 = vadd.f32 %v3711, %v3807
    %v3809 = vpop.f32.mrb[0].mxu0
    %3810 = vmatprep.mubr.bf16.mxu0 %v3369
    %3811 = vmatmul.mubr.bf16.gmra.mrb[0].mxu0 %v3368
    %v3812 = vpop.f32.mrb[0].mxu0
    %v3813 = vadd.f32 %v3716, %v3812
    %v3814 = vpop.f32.mrb[0].mxu0
    %v3815 = vpop.f32.mrb[0].mxu0
    %v3816 = vadd.f32 %v3719, %v3815
    %v3817 = vpop.f32.mrb[0].mxu0
    %3818 = vmatprep.mubr.bf16.mxu0 %v3373
    %3819 = vmatmul.mubr.bf16.gmra.mrb[0].mxu0 %v3372
    %v3820 = vpop.f32.mrb[0].mxu0
    %v3821 = vadd.f32 %v3724, %v3820
    %v3822 = vpop.f32.mrb[0].mxu0
    %v3823 = vpop.f32.mrb[0].mxu0
    %v3824 = vadd.f32 %v3727, %v3823
    %v3825 = vpop.f32.mrb[0].mxu0
    %3826 = vmatprep.mubr.bf16.mxu0 %v3377
    %3827 = vmatmul.mubr.bf16.gmra.mrb[0].mxu0 %v3376
    %v3828 = vpop.f32.mrb[0].mxu0
    %v3829 = vadd.f32 %v3732, %v3828
    %v3830 = vpop.f32.mrb[0].mxu0
    %v3831 = vpop.f32.mrb[0].mxu0
    %v3832 = vadd.f32 %v3735, %v3831
    %v3833 = vpop.f32.mrb[0].mxu0
    %3834 = vdwg.mxu0
    %3835 = vst [vmem:[#allocation11] sm:$0xff] %v3773
    %3836 = vst [vmem:[#allocation11 + $0x8] sm:$0xff] %v3776
    %3837 = vst [vmem:[#allocation11 + $0x10] sm:$0xff] %v3781
    %3838 = vst [vmem:[#allocation11 + $0x18] sm:$0xff] %v3784
    %3839 = vst [vmem:[#allocation11 + $0x20] sm:$0xff] %v3789
    %3840 = vst [vmem:[#allocation11 + $0x28] sm:$0xff] %v3792
    %3841 = vst [vmem:[#allocation11 + $0x30] sm:$0xff] %v3797
    %3842 = vst [vmem:[#allocation11 + $0x38] sm:$0xff] %v3800
    %3843 = vst [vmem:[#allocation11 + $0x40] sm:$0xff] %v3805
    %3844 = vst [vmem:[#allocation11 + $0x48] sm:$0xff] %v3808
    %3845 = vst [vmem:[#allocation11 + $0x50] sm:$0xff] %v3813
    %3846 = vst [vmem:[#allocation11 + $0x58] sm:$0xff] %v3816
    %3847 = vst [vmem:[#allocation11 + $0x60] sm:$0xff] %v3821
    %3848 = vst [vmem:[#allocation11 + $0x68] sm:$0xff] %v3824
    %3849 = vst [vmem:[#allocation11 + $0x70] sm:$0xff] %v3829
    %3850 = vst [vmem:[#allocation11 + $0x78] sm:$0xff] %v3832
    // Predicated region
    $region58: #{tpu_custom_call.1} parent=1 // pred_check
      _
    $region59: #{tpu_custom_call.1} parent=1 // pred_check_branch
      %3852 = sbr.rel (0) target = $region61
    $region60: #{tpu_custom_call.1} parent=1 // pred_region
      %s3854 = ssub.s32 2048, 2048
      %3855 = vsyncadd [#allocation4], %s3854
      %s3856 = sshll.u32 [#allocation11], 4
      %s3857 = int_to_ptr.vmem [resolvable:$true] %s3856
      %3862 = dma.vmem_to_hbm [thread:$0]  %s3857, 2048, %s9, [#allocation4], 128, 128, 8
    $region61: #{tpu_custom_call.1} parent=1 // pred_fallthru
      _
    // Predicated region
    $region62: #{tpu_custom_call.1} parent=1 // pred_check
      _
    $region63: #{tpu_custom_call.1} parent=1 // pred_check_branch
      %3864 = sbr.rel (0) target = $region65
    $region64: #{tpu_custom_call.1} parent=1 // pred_region
      %3865 = dma.done [#allocation4], 2048
    $region65: #{tpu_custom_call.1} parent=1 // pred_fallthru
      _
    %3866 = vsyncpa [#allocation3], 1
    %3867 = vsyncpa [#allocation6], 1
    %3868 = vsyncpa [#allocation9], 1
    %3869 = vsyncpa [#allocation4], 1

</llo_original>
